<compile_context>
chip_gen: v7x
topology: tpu7x:2x2x1
jax: 0.10.0
libtpu: 0.0.40
codegen_flags: <defaults>
</compile_context>

<pallas_src>
import functools
import math

import jax
import jax.numpy as jnp
from jax.experimental import pallas as pl
from jax.experimental.pallas import tpu as pltpu  # noqa: F401  (kept for TPU-specific tuning hooks)

F32 = jnp.float32


# ----------------------------- Pallas kernels ------------------------------

def _linear_kernel(x_ref, w_ref, b_ref, o_ref):
    o_ref[...] = jnp.dot(x_ref[...], w_ref[...], preferred_element_type=F32) + b_ref[...]


def pallas_linear(x, w, b):
    """y = x @ w + b. Single full-array invocation (no grid: shapes are tiny, pipelining is pure overhead)."""
    M, K = x.shape
    N = w.shape[1]
    return pl.pallas_call(
        _linear_kernel,
        out_shape=jax.ShapeDtypeStruct((M, N), F32),
    )(x.astype(F32), w.astype(F32), b.reshape(1, N).astype(F32))


def _layernorm(y, g, b, eps):
    mu = jnp.mean(y, axis=-1, keepdims=True)
    var = jnp.mean(jnp.square(y - mu), axis=-1, keepdims=True)
    return (y - mu) * jax.lax.rsqrt(var + eps) * g + b


def _proj_add_ln_kernel(a_ref, w_ref, b_ref, res_ref, g_ref, bb_ref, o_ref, *, eps):
    # LN(res + a @ w + b): out_proj + residual add + LayerNorm1 fused into one kernel.
    y = res_ref[...] + jnp.dot(a_ref[...], w_ref[...], preferred_element_type=F32) + b_ref[...]
    o_ref[...] = _layernorm(y, g_ref[...], bb_ref[...], eps)


def pallas_proj_add_layernorm(a, w, b, res, gamma, beta, eps=1e-5):
    M, D = res.shape
    return pl.pallas_call(
        functools.partial(_proj_add_ln_kernel, eps=eps),
        out_shape=jax.ShapeDtypeStruct((M, D), F32),
    )(a.astype(F32), w.astype(F32), b.reshape(1, D).astype(F32),
      res.astype(F32), gamma.reshape(1, D).astype(F32), beta.reshape(1, D).astype(F32))


def _ffn_add_ln_kernel(x_ref, w1_ref, b1_ref, w2_ref, b2_ref, g_ref, bb_ref, o_ref, *, eps, slope):
    # LN(x + linear2(leaky_relu(linear1(x)))): the hidden (M, dff) activation never touches HBM.
    # nn.LeakyReLU(True) -> negative_slope=1.0 (identity), kept explicitly for fidelity.
    x = x_ref[...]
    h = jnp.dot(x, w1_ref[...], preferred_element_type=F32) + b1_ref[...]
    h = jnp.where(h >= 0.0, h, slope * h)
    y = x + jnp.dot(h, w2_ref[...], preferred_element_type=F32) + b2_ref[...]
    o_ref[...] = _layernorm(y, g_ref[...], bb_ref[...], eps)


def pallas_ffn_add_layernorm(x, w1, b1, w2, b2, gamma, beta, eps=1e-5, slope=1.0):
    M, D = x.shape
    dff = w1.shape[1]
    return pl.pallas_call(
        functools.partial(_ffn_add_ln_kernel, eps=eps, slope=slope),
        out_shape=jax.ShapeDtypeStruct((M, D), F32),
    )(x.astype(F32), w1.astype(F32), b1.reshape(1, dff).astype(F32),
      w2.astype(F32), b2.reshape(1, D).astype(F32),
      gamma.reshape(1, D).astype(F32), beta.reshape(1, D).astype(F32))


def _ln_linear_kernel(x_ref, g_ref, b_ref, w_ref, wb_ref, o_ref, *, eps):
    # Final encoder LayerNorm followed by the decoder Linear, fused.
    xn = _layernorm(x_ref[...], g_ref[...], b_ref[...], eps)
    o_ref[...] = jnp.dot(xn, w_ref[...], preferred_element_type=F32) + wb_ref[...]


def pallas_layernorm_linear(x, gamma, beta, w, wb, eps=1e-5):
    M, D = x.shape
    N = w.shape[1]
    return pl.pallas_call(
        functools.partial(_ln_linear_kernel, eps=eps),
        out_shape=jax.ShapeDtypeStruct((M, N), F32),
    )(x.astype(F32), gamma.reshape(1, D).astype(F32), beta.reshape(1, D).astype(F32),
      w.astype(F32), wb.reshape(1, N).astype(F32))


def _cosine_softmax_kernel(w_ref, cos_ref, sm_ref):
    # Gram matrix from a single copy of w (no transposed input DMA); row/col norms from the diagonal.
    w = w_ref[...]                                                     # (C, N)
    gram = jax.lax.dot_general(w, w, (((1,), (1,)), ((), ())),
                               preferred_element_type=F32)             # (C, C) == w @ w.T
    C = gram.shape[0]
    rid = jax.lax.broadcasted_iota(jnp.int32, (C, C), 0)
    cid = jax.lax.broadcasted_iota(jnp.int32, (C, C), 1)
    diag = jnp.where(rid == cid, gram, 0.0)
    sq_row = jnp.sum(diag, axis=1, keepdims=True)                      # (C, 1) = ||w_i||^2
    sq_col = jnp.sum(diag, axis=0, keepdims=True)                      # (1, C)
    cos = gram * jax.lax.rsqrt(sq_row * sq_col)
    cos_ref[...] = cos
    m = jnp.max(cos, axis=-1, keepdims=True)
    e = jnp.exp(cos - m)
    sm_ref[...] = e / jnp.sum(e, axis=-1, keepdims=True)


def pallas_cosine_softmax(w):
    """Returns (cos_ji_mat, softmax(cos_ji_mat, -1)) for weights (C, N)."""
    C, _ = w.shape
    return pl.pallas_call(
        _cosine_softmax_kernel,
        out_shape=(jax.ShapeDtypeStruct((C, C), F32),
                   jax.ShapeDtypeStruct((C, C), F32)),
    )(w.astype(F32))


def _roll_rows(a, s):
    """Static circular roll DOWN by s rows (two sublane slices + concat)."""
    m = a.shape[0]
    s = s % m
    if s == 0:
        return a
    return jnp.concatenate([a[m - s:, :], a[:m - s, :]], axis=0)


def _token_embed_kernel(x_ref, w_ref, b_ref, pe_ref, o_ref, *, bsz):
    # TokenEmbedding: Conv1d(k=3, padding=1, padding_mode='circular') expressed as three shifted
    # matmuls accumulated in-register, fused with the bias and the positional-encoding add.
    # x is time-major (L*B, Cin): a circular time shift is exactly a flat row roll by +-B.
    x = x_ref[...]
    xm1 = _roll_rows(x, bsz)        # x[(t-1) mod L, b]
    xp1 = _roll_rows(x, -bsz)       # x[(t+1) mod L, b]
    acc = b_ref[...] + pe_ref[...]
    acc = acc + jnp.dot(xm1, w_ref[0], preferred_element_type=F32)
    acc = acc + jnp.dot(x,   w_ref[1], preferred_element_type=F32)
    acc = acc + jnp.dot(xp1, w_ref[2], preferred_element_type=F32)
    o_ref[...] = acc


def pallas_token_embed_pe(x_tm, w, b, pe_rows, bsz):
    M, _ = x_tm.shape
    D = w.shape[2]
    return pl.pallas_call(
        functools.partial(_token_embed_kernel, bsz=bsz),
        out_shape=jax.ShapeDtypeStruct((M, D), F32),
    )(x_tm.astype(F32), w.astype(F32), b.reshape(1, D).astype(F32), pe_rows.astype(F32))


def _temporal_block_kernel(x_ref, w1_ref, b1_ref, w2_ref, b2_ref, o_ref, *, k, bh):
    # Whole TemporalBlock fused: two causal convs (k shifted matmuls each) + ReLUs + residual ReLU.
    # x is time-major (L*Bh, C): a causal time shift of s == flat row roll by s*bh with the first
    # s*bh rows zeroed (the left zero padding of Conv1d(padding=k-1) followed by Chomp1d(k-1)).
    x = x_ref[...]
    m, c = x.shape
    row = jax.lax.broadcasted_iota(jnp.int32, (m, 1), 0)

    def conv_relu(inp, w_ref, b_ref):
        acc = jnp.zeros((m, c), F32) + b_ref[...]
        for j in range(k):
            s = (k - 1 - j) * bh
            shifted = inp if s == 0 else jnp.where(row < s, 0.0, _roll_rows(inp, s))
            acc = acc + jnp.dot(shifted, w_ref[j], preferred_element_type=F32)
        return jnp.maximum(acc, 0.0)

    h = conv_relu(x, w1_ref, b1_ref)
    h = conv_relu(h, w2_ref, b2_ref)
    o_ref[...] = jnp.maximum(h + x, 0.0)        # relu(net(x) + res)   (no downsample: n_in == n_out)


def pallas_temporal_block(x_tm, w1, b1, w2, b2, *, k, bh):
    M, C = x_tm.shape
    return pl.pallas_call(
        functools.partial(_temporal_block_kernel, k=k, bh=bh),
        out_shape=jax.ShapeDtypeStruct((M, C), F32),
    )(x_tm.astype(F32), w1.astype(F32), b1.reshape(1, C).astype(F32),
      w2.astype(F32), b2.reshape(1, C).astype(F32))


# ------------------------------- JAX glue -----------------------------------

def make_pe(L, d_model):
    pos = jnp.arange(L, dtype=F32)[:, None]
    div = jnp.exp(jnp.arange(0, d_model, 2, dtype=F32) * (-math.log(10000.0) / d_model))
    pe = jnp.zeros((L, d_model), F32)
    pe = pe.at[:, 0::2].set(jnp.sin(pos * div))
    pe = pe.at[:, 1::2].set(jnp.cos(pos * div))
    return pe


def cross_correlation(p, x_flat, L, B, heads, rng):
    """x_flat: (L*B, d_model) time-major.  Returns (intervals_agg_flat, dim_cor, ji_mat);
    the out_proj is fused with residual+LayerNorm1 by the caller."""
    kdim = p["q_w"].shape[1]
    vdim = p["v_w"].shape[1]
    head_dim = kdim // heads
    scale = float(kdim // heads) ** (-0.5)
    Bh = B * heads

    # Q/K/V projections fused into ONE Pallas matmul (one launch, wider lane-dense output).
    qkv_w = jnp.concatenate([p["q_w"], p["k_w"], p["v_w"]], axis=1)
    qkv_b = jnp.concatenate([p["q_b"], p["k_b"], p["v_b"]], axis=0)
    qkv = pallas_linear(x_flat, qkv_w, qkv_b)                          # (L*B, 2*kdim+vdim)
    q = qkv[:, :kdim]
    k = qkv[:, kdim:2 * kdim]
    v = qkv[:, 2 * kdim:2 * kdim + vdim]

    q = jnp.transpose(q.reshape(L, Bh, head_dim), (1, 0, 2))           # (Bh, L, hd)
    k = jnp.transpose(k.reshape(L, Bh, head_dim), (1, 0, 2))
    v_tm = v.reshape(L, Bh, head_dim)                                  # keep time-major for TCN path

    rng_w, rng_tb = jax.random.split(rng)
    # Fresh nn.Embedding(head_dim, n_heads*bsz) created every forward in the reference -> N(0,1).
    weights_arr = jax.random.normal(rng_w, (head_dim, heads * B), F32)
    cos_ji_mat, ji_mat = pallas_cosine_softmax(weights_arr)

    ji_num = round(math.sqrt(head_dim)) * round(math.log(head_dim))
    topk_vals, topk_idx = jax.lax.top_k(cos_ji_mat, ji_num)
    topk_w_ji = jax.nn.softmax(topk_vals, axis=-1)

    # Circular cross-correlation over time via FFT.
    # TODO(synk): rfft/irfft has no Pallas primitive; this stays in plain JAX (jnp.fft).
    qp = jnp.transpose(q, (0, 2, 1))                                    # (Bh, hd, L)
    kp = jnp.transpose(k, (0, 2, 1))
    q_rep = jnp.broadcast_to(qp[:, None, :, :], (Bh, head_dim, head_dim, L))
    k_roll = jnp.stack([jnp.roll(kp, -i, axis=1) for i in range(head_dim)], axis=1)
    corr = jnp.fft.irfft(jnp.fft.rfft(q_rep, axis=-1) * jnp.conj(jnp.fft.rfft(k_roll, axis=-1)),
                         n=L, axis=-1)                                  # (Bh, hd, hd, L)

    corr_p = jnp.transpose(corr, (0, 2, 1, 3))                          # (Bh, c, i, L)
    cor = jnp.stack([jnp.roll(corr_p[:, i, :, :], i, axis=-2) for i in range(head_dim)], axis=1)

    len_parts = []
    for i in range(head_dim):
        sel = cor[:, i][:, topk_idx[i], :]                              # (Bh, ji_num, L)
        len_parts.append(jnp.sum(sel * topk_w_ji[i][:, None], axis=-2))
    len_corr = jnp.mean(jnp.stack(len_parts, axis=1), axis=1)           # (Bh, L)

    top_k = int(math.log(L))
    C2 = 2 * head_dim
    # v_cat carried TIME-MAJOR (L, Bh, 2hd): the TemporalBlock kernel runs on a flat 2-D slab and
    # the final view(L, B, 2*vdim) becomes a free reshape (no transpose).
    v_cat = jnp.concatenate(
        [v_tm, jnp.broadcast_to(weights_arr.T[None, :, :], (L, Bh, head_dim))], axis=-1)
    v_cat_flat = v_cat.reshape(L * Bh, C2)

    mean_corr = jnp.mean(len_corr, axis=0)                              # (L,)
    weight_vals, index = jax.lax.top_k(mean_corr, top_k)
    tmp_corr = jax.nn.softmax(weight_vals, axis=-1)

    # Data-dependent interval aggregation WITHOUT a host round-trip: the folded kernel size lies
    # in [0, L//2], so dispatch with lax.switch over that small static branch set (jit-friendly).
    def _tb_branch(ks):
        def br(key):
            k1, k2 = jax.random.split(key)
            # Fresh TemporalBlock per interval in the reference: conv weights ~ N(0, 0.01);
            # weight_norm at init is an identity reparam; dropout treated as identity.
            w1 = 0.01 * jax.random.normal(k1, (ks, C2, C2), F32)
            w2 = 0.01 * jax.random.normal(k2, (ks, C2, C2), F32)
            zb = jnp.zeros((C2,), F32)
            return pallas_temporal_block(v_cat_flat, w1, zb, w2, zb, k=ks, bh=Bh)
        return br

    branches = [(lambda key: v_cat_flat) if ks <= 1 else _tb_branch(ks)
                for ks in range(L // 2 + 1)]

    intervals_agg = jnp.zeros_like(v_cat_flat)
    for i in range(top_k):
        ind = index[i]
        ind = jnp.where(ind >= L // 2, L - ind, ind)
        yi = jax.lax.switch(ind, branches, jax.random.fold_in(rng_tb, i))
        intervals_agg = intervals_agg + tmp_corr[i] * yi

    # (L*Bh, 2hd) time-major == (L, Bh, 2hd).view(L, B, 2*vdim) -> free reshape, rows stay (t*B+b).
    intervals_flat = intervals_agg.reshape(L * B, 2 * vdim)

    cor5 = cor.reshape(B, heads, head_dim, head_dim, L)
    m = jnp.mean(jnp.mean(cor5, axis=0), axis=0)                        # (hd, hd, L)
    dim_cor = jnp.sum(m[:, :, index] * tmp_corr, axis=-1)
    dim_cor = jax.nn.softmax(scale * dim_cor, axis=-1)

    return intervals_flat, dim_cor, ji_mat


def encoder_layer_forward(p, x_flat, L, B, heads, rng):
    intervals_flat, dim_cor, ji_mat = cross_correlation(p["attn"], x_flat, L, B, heads, rng)
    # out_proj + residual + LayerNorm1 fused (dropout1 = identity in eval).
    x_flat = pallas_proj_add_layernorm(intervals_flat, p["attn"]["out_w"], p["attn"]["out_b"],
                                       x_flat, p["norm1_g"], p["norm1_b"])
    # linear1 -> LeakyReLU(True => slope 1.0) -> dropout(identity) -> linear2 + residual + LayerNorm2.
    x_flat = pallas_ffn_add_layernorm(x_flat, p["lin1_w"], p["lin1_b"],
                                      p["lin2_w"], p["lin2_b"],
                                      p["norm2_g"], p["norm2_b"], slope=1.0)
    return x_flat, dim_cor, ji_mat


@functools.partial(jax.jit, static_argnames=("heads", "num_layers"))
def trans_encoder_forward(params, src, rng, *, heads, num_layers):
    # src: (batch, seq, num_inputs)
    B, L, Cin = src.shape
    d_model = params["tok_b"].shape[0]

    # TokenEmbedding (circular Conv1d k=3) + PositionalEncoding in one fused Pallas kernel,
    # producing the time-major (L*B, d_model) slab carried through the whole encoder.
    x_tm = jnp.transpose(src, (1, 0, 2)).reshape(L * B, Cin).astype(F32)
    pe_rows = jnp.repeat(make_pe(L, d_model), B, axis=0)                 # row r=t*B+b -> pe[t]
    x_flat = pallas_token_embed_pe(x_tm, params["tok_w"], params["tok_b"], pe_rows, B)

    dim_corrs, ji_mats = [], []
    for li in range(num_layers):
        # _get_clones deep-copies the already-initialized layer -> identical params per clone.
        x_flat, dc, jm = encoder_layer_forward(params["layer"], x_flat, L, B, heads,
                                               jax.random.fold_in(rng, li))
        dim_corrs.append(dc)
        ji_mats.append(jm)

    # Final encoder LayerNorm + decoder Linear fused into one kernel.
    out = pallas_layernorm_linear(x_flat, params["enc_norm_g"], params["enc_norm_b"],
                                  params["dec_w"], params["dec_b"])
    return out.reshape(L, B, Cin), dim_corrs, ji_mats


def init_params(key, num_inputs, d_model, heads, dff=16):
    c_in = num_inputs
    kdim = vdim = c_in * heads
    keys = jax.random.split(key, 16)
    nrm = lambda k, shp, s=0.05: s * jax.random.normal(k, shp, F32)
    return {
        # Token conv weight stored as (k=3, Cin, Cout) so the fused kernel does shifted matmuls.
        "tok_w": nrm(keys[0], (3, c_in, d_model), 0.3),
        "tok_b": jnp.zeros((d_model,), F32),
        "layer": {
            "attn": {
                "q_w": nrm(keys[1], (d_model, kdim)), "q_b": nrm(keys[2], (kdim,)),
                "k_w": nrm(keys[3], (d_model, kdim)), "k_b": nrm(keys[4], (kdim,)),
                "v_w": nrm(keys[5], (d_model, vdim)), "v_b": nrm(keys[6], (vdim,)),
                "out_w": nrm(keys[7], (2 * vdim, d_model)), "out_b": nrm(keys[8], (d_model,)),
            },
            "lin1_w": nrm(keys[9], (d_model, dff)), "lin1_b": jnp.zeros((dff,), F32),
            "lin2_w": nrm(keys[10], (dff, d_model)), "lin2_b": jnp.zeros((d_model,), F32),
            "norm1_g": jnp.ones((d_model,), F32), "norm1_b": jnp.zeros((d_model,), F32),
            "norm2_g": jnp.ones((d_model,), F32), "norm2_b": jnp.zeros((d_model,), F32),
        },
        "enc_norm_g": jnp.ones((d_model,), F32),
        "enc_norm_b": jnp.zeros((d_model,), F32),
        "dec_w": nrm(keys[11], (d_model, num_inputs)),
        "dec_b": jnp.zeros((num_inputs,), F32),
    }


if __name__ == "__main__":
    # Small shapes: batch=2, seq=8, num_inputs=4, feature_size=32, heads=2, num_layers=1
    B, L, num_inputs = 2, 8, 4
    feature_size, heads, num_layers = 32, 2, 1

    key = jax.random.PRNGKey(0)
    pkey, xkey, fkey = jax.random.split(key, 3)
    params = init_params(pkey, num_inputs, feature_size, heads)
    src = jax.random.normal(xkey, (B, L, num_inputs), F32)

    out, dim_corrs, ji_mats = trans_encoder_forward(
        params, src, fkey, heads=heads, num_layers=num_layers)

    jax.block_until_ready(out)
    jax.block_until_ready(dim_corrs[0])
    jax.block_until_ready(ji_mats[0])
    assert out.shape == (L, B, num_inputs)
    print("KERNEL_OK")
</pallas_src>

<mosaic_0001>
module attributes {stable_mosaic.version = 11 : i64} {
  func.func @_token_embed_kernel(%arg0: memref<16x4xf32, #tpu.memory_space<vmem>>, %arg1: memref<3x4x32xf32, #tpu.memory_space<vmem>>, %arg2: memref<1x32xf32, #tpu.memory_space<vmem>>, %arg3: memref<16x32xf32, #tpu.memory_space<vmem>>, %arg4: memref<16x32xf32, #tpu.memory_space<vmem>>) attributes {dimension_semantics = [], scalar_prefetch = 0 : i64, scratch_operands = 0 : i64, tpu.core_type = #tpu.core_type<tc>} {
    %c0 = arith.constant 0 : index
    %c0_0 = arith.constant 0 : index
    %0 = vector.load %arg0[%c0, %c0_0] : memref<16x4xf32, #tpu.memory_space<vmem>>, vector<16x4xf32>
    %1 = vector.extract_strided_slice %0 {offsets = [14, 0], sizes = [2, 4], strides = [1, 1]} : vector<16x4xf32> to vector<2x4xf32>
    %2 = vector.extract_strided_slice %0 {offsets = [0, 0], sizes = [14, 4], strides = [1, 1]} : vector<16x4xf32> to vector<14x4xf32>
    %3 = tpu.concatenate %1, %2 in 0 : vector<2x4xf32>, vector<14x4xf32> -> vector<16x4xf32>
    %4 = vector.extract_strided_slice %0 {offsets = [2, 0], sizes = [14, 4], strides = [1, 1]} : vector<16x4xf32> to vector<14x4xf32>
    %5 = vector.extract_strided_slice %0 {offsets = [0, 0], sizes = [2, 4], strides = [1, 1]} : vector<16x4xf32> to vector<2x4xf32>
    %6 = tpu.concatenate %4, %5 in 0 : vector<14x4xf32>, vector<2x4xf32> -> vector<16x4xf32>
    %c0_1 = arith.constant 0 : index
    %c0_2 = arith.constant 0 : index
    %7 = vector.load %arg2[%c0_1, %c0_2] : memref<1x32xf32, #tpu.memory_space<vmem>>, vector<1x32xf32>
    %c0_3 = arith.constant 0 : index
    %c0_4 = arith.constant 0 : index
    %8 = vector.load %arg3[%c0_3, %c0_4] : memref<16x32xf32, #tpu.memory_space<vmem>>, vector<16x32xf32>
    %9 = vector.broadcast %7 : vector<1x32xf32> to vector<16x32xf32>
    %10 = arith.addf %9, %8 : vector<16x32xf32>
    %c0_5 = arith.constant 0 : index
    %c0_6 = arith.constant 0 : index
    %c0_7 = arith.constant 0 : index
    %11 = vector.load %arg1[%c0_5, %c0_6, %c0_7] : memref<3x4x32xf32, #tpu.memory_space<vmem>>, vector<1x4x32xf32>
    %12 = vector.shape_cast %11 : vector<1x4x32xf32> to vector<4x32xf32>
    %cst = arith.constant dense<0.000000e+00> : vector<16x32xf32>
    %13 = tpu.matmul %3, %12, %cst {dimension_numbers = #tpu.dot_dimension_numbers<[1], [0], [0], [1], [0, 0, 1, 1], [], []>} : vector<16x4xf32>, vector<4x32xf32>, vector<16x32xf32> -> vector<16x32xf32>
    %14 = arith.addf %10, %13 : vector<16x32xf32>
    %c1 = arith.constant 1 : index
    %c0_8 = arith.constant 0 : index
    %c0_9 = arith.constant 0 : index
    %15 = vector.load %arg1[%c1, %c0_8, %c0_9] : memref<3x4x32xf32, #tpu.memory_space<vmem>>, vector<1x4x32xf32>
    %16 = vector.shape_cast %15 : vector<1x4x32xf32> to vector<4x32xf32>
    %cst_10 = arith.constant dense<0.000000e+00> : vector<16x32xf32>
    %17 = tpu.matmul %0, %16, %cst_10 {dimension_numbers = #tpu.dot_dimension_numbers<[1], [0], [0], [1], [0, 0, 1, 1], [], []>} : vector<16x4xf32>, vector<4x32xf32>, vector<16x32xf32> -> vector<16x32xf32>
    %18 = arith.addf %14, %17 : vector<16x32xf32>
    %c2 = arith.constant 2 : index
    %c0_11 = arith.constant 0 : index
    %c0_12 = arith.constant 0 : index
    %19 = vector.load %arg1[%c2, %c0_11, %c0_12] : memref<3x4x32xf32, #tpu.memory_space<vmem>>, vector<1x4x32xf32>
    %20 = vector.shape_cast %19 : vector<1x4x32xf32> to vector<4x32xf32>
    %cst_13 = arith.constant dense<0.000000e+00> : vector<16x32xf32>
    %21 = tpu.matmul %6, %20, %cst_13 {dimension_numbers = #tpu.dot_dimension_numbers<[1], [0], [0], [1], [0, 0, 1, 1], [], []>} : vector<16x4xf32>, vector<4x32xf32>, vector<16x32xf32> -> vector<16x32xf32>
    %22 = arith.addf %18, %21 : vector<16x32xf32>
    %c0_14 = arith.constant 0 : index
    %c0_15 = arith.constant 0 : index
    %23 = vector.load %arg4[%c0_14, %c0_15] : memref<16x32xf32, #tpu.memory_space<vmem>>, vector<16x32xf32>
    tpu.vector_store %arg4[%c0_14, %c0_15], %22 {strides = array<i32>} : memref<16x32xf32, #tpu.memory_space<vmem>>, vector<16x32xf32>,
    return
  }
}

module attributes {stable_mosaic.version = 11 : i64} {
  func.func @_linear_kernel(%arg0: memref<16x32xf32, #tpu.memory_space<vmem>>, %arg1: memref<32x24xf32, #tpu.memory_space<vmem>>, %arg2: memref<1x24xf32, #tpu.memory_space<vmem>>, %arg3: memref<16x24xf32, #tpu.memory_space<vmem>>) attributes {dimension_semantics = [], scalar_prefetch = 0 : i64, scratch_operands = 0 : i64, tpu.core_type = #tpu.core_type<tc>} {
    %c0 = arith.constant 0 : index
    %c0_0 = arith.constant 0 : index
    %0 = vector.load %arg0[%c0, %c0_0] : memref<16x32xf32, #tpu.memory_space<vmem>>, vector<16x32xf32>
    %c0_1 = arith.constant 0 : index
    %c0_2 = arith.constant 0 : index
    %1 = vector.load %arg1[%c0_1, %c0_2] : memref<32x24xf32, #tpu.memory_space<vmem>>, vector<32x24xf32>
    %cst = arith.constant dense<0.000000e+00> : vector<16x24xf32>
    %2 = tpu.matmul %0, %1, %cst {dimension_numbers = #tpu.dot_dimension_numbers<[1], [0], [0], [1], [0, 0, 1, 1], [], []>} : vector<16x32xf32>, vector<32x24xf32>, vector<16x24xf32> -> vector<16x24xf32>
    %c0_3 = arith.constant 0 : index
    %c0_4 = arith.constant 0 : index
    %3 = vector.load %arg2[%c0_3, %c0_4] : memref<1x24xf32, #tpu.memory_space<vmem>>, vector<1x24xf32>
    %4 = vector.broadcast %3 : vector<1x24xf32> to vector<16x24xf32>
    %5 = arith.addf %2, %4 : vector<16x24xf32>
    %c0_5 = arith.constant 0 : index
    %c0_6 = arith.constant 0 : index
    %6 = vector.load %arg3[%c0_5, %c0_6] : memref<16x24xf32, #tpu.memory_space<vmem>>, vector<16x24xf32>
    tpu.vector_store %arg3[%c0_5, %c0_6], %5 {strides = array<i32>} : memref<16x24xf32, #tpu.memory_space<vmem>>, vector<16x24xf32>,
    return
  }
}

module attributes {stable_mosaic.version = 11 : i64} {
  func.func @_cosine_softmax_kernel(%arg0: memref<4x4xf32, #tpu.memory_space<vmem>>, %arg1: memref<4x4xf32, #tpu.memory_space<vmem>>, %arg2: memref<4x4xf32, #tpu.memory_space<vmem>>) attributes {dimension_semantics = [], scalar_prefetch = 0 : i64, scratch_operands = 0 : i64, tpu.core_type = #tpu.core_type<tc>} {
    %c0 = arith.constant 0 : index
    %c0_0 = arith.constant 0 : index
    %0 = vector.load %arg0[%c0, %c0_0] : memref<4x4xf32, #tpu.memory_space<vmem>>, vector<4x4xf32>
    %cst = arith.constant dense<0.000000e+00> : vector<4x4xf32>
    %1 = tpu.matmul %0, %0, %cst {dimension_numbers = #tpu.dot_dimension_numbers<[1], [1], [0], [0], [0, 0, 1, 0], [], []>} : vector<4x4xf32>, vector<4x4xf32>, vector<4x4xf32> -> vector<4x4xf32>
    %2 = tpu.iota {dimensions = array<i32: 0>} : vector<4x4xi32>
    %3 = tpu.iota {dimensions = array<i32: 1>} : vector<4x4xi32>
    %4 = arith.cmpi eq, %2, %3 : vector<4x4xi32>
    %cst_1 = arith.constant 0.000000e+00 : f32
    %5 = vector.broadcast %cst_1 : f32 to vector<4x4xf32>
    %6 = arith.select %4, %1, %5 : vector<4x4xi1>, vector<4x4xf32>
    %cst_2 = arith.constant dense<0.000000e+00> : vector<4xf32>
    %7 = vector.multi_reduction <add>, %6, %cst_2 [1] : vector<4x4xf32> to vector<4xf32>
    %8 = vector.shape_cast %7 : vector<4xf32> to vector<4x1xf32>
    %cst_3 = arith.constant dense<0.000000e+00> : vector<4xf32>
    %9 = vector.multi_reduction <add>, %6, %cst_3 [0] : vector<4x4xf32> to vector<4xf32>
    %10 = vector.shape_cast %9 : vector<4xf32> to vector<1x4xf32>
    %11 = vector.broadcast %8 : vector<4x1xf32> to vector<4x4xf32>
    %12 = vector.broadcast %10 : vector<1x4xf32> to vector<4x4xf32>
    %13 = arith.mulf %11, %12 : vector<4x4xf32>
    %14 = math.rsqrt %13 : vector<4x4xf32>
    %15 = arith.mulf %1, %14 : vector<4x4xf32>
    %c0_4 = arith.constant 0 : index
    %c0_5 = arith.constant 0 : index
    %16 = vector.load %arg1[%c0_4, %c0_5] : memref<4x4xf32, #tpu.memory_space<vmem>>, vector<4x4xf32>
    tpu.vector_store %arg1[%c0_4, %c0_5], %15 {strides = array<i32>} : memref<4x4xf32, #tpu.memory_space<vmem>>, vector<4x4xf32>,
    %cst_6 = arith.constant dense<0xFF800000> : vector<4xf32>
    %17 = vector.multi_reduction <maximumf>, %15, %cst_6 [1] : vector<4x4xf32> to vector<4xf32>
    %18 = vector.shape_cast %17 : vector<4xf32> to vector<4x1xf32>
    %19 = vector.broadcast %18 : vector<4x1xf32> to vector<4x4xf32>
    %20 = arith.subf %15, %19 : vector<4x4xf32>
    %21 = math.exp %20 : vector<4x4xf32>
    %cst_7 = arith.constant dense<0.000000e+00> : vector<4xf32>
    %22 = vector.multi_reduction <add>, %21, %cst_7 [1] : vector<4x4xf32> to vector<4xf32>
    %23 = vector.shape_cast %22 : vector<4xf32> to vector<4x1xf32>
    %24 = vector.broadcast %23 : vector<4x1xf32> to vector<4x4xf32>
    %25 = arith.divf %21, %24 : vector<4x4xf32>
    %c0_8 = arith.constant 0 : index
    %c0_9 = arith.constant 0 : index
    %26 = vector.load %arg2[%c0_8, %c0_9] : memref<4x4xf32, #tpu.memory_space<vmem>>, vector<4x4xf32>
    tpu.vector_store %arg2[%c0_8, %c0_9], %25 {strides = array<i32>} : memref<4x4xf32, #tpu.memory_space<vmem>>, vector<4x4xf32>,
    return
  }
}

module attributes {stable_mosaic.version = 11 : i64} {
  func.func @_temporal_block_kernel(%arg0: memref<32x8xf32, #tpu.memory_space<vmem>>, %arg1: memref<3x8x8xf32, #tpu.memory_space<vmem>>, %arg2: memref<1x8xf32, #tpu.memory_space<vmem>>, %arg3: memref<3x8x8xf32, #tpu.memory_space<vmem>>, %arg4: memref<1x8xf32, #tpu.memory_space<vmem>>, %arg5: memref<32x8xf32, #tpu.memory_space<vmem>>) attributes {dimension_semantics = [], scalar_prefetch = 0 : i64, scratch_operands = 0 : i64, tpu.core_type = #tpu.core_type<tc>} {
    %c0 = arith.constant 0 : index
    %c0_0 = arith.constant 0 : index
    %0 = vector.load %arg0[%c0, %c0_0] : memref<32x8xf32, #tpu.memory_space<vmem>>, vector<32x8xf32>
    %1 = tpu.iota {dimensions = array<i32: 0>} : vector<32x1xi32>
    %cst = arith.constant 0.000000e+00 : f32
    %2 = vector.broadcast %cst : f32 to vector<32x8xf32>
    %c0_1 = arith.constant 0 : index
    %c0_2 = arith.constant 0 : index
    %3 = vector.load %arg2[%c0_1, %c0_2] : memref<1x8xf32, #tpu.memory_space<vmem>>, vector<1x8xf32>
    %4 = vector.broadcast %3 : vector<1x8xf32> to vector<32x8xf32>
    %5 = arith.addf %2, %4 : vector<32x8xf32>
    %c8_i32 = arith.constant 8 : i32
    %6 = vector.broadcast %c8_i32 : i32 to vector<32x1xi32>
    %7 = arith.cmpi slt, %1, %6 : vector<32x1xi32>
    %8 = vector.extract_strided_slice %0 {offsets = [24, 0], sizes = [8, 8], strides = [1, 1]} : vector<32x8xf32> to vector<8x8xf32>
    %9 = vector.extract_strided_slice %0 {offsets = [0, 0], sizes = [24, 8], strides = [1, 1]} : vector<32x8xf32> to vector<24x8xf32>
    %10 = tpu.concatenate %8, %9 in 0 : vector<8x8xf32>, vector<24x8xf32> -> vector<32x8xf32>
    %cst_3 = arith.constant 0.000000e+00 : f32
    %11 = vector.shape_cast %7 : vector<32x1xi1> to vector<32x1xi1>
    %12 = vector.broadcast %11 : vector<32x1xi1> to vector<32x8xi1>
    %13 = vector.broadcast %cst_3 : f32 to vector<32x8xf32>
    %14 = arith.select %12, %13, %10 : vector<32x8xi1>, vector<32x8xf32>
    %c0_4 = arith.constant 0 : index
    %c0_5 = arith.constant 0 : index
    %c0_6 = arith.constant 0 : index
    %15 = vector.load %arg1[%c0_4, %c0_5, %c0_6] : memref<3x8x8xf32, #tpu.memory_space<vmem>>, vector<1x8x8xf32>
    %16 = vector.shape_cast %15 : vector<1x8x8xf32> to vector<8x8xf32>
    %cst_7 = arith.constant dense<0.000000e+00> : vector<32x8xf32>
    %17 = tpu.matmul %14, %16, %cst_7 {dimension_numbers = #tpu.dot_dimension_numbers<[1], [0], [0], [1], [0, 0, 1, 1], [], []>} : vector<32x8xf32>, vector<8x8xf32>, vector<32x8xf32> -> vector<32x8xf32>
    %18 = arith.addf %5, %17 : vector<32x8xf32>
    %c4_i32 = arith.constant 4 : i32
    %19 = vector.broadcast %c4_i32 : i32 to vector<32x1xi32>
    %20 = arith.cmpi slt, %1, %19 : vector<32x1xi32>
    %21 = vector.extract_strided_slice %0 {offsets = [28, 0], sizes = [4, 8], strides = [1, 1]} : vector<32x8xf32> to vector<4x8xf32>
    %22 = vector.extract_strided_slice %0 {offsets = [0, 0], sizes = [28, 8], strides = [1, 1]} : vector<32x8xf32> to vector<28x8xf32>
    %23 = tpu.concatenate %21, %22 in 0 : vector<4x8xf32>, vector<28x8xf32> -> vector<32x8xf32>
    %cst_8 = arith.constant 0.000000e+00 : f32
    %24 = vector.shape_cast %20 : vector<32x1xi1> to vector<32x1xi1>
    %25 = vector.broadcast %24 : vector<32x1xi1> to vector<32x8xi1>
    %26 = vector.broadcast %cst_8 : f32 to vector<32x8xf32>
    %27 = arith.select %25, %26, %23 : vector<32x8xi1>, vector<32x8xf32>
    %c1 = arith.constant 1 : index
    %c0_9 = arith.constant 0 : index
    %c0_10 = arith.constant 0 : index
    %28 = vector.load %arg1[%c1, %c0_9, %c0_10] : memref<3x8x8xf32, #tpu.memory_space<vmem>>, vector<1x8x8xf32>
    %29 = vector.shape_cast %28 : vector<1x8x8xf32> to vector<8x8xf32>
    %cst_11 = arith.constant dense<0.000000e+00> : vector<32x8xf32>
    %30 = tpu.matmul %27, %29, %cst_11 {dimension_numbers = #tpu.dot_dimension_numbers<[1], [0], [0], [1], [0, 0, 1, 1], [], []>} : vector<32x8xf32>, vector<8x8xf32>, vector<32x8xf32> -> vector<32x8xf32>
    %31 = arith.addf %18, %30 : vector<32x8xf32>
    %c2 = arith.constant 2 : index
    %c0_12 = arith.constant 0 : index
    %c0_13 = arith.constant 0 : index
    %32 = vector.load %arg1[%c2, %c0_12, %c0_13] : memref<3x8x8xf32, #tpu.memory_space<vmem>>, vector<1x8x8xf32>
    %33 = vector.shape_cast %32 : vector<1x8x8xf32> to vector<8x8xf32>
    %cst_14 = arith.constant dense<0.000000e+00> : vector<32x8xf32>
    %34 = tpu.matmul %0, %33, %cst_14 {dimension_numbers = #tpu.dot_dimension_numbers<[1], [0], [0], [1], [0, 0, 1, 1], [], []>} : vector<32x8xf32>, vector<8x8xf32>, vector<32x8xf32> -> vector<32x8xf32>
    %35 = arith.addf %31, %34 : vector<32x8xf32>
    %cst_15 = arith.constant 0.000000e+00 : f32
    %36 = vector.broadcast %cst_15 : f32 to vector<32x8xf32>
    %37 = arith.maximumf %35, %36 : vector<32x8xf32>
    %cst_16 = arith.constant 0.000000e+00 : f32
    %38 = vector.broadcast %cst_16 : f32 to vector<32x8xf32>
    %c0_17 = arith.constant 0 : index
    %c0_18 = arith.constant 0 : index
    %39 = vector.load %arg4[%c0_17, %c0_18] : memref<1x8xf32, #tpu.memory_space<vmem>>, vector<1x8xf32>
    %40 = vector.broadcast %39 : vector<1x8xf32> to vector<32x8xf32>
    %41 = arith.addf %38, %40 : vector<32x8xf32>
    %c8_i32_19 = arith.constant 8 : i32
    %42 = vector.broadcast %c8_i32_19 : i32 to vector<32x1xi32>
    %43 = arith.cmpi slt, %1, %42 : vector<32x1xi32>
    %44 = vector.extract_strided_slice %37 {offsets = [24, 0], sizes = [8, 8], strides = [1, 1]} : vector<32x8xf32> to vector<8x8xf32>
    %45 = vector.extract_strided_slice %37 {offsets = [0, 0], sizes = [24, 8], strides = [1, 1]} : vector<32x8xf32> to vector<24x8xf32>
    %46 = tpu.concatenate %44, %45 in 0 : vector<8x8xf32>, vector<24x8xf32> -> vector<32x8xf32>
    %cst_20 = arith.constant 0.000000e+00 : f32
    %47 = vector.shape_cast %43 : vector<32x1xi1> to vector<32x1xi1>
    %48 = vector.broadcast %47 : vector<32x1xi1> to vector<32x8xi1>
    %49 = vector.broadcast %cst_20 : f32 to vector<32x8xf32>
    %50 = arith.select %48, %49, %46 : vector<32x8xi1>, vector<32x8xf32>
    %c0_21 = arith.constant 0 : index
    %c0_22 = arith.constant 0 : index
    %c0_23 = arith.constant 0 : index
    %51 = vector.load %arg3[%c0_21, %c0_22, %c0_23] : memref<3x8x8xf32, #tpu.memory_space<vmem>>, vector<1x8x8xf32>
    %52 = vector.shape_cast %51 : vector<1x8x8xf32> to vector<8x8xf32>
    %cst_24 = arith.constant dense<0.000000e+00> : vector<32x8xf32>
    %53 = tpu.matmul %50, %52, %cst_24 {dimension_numbers = #tpu.dot_dimension_numbers<[1], [0], [0], [1], [0, 0, 1, 1], [], []>} : vector<32x8xf32>, vector<8x8xf32>, vector<32x8xf32> -> vector<32x8xf32>
    %54 = arith.addf %41, %53 : vector<32x8xf32>
    %c4_i32_25 = arith.constant 4 : i32
    %55 = vector.broadcast %c4_i32_25 : i32 to vector<32x1xi32>
    %56 = arith.cmpi slt, %1, %55 : vector<32x1xi32>
    %57 = vector.extract_strided_slice %37 {offsets = [28, 0], sizes = [4, 8], strides = [1, 1]} : vector<32x8xf32> to vector<4x8xf32>
    %58 = vector.extract_strided_slice %37 {offsets = [0, 0], sizes = [28, 8], strides = [1, 1]} : vector<32x8xf32> to vector<28x8xf32>
    %59 = tpu.concatenate %57, %58 in 0 : vector<4x8xf32>, vector<28x8xf32> -> vector<32x8xf32>
    %cst_26 = arith.constant 0.000000e+00 : f32
    %60 = vector.shape_cast %56 : vector<32x1xi1> to vector<32x1xi1>
    %61 = vector.broadcast %60 : vector<32x1xi1> to vector<32x8xi1>
    %62 = vector.broadcast %cst_26 : f32 to vector<32x8xf32>
    %63 = arith.select %61, %62, %59 : vector<32x8xi1>, vector<32x8xf32>
    %c1_27 = arith.constant 1 : index
    %c0_28 = arith.constant 0 : index
    %c0_29 = arith.constant 0 : index
    %64 = vector.load %arg3[%c1_27, %c0_28, %c0_29] : memref<3x8x8xf32, #tpu.memory_space<vmem>>, vector<1x8x8xf32>
    %65 = vector.shape_cast %64 : vector<1x8x8xf32> to vector<8x8xf32>
    %cst_30 = arith.constant dense<0.000000e+00> : vector<32x8xf32>
    %66 = tpu.matmul %63, %65, %cst_30 {dimension_numbers = #tpu.dot_dimension_numbers<[1], [0], [0], [1], [0, 0, 1, 1], [], []>} : vector<32x8xf32>, vector<8x8xf32>, vector<32x8xf32> -> vector<32x8xf32>
    %67 = arith.addf %54, %66 : vector<32x8xf32>
    %c2_31 = arith.constant 2 : index
    %c0_32 = arith.constant 0 : index
    %c0_33 = arith.constant 0 : index
    %68 = vector.load %arg3[%c2_31, %c0_32, %c0_33] : memref<3x8x8xf32, #tpu.memory_space<vmem>>, vector<1x8x8xf32>
    %69 = vector.shape_cast %68 : vector<1x8x8xf32> to vector<8x8xf32>
    %cst_34 = arith.constant dense<0.000000e+00> : vector<32x8xf32>
    %70 = tpu.matmul %37, %69, %cst_34 {dimension_numbers = #tpu.dot_dimension_numbers<[1], [0], [0], [1], [0, 0, 1, 1], [], []>} : vector<32x8xf32>, vector<8x8xf32>, vector<32x8xf32> -> vector<32x8xf32>
    %71 = arith.addf %67, %70 : vector<32x8xf32>
    %cst_35 = arith.constant 0.000000e+00 : f32
    %72 = vector.broadcast %cst_35 : f32 to vector<32x8xf32>
    %73 = arith.maximumf %71, %72 : vector<32x8xf32>
    %74 = arith.addf %73, %0 : vector<32x8xf32>
    %cst_36 = arith.constant 0.000000e+00 : f32
    %75 = vector.broadcast %cst_36 : f32 to vector<32x8xf32>
    %76 = arith.maximumf %74, %75 : vector<32x8xf32>
    %c0_37 = arith.constant 0 : index
    %c0_38 = arith.constant 0 : index
    %77 = vector.load %arg5[%c0_37, %c0_38] : memref<32x8xf32, #tpu.memory_space<vmem>>, vector<32x8xf32>
    tpu.vector_store %arg5[%c0_37, %c0_38], %76 {strides = array<i32>} : memref<32x8xf32, #tpu.memory_space<vmem>>, vector<32x8xf32>,
    return
  }
}

module attributes {stable_mosaic.version = 11 : i64} {
  func.func @_temporal_block_kernel(%arg0: memref<32x8xf32, #tpu.memory_space<vmem>>, %arg1: memref<2x8x8xf32, #tpu.memory_space<vmem>>, %arg2: memref<1x8xf32, #tpu.memory_space<vmem>>, %arg3: memref<2x8x8xf32, #tpu.memory_space<vmem>>, %arg4: memref<1x8xf32, #tpu.memory_space<vmem>>, %arg5: memref<32x8xf32, #tpu.memory_space<vmem>>) attributes {dimension_semantics = [], scalar_prefetch = 0 : i64, scratch_operands = 0 : i64, tpu.core_type = #tpu.core_type<tc>} {
    %c0 = arith.constant 0 : index
    %c0_0 = arith.constant 0 : index
    %0 = vector.load %arg0[%c0, %c0_0] : memref<32x8xf32, #tpu.memory_space<vmem>>, vector<32x8xf32>
    %1 = tpu.iota {dimensions = array<i32: 0>} : vector<32x1xi32>
    %cst = arith.constant 0.000000e+00 : f32
    %2 = vector.broadcast %cst : f32 to vector<32x8xf32>
    %c0_1 = arith.constant 0 : index
    %c0_2 = arith.constant 0 : index
    %3 = vector.load %arg2[%c0_1, %c0_2] : memref<1x8xf32, #tpu.memory_space<vmem>>, vector<1x8xf32>
    %4 = vector.broadcast %3 : vector<1x8xf32> to vector<32x8xf32>
    %5 = arith.addf %2, %4 : vector<32x8xf32>
    %c4_i32 = arith.constant 4 : i32
    %6 = vector.broadcast %c4_i32 : i32 to vector<32x1xi32>
    %7 = arith.cmpi slt, %1, %6 : vector<32x1xi32>
    %8 = vector.extract_strided_slice %0 {offsets = [28, 0], sizes = [4, 8], strides = [1, 1]} : vector<32x8xf32> to vector<4x8xf32>
    %9 = vector.extract_strided_slice %0 {offsets = [0, 0], sizes = [28, 8], strides = [1, 1]} : vector<32x8xf32> to vector<28x8xf32>
    %10 = tpu.concatenate %8, %9 in 0 : vector<4x8xf32>, vector<28x8xf32> -> vector<32x8xf32>
    %cst_3 = arith.constant 0.000000e+00 : f32
    %11 = vector.shape_cast %7 : vector<32x1xi1> to vector<32x1xi1>
    %12 = vector.broadcast %11 : vector<32x1xi1> to vector<32x8xi1>
    %13 = vector.broadcast %cst_3 : f32 to vector<32x8xf32>
    %14 = arith.select %12, %13, %10 : vector<32x8xi1>, vector<32x8xf32>
    %c0_4 = arith.constant 0 : index
    %c0_5 = arith.constant 0 : index
    %c0_6 = arith.constant 0 : index
    %15 = vector.load %arg1[%c0_4, %c0_5, %c0_6] : memref<2x8x8xf32, #tpu.memory_space<vmem>>, vector<1x8x8xf32>
    %16 = vector.shape_cast %15 : vector<1x8x8xf32> to vector<8x8xf32>
    %cst_7 = arith.constant dense<0.000000e+00> : vector<32x8xf32>
    %17 = tpu.matmul %14, %16, %cst_7 {dimension_numbers = #tpu.dot_dimension_numbers<[1], [0], [0], [1], [0, 0, 1, 1], [], []>} : vector<32x8xf32>, vector<8x8xf32>, vector<32x8xf32> -> vector<32x8xf32>
    %18 = arith.addf %5, %17 : vector<32x8xf32>
    %c1 = arith.constant 1 : index
    %c0_8 = arith.constant 0 : index
    %c0_9 = arith.constant 0 : index
    %19 = vector.load %arg1[%c1, %c0_8, %c0_9] : memref<2x8x8xf32, #tpu.memory_space<vmem>>, vector<1x8x8xf32>
    %20 = vector.shape_cast %19 : vector<1x8x8xf32> to vector<8x8xf32>
    %cst_10 = arith.constant dense<0.000000e+00> : vector<32x8xf32>
    %21 = tpu.matmul %0, %20, %cst_10 {dimension_numbers = #tpu.dot_dimension_numbers<[1], [0], [0], [1], [0, 0, 1, 1], [], []>} : vector<32x8xf32>, vector<8x8xf32>, vector<32x8xf32> -> vector<32x8xf32>
    %22 = arith.addf %18, %21 : vector<32x8xf32>
    %cst_11 = arith.constant 0.000000e+00 : f32
    %23 = vector.broadcast %cst_11 : f32 to vector<32x8xf32>
    %24 = arith.maximumf %22, %23 : vector<32x8xf32>
    %cst_12 = arith.constant 0.000000e+00 : f32
    %25 = vector.broadcast %cst_12 : f32 to vector<32x8xf32>
    %c0_13 = arith.constant 0 : index
    %c0_14 = arith.constant 0 : index
    %26 = vector.load %arg4[%c0_13, %c0_14] : memref<1x8xf32, #tpu.memory_space<vmem>>, vector<1x8xf32>
    %27 = vector.broadcast %26 : vector<1x8xf32> to vector<32x8xf32>
    %28 = arith.addf %25, %27 : vector<32x8xf32>
    %c4_i32_15 = arith.constant 4 : i32
    %29 = vector.broadcast %c4_i32_15 : i32 to vector<32x1xi32>
    %30 = arith.cmpi slt, %1, %29 : vector<32x1xi32>
    %31 = vector.extract_strided_slice %24 {offsets = [28, 0], sizes = [4, 8], strides = [1, 1]} : vector<32x8xf32> to vector<4x8xf32>
    %32 = vector.extract_strided_slice %24 {offsets = [0, 0], sizes = [28, 8], strides = [1, 1]} : vector<32x8xf32> to vector<28x8xf32>
    %33 = tpu.concatenate %31, %32 in 0 : vector<4x8xf32>, vector<28x8xf32> -> vector<32x8xf32>
    %cst_16 = arith.constant 0.000000e+00 : f32
    %34 = vector.shape_cast %30 : vector<32x1xi1> to vector<32x1xi1>
    %35 = vector.broadcast %34 : vector<32x1xi1> to vector<32x8xi1>
    %36 = vector.broadcast %cst_16 : f32 to vector<32x8xf32>
    %37 = arith.select %35, %36, %33 : vector<32x8xi1>, vector<32x8xf32>
    %c0_17 = arith.constant 0 : index
    %c0_18 = arith.constant 0 : index
    %c0_19 = arith.constant 0 : index
    %38 = vector.load %arg3[%c0_17, %c0_18, %c0_19] : memref<2x8x8xf32, #tpu.memory_space<vmem>>, vector<1x8x8xf32>
    %39 = vector.shape_cast %38 : vector<1x8x8xf32> to vector<8x8xf32>
    %cst_20 = arith.constant dense<0.000000e+00> : vector<32x8xf32>
    %40 = tpu.matmul %37, %39, %cst_20 {dimension_numbers = #tpu.dot_dimension_numbers<[1], [0], [0], [1], [0, 0, 1, 1], [], []>} : vector<32x8xf32>, vector<8x8xf32>, vector<32x8xf32> -> vector<32x8xf32>
    %41 = arith.addf %28, %40 : vector<32x8xf32>
    %c1_21 = arith.constant 1 : index
    %c0_22 = arith.constant 0 : index
    %c0_23 = arith.constant 0 : index
    %42 = vector.load %arg3[%c1_21, %c0_22, %c0_23] : memref<2x8x8xf32, #tpu.memory_space<vmem>>, vector<1x8x8xf32>
    %43 = vector.shape_cast %42 : vector<1x8x8xf32> to vector<8x8xf32>
    %cst_24 = arith.constant dense<0.000000e+00> : vector<32x8xf32>
    %44 = tpu.matmul %24, %43, %cst_24 {dimension_numbers = #tpu.dot_dimension_numbers<[1], [0], [0], [1], [0, 0, 1, 1], [], []>} : vector<32x8xf32>, vector<8x8xf32>, vector<32x8xf32> -> vector<32x8xf32>
    %45 = arith.addf %41, %44 : vector<32x8xf32>
    %cst_25 = arith.constant 0.000000e+00 : f32
    %46 = vector.broadcast %cst_25 : f32 to vector<32x8xf32>
    %47 = arith.maximumf %45, %46 : vector<32x8xf32>
    %48 = arith.addf %47, %0 : vector<32x8xf32>
    %cst_26 = arith.constant 0.000000e+00 : f32
    %49 = vector.broadcast %cst_26 : f32 to vector<32x8xf32>
    %50 = arith.maximumf %48, %49 : vector<32x8xf32>
    %c0_27 = arith.constant 0 : index
    %c0_28 = arith.constant 0 : index
    %51 = vector.load %arg5[%c0_27, %c0_28] : memref<32x8xf32, #tpu.memory_space<vmem>>, vector<32x8xf32>
    tpu.vector_store %arg5[%c0_27, %c0_28], %50 {strides = array<i32>} : memref<32x8xf32, #tpu.memory_space<vmem>>, vector<32x8xf32>,
    return
  }
}

module attributes {stable_mosaic.version = 11 : i64} {
  func.func @_temporal_block_kernel(%arg0: memref<32x8xf32, #tpu.memory_space<vmem>>, %arg1: memref<4x8x8xf32, #tpu.memory_space<vmem>>, %arg2: memref<1x8xf32, #tpu.memory_space<vmem>>, %arg3: memref<4x8x8xf32, #tpu.memory_space<vmem>>, %arg4: memref<1x8xf32, #tpu.memory_space<vmem>>, %arg5: memref<32x8xf32, #tpu.memory_space<vmem>>) attributes {dimension_semantics = [], scalar_prefetch = 0 : i64, scratch_operands = 0 : i64, tpu.core_type = #tpu.core_type<tc>} {
    %c0 = arith.constant 0 : index
    %c0_0 = arith.constant 0 : index
    %0 = vector.load %arg0[%c0, %c0_0] : memref<32x8xf32, #tpu.memory_space<vmem>>, vector<32x8xf32>
    %1 = tpu.iota {dimensions = array<i32: 0>} : vector<32x1xi32>
    %cst = arith.constant 0.000000e+00 : f32
    %2 = vector.broadcast %cst : f32 to vector<32x8xf32>
    %c0_1 = arith.constant 0 : index
    %c0_2 = arith.constant 0 : index
    %3 = vector.load %arg2[%c0_1, %c0_2] : memref<1x8xf32, #tpu.memory_space<vmem>>, vector<1x8xf32>
    %4 = vector.broadcast %3 : vector<1x8xf32> to vector<32x8xf32>
    %5 = arith.addf %2, %4 : vector<32x8xf32>
    %c12_i32 = arith.constant 12 : i32
    %6 = vector.broadcast %c12_i32 : i32 to vector<32x1xi32>
    %7 = arith.cmpi slt, %1, %6 : vector<32x1xi32>
    %8 = vector.extract_strided_slice %0 {offsets = [20, 0], sizes = [12, 8], strides = [1, 1]} : vector<32x8xf32> to vector<12x8xf32>
    %9 = vector.extract_strided_slice %0 {offsets = [0, 0], sizes = [20, 8], strides = [1, 1]} : vector<32x8xf32> to vector<20x8xf32>
    %10 = tpu.concatenate %8, %9 in 0 : vector<12x8xf32>, vector<20x8xf32> -> vector<32x8xf32>
    %cst_3 = arith.constant 0.000000e+00 : f32
    %11 = vector.shape_cast %7 : vector<32x1xi1> to vector<32x1xi1>
    %12 = vector.broadcast %11 : vector<32x1xi1> to vector<32x8xi1>
    %13 = vector.broadcast %cst_3 : f32 to vector<32x8xf32>
    %14 = arith.select %12, %13, %10 : vector<32x8xi1>, vector<32x8xf32>
    %c0_4 = arith.constant 0 : index
    %c0_5 = arith.constant 0 : index
    %c0_6 = arith.constant 0 : index
    %15 = vector.load %arg1[%c0_4, %c0_5, %c0_6] : memref<4x8x8xf32, #tpu.memory_space<vmem>>, vector<1x8x8xf32>
    %16 = vector.shape_cast %15 : vector<1x8x8xf32> to vector<8x8xf32>
    %cst_7 = arith.constant dense<0.000000e+00> : vector<32x8xf32>
    %17 = tpu.matmul %14, %16, %cst_7 {dimension_numbers = #tpu.dot_dimension_numbers<[1], [0], [0], [1], [0, 0, 1, 1], [], []>} : vector<32x8xf32>, vector<8x8xf32>, vector<32x8xf32> -> vector<32x8xf32>
    %18 = arith.addf %5, %17 : vector<32x8xf32>
    %c8_i32 = arith.constant 8 : i32
    %19 = vector.broadcast %c8_i32 : i32 to vector<32x1xi32>
    %20 = arith.cmpi slt, %1, %19 : vector<32x1xi32>
    %21 = vector.extract_strided_slice %0 {offsets = [24, 0], sizes = [8, 8], strides = [1, 1]} : vector<32x8xf32> to vector<8x8xf32>
    %22 = vector.extract_strided_slice %0 {offsets = [0, 0], sizes = [24, 8], strides = [1, 1]} : vector<32x8xf32> to vector<24x8xf32>
    %23 = tpu.concatenate %21, %22 in 0 : vector<8x8xf32>, vector<24x8xf32> -> vector<32x8xf32>
    %cst_8 = arith.constant 0.000000e+00 : f32
    %24 = vector.shape_cast %20 : vector<32x1xi1> to vector<32x1xi1>
    %25 = vector.broadcast %24 : vector<32x1xi1> to vector<32x8xi1>
    %26 = vector.broadcast %cst_8 : f32 to vector<32x8xf32>
    %27 = arith.select %25, %26, %23 : vector<32x8xi1>, vector<32x8xf32>
    %c1 = arith.constant 1 : index
    %c0_9 = arith.constant 0 : index
    %c0_10 = arith.constant 0 : index
    %28 = vector.load %arg1[%c1, %c0_9, %c0_10] : memref<4x8x8xf32, #tpu.memory_space<vmem>>, vector<1x8x8xf32>
    %29 = vector.shape_cast %28 : vector<1x8x8xf32> to vector<8x8xf32>
    %cst_11 = arith.constant dense<0.000000e+00> : vector<32x8xf32>
    %30 = tpu.matmul %27, %29, %cst_11 {dimension_numbers = #tpu.dot_dimension_numbers<[1], [0], [0], [1], [0, 0, 1, 1], [], []>} : vector<32x8xf32>, vector<8x8xf32>, vector<32x8xf32> -> vector<32x8xf32>
    %31 = arith.addf %18, %30 : vector<32x8xf32>
    %c4_i32 = arith.constant 4 : i32
    %32 = vector.broadcast %c4_i32 : i32 to vector<32x1xi32>
    %33 = arith.cmpi slt, %1, %32 : vector<32x1xi32>
    %34 = vector.extract_strided_slice %0 {offsets = [28, 0], sizes = [4, 8], strides = [1, 1]} : vector<32x8xf32> to vector<4x8xf32>
    %35 = vector.extract_strided_slice %0 {offsets = [0, 0], sizes = [28, 8], strides = [1, 1]} : vector<32x8xf32> to vector<28x8xf32>
    %36 = tpu.concatenate %34, %35 in 0 : vector<4x8xf32>, vector<28x8xf32> -> vector<32x8xf32>
    %cst_12 = arith.constant 0.000000e+00 : f32
    %37 = vector.shape_cast %33 : vector<32x1xi1> to vector<32x1xi1>
    %38 = vector.broadcast %37 : vector<32x1xi1> to vector<32x8xi1>
    %39 = vector.broadcast %cst_12 : f32 to vector<32x8xf32>
    %40 = arith.select %38, %39, %36 : vector<32x8xi1>, vector<32x8xf32>
    %c2 = arith.constant 2 : index
    %c0_13 = arith.constant 0 : index
    %c0_14 = arith.constant 0 : index
    %41 = vector.load %arg1[%c2, %c0_13, %c0_14] : memref<4x8x8xf32, #tpu.memory_space<vmem>>, vector<1x8x8xf32>
    %42 = vector.shape_cast %41 : vector<1x8x8xf32> to vector<8x8xf32>
    %cst_15 = arith.constant dense<0.000000e+00> : vector<32x8xf32>
    %43 = tpu.matmul %40, %42, %cst_15 {dimension_numbers = #tpu.dot_dimension_numbers<[1], [0], [0], [1], [0, 0, 1, 1], [], []>} : vector<32x8xf32>, vector<8x8xf32>, vector<32x8xf32> -> vector<32x8xf32>
    %44 = arith.addf %31, %43 : vector<32x8xf32>
    %c3 = arith.constant 3 : index
    %c0_16 = arith.constant 0 : index
    %c0_17 = arith.constant 0 : index
    %45 = vector.load %arg1[%c3, %c0_16, %c0_17] : memref<4x8x8xf32, #tpu.memory_space<vmem>>, vector<1x8x8xf32>
    %46 = vector.shape_cast %45 : vector<1x8x8xf32> to vector<8x8xf32>
    %cst_18 = arith.constant dense<0.000000e+00> : vector<32x8xf32>
    %47 = tpu.matmul %0, %46, %cst_18 {dimension_numbers = #tpu.dot_dimension_numbers<[1], [0], [0], [1], [0, 0, 1, 1], [], []>} : vector<32x8xf32>, vector<8x8xf32>, vector<32x8xf32> -> vector<32x8xf32>
    %48 = arith.addf %44, %47 : vector<32x8xf32>
    %cst_19 = arith.constant 0.000000e+00 : f32
    %49 = vector.broadcast %cst_19 : f32 to vector<32x8xf32>
    %50 = arith.maximumf %48, %49 : vector<32x8xf32>
    %cst_20 = arith.constant 0.000000e+00 : f32
    %51 = vector.broadcast %cst_20 : f32 to vector<32x8xf32>
    %c0_21 = arith.constant 0 : index
    %c0_22 = arith.constant 0 : index
    %52 = vector.load %arg4[%c0_21, %c0_22] : memref<1x8xf32, #tpu.memory_space<vmem>>, vector<1x8xf32>
    %53 = vector.broadcast %52 : vector<1x8xf32> to vector<32x8xf32>
    %54 = arith.addf %51, %53 : vector<32x8xf32>
    %c12_i32_23 = arith.constant 12 : i32
    %55 = vector.broadcast %c12_i32_23 : i32 to vector<32x1xi32>
    %56 = arith.cmpi slt, %1, %55 : vector<32x1xi32>
    %57 = vector.extract_strided_slice %50 {offsets = [20, 0], sizes = [12, 8], strides = [1, 1]} : vector<32x8xf32> to vector<12x8xf32>
    %58 = vector.extract_strided_slice %50 {offsets = [0, 0], sizes = [20, 8], strides = [1, 1]} : vector<32x8xf32> to vector<20x8xf32>
    %59 = tpu.concatenate %57, %58 in 0 : vector<12x8xf32>, vector<20x8xf32> -> vector<32x8xf32>
    %cst_24 = arith.constant 0.000000e+00 : f32
    %60 = vector.shape_cast %56 : vector<32x1xi1> to vector<32x1xi1>
    %61 = vector.broadcast %60 : vector<32x1xi1> to vector<32x8xi1>
    %62 = vector.broadcast %cst_24 : f32 to vector<32x8xf32>
    %63 = arith.select %61, %62, %59 : vector<32x8xi1>, vector<32x8xf32>
    %c0_25 = arith.constant 0 : index
    %c0_26 = arith.constant 0 : index
    %c0_27 = arith.constant 0 : index
    %64 = vector.load %arg3[%c0_25, %c0_26, %c0_27] : memref<4x8x8xf32, #tpu.memory_space<vmem>>, vector<1x8x8xf32>
    %65 = vector.shape_cast %64 : vector<1x8x8xf32> to vector<8x8xf32>
    %cst_28 = arith.constant dense<0.000000e+00> : vector<32x8xf32>
    %66 = tpu.matmul %63, %65, %cst_28 {dimension_numbers = #tpu.dot_dimension_numbers<[1], [0], [0], [1], [0, 0, 1, 1], [], []>} : vector<32x8xf32>, vector<8x8xf32>, vector<32x8xf32> -> vector<32x8xf32>
    %67 = arith.addf %54, %66 : vector<32x8xf32>
    %c8_i32_29 = arith.constant 8 : i32
    %68 = vector.broadcast %c8_i32_29 : i32 to vector<32x1xi32>
    %69 = arith.cmpi slt, %1, %68 : vector<32x1xi32>
    %70 = vector.extract_strided_slice %50 {offsets = [24, 0], sizes = [8, 8], strides = [1, 1]} : vector<32x8xf32> to vector<8x8xf32>
    %71 = vector.extract_strided_slice %50 {offsets = [0, 0], sizes = [24, 8], strides = [1, 1]} : vector<32x8xf32> to vector<24x8xf32>
    %72 = tpu.concatenate %70, %71 in 0 : vector<8x8xf32>, vector<24x8xf32> -> vector<32x8xf32>
    %cst_30 = arith.constant 0.000000e+00 : f32
    %73 = vector.shape_cast %69 : vector<32x1xi1> to vector<32x1xi1>
    %74 = vector.broadcast %73 : vector<32x1xi1> to vector<32x8xi1>
    %75 = vector.broadcast %cst_30 : f32 to vector<32x8xf32>
    %76 = arith.select %74, %75, %72 : vector<32x8xi1>, vector<32x8xf32>
    %c1_31 = arith.constant 1 : index
    %c0_32 = arith.constant 0 : index
    %c0_33 = arith.constant 0 : index
    %77 = vector.load %arg3[%c1_31, %c0_32, %c0_33] : memref<4x8x8xf32, #tpu.memory_space<vmem>>, vector<1x8x8xf32>
    %78 = vector.shape_cast %77 : vector<1x8x8xf32> to vector<8x8xf32>
    %cst_34 = arith.constant dense<0.000000e+00> : vector<32x8xf32>
    %79 = tpu.matmul %76, %78, %cst_34 {dimension_numbers = #tpu.dot_dimension_numbers<[1], [0], [0], [1], [0, 0, 1, 1], [], []>} : vector<32x8xf32>, vector<8x8xf32>, vector<32x8xf32> -> vector<32x8xf32>
    %80 = arith.addf %67, %79 : vector<32x8xf32>
    %c4_i32_35 = arith.constant 4 : i32
    %81 = vector.broadcast %c4_i32_35 : i32 to vector<32x1xi32>
    %82 = arith.cmpi slt, %1, %81 : vector<32x1xi32>
    %83 = vector.extract_strided_slice %50 {offsets = [28, 0], sizes = [4, 8], strides = [1, 1]} : vector<32x8xf32> to vector<4x8xf32>
    %84 = vector.extract_strided_slice %50 {offsets = [0, 0], sizes = [28, 8], strides = [1, 1]} : vector<32x8xf32> to vector<28x8xf32>
    %85 = tpu.concatenate %83, %84 in 0 : vector<4x8xf32>, vector<28x8xf32> -> vector<32x8xf32>
    %cst_36 = arith.constant 0.000000e+00 : f32
    %86 = vector.shape_cast %82 : vector<32x1xi1> to vector<32x1xi1>
    %87 = vector.broadcast %86 : vector<32x1xi1> to vector<32x8xi1>
    %88 = vector.broadcast %cst_36 : f32 to vector<32x8xf32>
    %89 = arith.select %87, %88, %85 : vector<32x8xi1>, vector<32x8xf32>
    %c2_37 = arith.constant 2 : index
    %c0_38 = arith.constant 0 : index
    %c0_39 = arith.constant 0 : index
    %90 = vector.load %arg3[%c2_37, %c0_38, %c0_39] : memref<4x8x8xf32, #tpu.memory_space<vmem>>, vector<1x8x8xf32>
    %91 = vector.shape_cast %90 : vector<1x8x8xf32> to vector<8x8xf32>
    %cst_40 = arith.constant dense<0.000000e+00> : vector<32x8xf32>
    %92 = tpu.matmul %89, %91, %cst_40 {dimension_numbers = #tpu.dot_dimension_numbers<[1], [0], [0], [1], [0, 0, 1, 1], [], []>} : vector<32x8xf32>, vector<8x8xf32>, vector<32x8xf32> -> vector<32x8xf32>
    %93 = arith.addf %80, %92 : vector<32x8xf32>
    %c3_41 = arith.constant 3 : index
    %c0_42 = arith.constant 0 : index
    %c0_43 = arith.constant 0 : index
    %94 = vector.load %arg3[%c3_41, %c0_42, %c0_43] : memref<4x8x8xf32, #tpu.memory_space<vmem>>, vector<1x8x8xf32>
    %95 = vector.shape_cast %94 : vector<1x8x8xf32> to vector<8x8xf32>
    %cst_44 = arith.constant dense<0.000000e+00> : vector<32x8xf32>
    %96 = tpu.matmul %50, %95, %cst_44 {dimension_numbers = #tpu.dot_dimension_numbers<[1], [0], [0], [1], [0, 0, 1, 1], [], []>} : vector<32x8xf32>, vector<8x8xf32>, vector<32x8xf32> -> vector<32x8xf32>
    %97 = arith.addf %93, %96 : vector<32x8xf32>
    %cst_45 = arith.constant 0.000000e+00 : f32
    %98 = vector.broadcast %cst_45 : f32 to vector<32x8xf32>
    %99 = arith.maximumf %97, %98 : vector<32x8xf32>
    %100 = arith.addf %99, %0 : vector<32x8xf32>
    %cst_46 = arith.constant 0.000000e+00 : f32
    %101 = vector.broadcast %cst_46 : f32 to vector<32x8xf32>
    %102 = arith.maximumf %100, %101 : vector<32x8xf32>
    %c0_47 = arith.constant 0 : index
    %c0_48 = arith.constant 0 : index
    %103 = vector.load %arg5[%c0_47, %c0_48] : memref<32x8xf32, #tpu.memory_space<vmem>>, vector<32x8xf32>
    tpu.vector_store %arg5[%c0_47, %c0_48], %102 {strides = array<i32>} : memref<32x8xf32, #tpu.memory_space<vmem>>, vector<32x8xf32>,
    return
  }
}

module attributes {stable_mosaic.version = 11 : i64} {
  func.func @_proj_add_ln_kernel(%arg0: memref<16x16xf32, #tpu.memory_space<vmem>>, %arg1: memref<16x32xf32, #tpu.memory_space<vmem>>, %arg2: memref<1x32xf32, #tpu.memory_space<vmem>>, %arg3: memref<16x32xf32, #tpu.memory_space<vmem>>, %arg4: memref<1x32xf32, #tpu.memory_space<vmem>>, %arg5: memref<1x32xf32, #tpu.memory_space<vmem>>, %arg6: memref<16x32xf32, #tpu.memory_space<vmem>>) attributes {dimension_semantics = [], scalar_prefetch = 0 : i64, scratch_operands = 0 : i64, tpu.core_type = #tpu.core_type<tc>} {
    %c0 = arith.constant 0 : index
    %c0_0 = arith.constant 0 : index
    %0 = vector.load %arg3[%c0, %c0_0] : memref<16x32xf32, #tpu.memory_space<vmem>>, vector<16x32xf32>
    %c0_1 = arith.constant 0 : index
    %c0_2 = arith.constant 0 : index
    %1 = vector.load %arg0[%c0_1, %c0_2] : memref<16x16xf32, #tpu.memory_space<vmem>>, vector<16x16xf32>
    %c0_3 = arith.constant 0 : index
    %c0_4 = arith.constant 0 : index
    %2 = vector.load %arg1[%c0_3, %c0_4] : memref<16x32xf32, #tpu.memory_space<vmem>>, vector<16x32xf32>
    %cst = arith.constant dense<0.000000e+00> : vector<16x32xf32>
    %3 = tpu.matmul %1, %2, %cst {dimension_numbers = #tpu.dot_dimension_numbers<[1], [0], [0], [1], [0, 0, 1, 1], [], []>} : vector<16x16xf32>, vector<16x32xf32>, vector<16x32xf32> -> vector<16x32xf32>
    %4 = arith.addf %0, %3 : vector<16x32xf32>
    %c0_5 = arith.constant 0 : index
    %c0_6 = arith.constant 0 : index
    %5 = vector.load %arg2[%c0_5, %c0_6] : memref<1x32xf32, #tpu.memory_space<vmem>>, vector<1x32xf32>
    %6 = vector.broadcast %5 : vector<1x32xf32> to vector<16x32xf32>
    %7 = arith.addf %4, %6 : vector<16x32xf32>
    %c0_7 = arith.constant 0 : index
    %c0_8 = arith.constant 0 : index
    %8 = vector.load %arg4[%c0_7, %c0_8] : memref<1x32xf32, #tpu.memory_space<vmem>>, vector<1x32xf32>
    %c0_9 = arith.constant 0 : index
    %c0_10 = arith.constant 0 : index
    %9 = vector.load %arg5[%c0_9, %c0_10] : memref<1x32xf32, #tpu.memory_space<vmem>>, vector<1x32xf32>
    %cst_11 = arith.constant dense<0.000000e+00> : vector<16xf32>
    %10 = vector.multi_reduction <add>, %7, %cst_11 [1] : vector<16x32xf32> to vector<16xf32>
    %11 = vector.shape_cast %10 : vector<16xf32> to vector<16x1xf32>
    %cst_12 = arith.constant 3.200000e+01 : f32
    %12 = vector.broadcast %cst_12 : f32 to vector<16x1xf32>
    %13 = arith.divf %11, %12 : vector<16x1xf32>
    %14 = vector.broadcast %13 : vector<16x1xf32> to vector<16x32xf32>
    %15 = arith.subf %7, %14 : vector<16x32xf32>
    %16 = arith.mulf %15, %15 : vector<16x32xf32>
    %cst_13 = arith.constant dense<0.000000e+00> : vector<16xf32>
    %17 = vector.multi_reduction <add>, %16, %cst_13 [1] : vector<16x32xf32> to vector<16xf32>
    %18 = vector.shape_cast %17 : vector<16xf32> to vector<16x1xf32>
    %cst_14 = arith.constant 3.200000e+01 : f32
    %19 = vector.broadcast %cst_14 : f32 to vector<16x1xf32>
    %20 = arith.divf %18, %19 : vector<16x1xf32>
    %21 = vector.broadcast %13 : vector<16x1xf32> to vector<16x32xf32>
    %22 = arith.subf %7, %21 : vector<16x32xf32>
    %cst_15 = arith.constant 9.99999974E-6 : f32
    %23 = vector.broadcast %cst_15 : f32 to vector<16x1xf32>
    %24 = arith.addf %20, %23 : vector<16x1xf32>
    %25 = math.rsqrt %24 : vector<16x1xf32>
    %26 = vector.broadcast %25 : vector<16x1xf32> to vector<16x32xf32>
    %27 = arith.mulf %22, %26 : vector<16x32xf32>
    %28 = vector.broadcast %8 : vector<1x32xf32> to vector<16x32xf32>
    %29 = arith.mulf %27, %28 : vector<16x32xf32>
    %30 = vector.broadcast %9 : vector<1x32xf32> to vector<16x32xf32>
    %31 = arith.addf %29, %30 : vector<16x32xf32>
    %c0_16 = arith.constant 0 : index
    %c0_17 = arith.constant 0 : index
    %32 = vector.load %arg6[%c0_16, %c0_17] : memref<16x32xf32, #tpu.memory_space<vmem>>, vector<16x32xf32>
    tpu.vector_store %arg6[%c0_16, %c0_17], %31 {strides = array<i32>} : memref<16x32xf32, #tpu.memory_space<vmem>>, vector<16x32xf32>,
    return
  }
}

module attributes {stable_mosaic.version = 11 : i64} {
  func.func @_ffn_add_ln_kernel(%arg0: memref<16x32xf32, #tpu.memory_space<vmem>>, %arg1: memref<32x16xf32, #tpu.memory_space<vmem>>, %arg2: memref<1x16xf32, #tpu.memory_space<vmem>>, %arg3: memref<16x32xf32, #tpu.memory_space<vmem>>, %arg4: memref<1x32xf32, #tpu.memory_space<vmem>>, %arg5: memref<1x32xf32, #tpu.memory_space<vmem>>, %arg6: memref<1x32xf32, #tpu.memory_space<vmem>>, %arg7: memref<16x32xf32, #tpu.memory_space<vmem>>) attributes {dimension_semantics = [], scalar_prefetch = 0 : i64, scratch_operands = 0 : i64, tpu.core_type = #tpu.core_type<tc>} {
    %c0 = arith.constant 0 : index
    %c0_0 = arith.constant 0 : index
    %0 = vector.load %arg0[%c0, %c0_0] : memref<16x32xf32, #tpu.memory_space<vmem>>, vector<16x32xf32>
    %c0_1 = arith.constant 0 : index
    %c0_2 = arith.constant 0 : index
    %1 = vector.load %arg1[%c0_1, %c0_2] : memref<32x16xf32, #tpu.memory_space<vmem>>, vector<32x16xf32>
    %cst = arith.constant dense<0.000000e+00> : vector<16x16xf32>
    %2 = tpu.matmul %0, %1, %cst {dimension_numbers = #tpu.dot_dimension_numbers<[1], [0], [0], [1], [0, 0, 1, 1], [], []>} : vector<16x32xf32>, vector<32x16xf32>, vector<16x16xf32> -> vector<16x16xf32>
    %c0_3 = arith.constant 0 : index
    %c0_4 = arith.constant 0 : index
    %3 = vector.load %arg2[%c0_3, %c0_4] : memref<1x16xf32, #tpu.memory_space<vmem>>, vector<1x16xf32>
    %4 = vector.broadcast %3 : vector<1x16xf32> to vector<16x16xf32>
    %5 = arith.addf %2, %4 : vector<16x16xf32>
    %cst_5 = arith.constant 0.000000e+00 : f32
    %6 = vector.broadcast %cst_5 : f32 to vector<16x16xf32>
    %7 = arith.cmpf oge, %5, %6 : vector<16x16xf32>
    %cst_6 = arith.constant 1.000000e+00 : f32
    %8 = vector.broadcast %cst_6 : f32 to vector<16x16xf32>
    %9 = arith.mulf %8, %5 : vector<16x16xf32>
    %10 = arith.select %7, %5, %9 : vector<16x16xi1>, vector<16x16xf32>
    %c0_7 = arith.constant 0 : index
    %c0_8 = arith.constant 0 : index
    %11 = vector.load %arg3[%c0_7, %c0_8] : memref<16x32xf32, #tpu.memory_space<vmem>>, vector<16x32xf32>
    %cst_9 = arith.constant dense<0.000000e+00> : vector<16x32xf32>
    %12 = tpu.matmul %10, %11, %cst_9 {dimension_numbers = #tpu.dot_dimension_numbers<[1], [0], [0], [1], [0, 0, 1, 1], [], []>} : vector<16x16xf32>, vector<16x32xf32>, vector<16x32xf32> -> vector<16x32xf32>
    %13 = arith.addf %0, %12 : vector<16x32xf32>
    %c0_10 = arith.constant 0 : index
    %c0_11 = arith.constant 0 : index
    %14 = vector.load %arg4[%c0_10, %c0_11] : memref<1x32xf32, #tpu.memory_space<vmem>>, vector<1x32xf32>
    %15 = vector.broadcast %14 : vector<1x32xf32> to vector<16x32xf32>
    %16 = arith.addf %13, %15 : vector<16x32xf32>
    %c0_12 = arith.constant 0 : index
    %c0_13 = arith.constant 0 : index
    %17 = vector.load %arg5[%c0_12, %c0_13] : memref<1x32xf32, #tpu.memory_space<vmem>>, vector<1x32xf32>
    %c0_14 = arith.constant 0 : index
    %c0_15 = arith.constant 0 : index
    %18 = vector.load %arg6[%c0_14, %c0_15] : memref<1x32xf32, #tpu.memory_space<vmem>>, vector<1x32xf32>
    %cst_16 = arith.constant dense<0.000000e+00> : vector<16xf32>
    %19 = vector.multi_reduction <add>, %16, %cst_16 [1] : vector<16x32xf32> to vector<16xf32>
    %20 = vector.shape_cast %19 : vector<16xf32> to vector<16x1xf32>
    %cst_17 = arith.constant 3.200000e+01 : f32
    %21 = vector.broadcast %cst_17 : f32 to vector<16x1xf32>
    %22 = arith.divf %20, %21 : vector<16x1xf32>
    %23 = vector.broadcast %22 : vector<16x1xf32> to vector<16x32xf32>
    %24 = arith.subf %16, %23 : vector<16x32xf32>
    %25 = arith.mulf %24, %24 : vector<16x32xf32>
    %cst_18 = arith.constant dense<0.000000e+00> : vector<16xf32>
    %26 = vector.multi_reduction <add>, %25, %cst_18 [1] : vector<16x32xf32> to vector<16xf32>
    %27 = vector.shape_cast %26 : vector<16xf32> to vector<16x1xf32>
    %cst_19 = arith.constant 3.200000e+01 : f32
    %28 = vector.broadcast %cst_19 : f32 to vector<16x1xf32>
    %29 = arith.divf %27, %28 : vector<16x1xf32>
    %30 = vector.broadcast %22 : vector<16x1xf32> to vector<16x32xf32>
    %31 = arith.subf %16, %30 : vector<16x32xf32>
    %cst_20 = arith.constant 9.99999974E-6 : f32
    %32 = vector.broadcast %cst_20 : f32 to vector<16x1xf32>
    %33 = arith.addf %29, %32 : vector<16x1xf32>
    %34 = math.rsqrt %33 : vector<16x1xf32>
    %35 = vector.broadcast %34 : vector<16x1xf32> to vector<16x32xf32>
    %36 = arith.mulf %31, %35 : vector<16x32xf32>
    %37 = vector.broadcast %17 : vector<1x32xf32> to vector<16x32xf32>
    %38 = arith.mulf %36, %37 : vector<16x32xf32>
    %39 = vector.broadcast %18 : vector<1x32xf32> to vector<16x32xf32>
    %40 = arith.addf %38, %39 : vector<16x32xf32>
    %c0_21 = arith.constant 0 : index
    %c0_22 = arith.constant 0 : index
    %41 = vector.load %arg7[%c0_21, %c0_22] : memref<16x32xf32, #tpu.memory_space<vmem>>, vector<16x32xf32>
    tpu.vector_store %arg7[%c0_21, %c0_22], %40 {strides = array<i32>} : memref<16x32xf32, #tpu.memory_space<vmem>>, vector<16x32xf32>,
    return
  }
}

module attributes {stable_mosaic.version = 11 : i64} {
  func.func @_ln_linear_kernel(%arg0: memref<16x32xf32, #tpu.memory_space<vmem>>, %arg1: memref<1x32xf32, #tpu.memory_space<vmem>>, %arg2: memref<1x32xf32, #tpu.memory_space<vmem>>, %arg3: memref<32x4xf32, #tpu.memory_space<vmem>>, %arg4: memref<1x4xf32, #tpu.memory_space<vmem>>, %arg5: memref<16x4xf32, #tpu.memory_space<vmem>>) attributes {dimension_semantics = [], scalar_prefetch = 0 : i64, scratch_operands = 0 : i64, tpu.core_type = #tpu.core_type<tc>} {
    %c0 = arith.constant 0 : index
    %c0_0 = arith.constant 0 : index
    %0 = vector.load %arg0[%c0, %c0_0] : memref<16x32xf32, #tpu.memory_space<vmem>>, vector<16x32xf32>
    %c0_1 = arith.constant 0 : index
    %c0_2 = arith.constant 0 : index
    %1 = vector.load %arg1[%c0_1, %c0_2] : memref<1x32xf32, #tpu.memory_space<vmem>>, vector<1x32xf32>
    %c0_3 = arith.constant 0 : index
    %c0_4 = arith.constant 0 : index
    %2 = vector.load %arg2[%c0_3, %c0_4] : memref<1x32xf32, #tpu.memory_space<vmem>>, vector<1x32xf32>
    %cst = arith.constant dense<0.000000e+00> : vector<16xf32>
    %3 = vector.multi_reduction <add>, %0, %cst [1] : vector<16x32xf32> to vector<16xf32>
    %4 = vector.shape_cast %3 : vector<16xf32> to vector<16x1xf32>
    %cst_5 = arith.constant 3.200000e+01 : f32
    %5 = vector.broadcast %cst_5 : f32 to vector<16x1xf32>
    %6 = arith.divf %4, %5 : vector<16x1xf32>
    %7 = vector.broadcast %6 : vector<16x1xf32> to vector<16x32xf32>
    %8 = arith.subf %0, %7 : vector<16x32xf32>
    %9 = arith.mulf %8, %8 : vector<16x32xf32>
    %cst_6 = arith.constant dense<0.000000e+00> : vector<16xf32>
    %10 = vector.multi_reduction <add>, %9, %cst_6 [1] : vector<16x32xf32> to vector<16xf32>
    %11 = vector.shape_cast %10 : vector<16xf32> to vector<16x1xf32>
    %cst_7 = arith.constant 3.200000e+01 : f32
    %12 = vector.broadcast %cst_7 : f32 to vector<16x1xf32>
    %13 = arith.divf %11, %12 : vector<16x1xf32>
    %14 = vector.broadcast %6 : vector<16x1xf32> to vector<16x32xf32>
    %15 = arith.subf %0, %14 : vector<16x32xf32>
    %cst_8 = arith.constant 9.99999974E-6 : f32
    %16 = vector.broadcast %cst_8 : f32 to vector<16x1xf32>
    %17 = arith.addf %13, %16 : vector<16x1xf32>
    %18 = math.rsqrt %17 : vector<16x1xf32>
    %19 = vector.broadcast %18 : vector<16x1xf32> to vector<16x32xf32>
    %20 = arith.mulf %15, %19 : vector<16x32xf32>
    %21 = vector.broadcast %1 : vector<1x32xf32> to vector<16x32xf32>
    %22 = arith.mulf %20, %21 : vector<16x32xf32>
    %23 = vector.broadcast %2 : vector<1x32xf32> to vector<16x32xf32>
    %24 = arith.addf %22, %23 : vector<16x32xf32>
    %c0_9 = arith.constant 0 : index
    %c0_10 = arith.constant 0 : index
    %25 = vector.load %arg3[%c0_9, %c0_10] : memref<32x4xf32, #tpu.memory_space<vmem>>, vector<32x4xf32>
    %cst_11 = arith.constant dense<0.000000e+00> : vector<16x4xf32>
    %26 = tpu.matmul %24, %25, %cst_11 {dimension_numbers = #tpu.dot_dimension_numbers<[1], [0], [0], [1], [0, 0, 1, 1], [], []>} : vector<16x32xf32>, vector<32x4xf32>, vector<16x4xf32> -> vector<16x4xf32>
    %c0_12 = arith.constant 0 : index
    %c0_13 = arith.constant 0 : index
    %27 = vector.load %arg4[%c0_12, %c0_13] : memref<1x4xf32, #tpu.memory_space<vmem>>, vector<1x4xf32>
    %28 = vector.broadcast %27 : vector<1x4xf32> to vector<16x4xf32>
    %29 = arith.addf %26, %28 : vector<16x4xf32>
    %c0_14 = arith.constant 0 : index
    %c0_15 = arith.constant 0 : index
    %30 = vector.load %arg5[%c0_14, %c0_15] : memref<16x4xf32, #tpu.memory_space<vmem>>, vector<16x4xf32>
    tpu.vector_store %arg5[%c0_14, %c0_15], %29 {strides = array<i32>} : memref<16x4xf32, #tpu.memory_space<vmem>>, vector<16x4xf32>,
    return
  }
}

</mosaic_0001>

<llo_original>
// kernel: trans_encoder_forward.6
$region0: #{trans_encoder_forward.6}
  #allocation0 [shape = 'u32[]', space=smem, size = 0x4, offset = 0x4, fixed_abs, tag = 'smem constant byte address 0x4 - core index']
  #allocation1 [shape = 'u32[144,128]{1,0:T(1,128)}', space=vmem, size = 0x12000, scoped, tag = 'internal scratch']
  %s0 = inlined_call_operand.vmem [shape: f32[16,4], index: 0, kind: input, shape index: {}]
  %s1 = inlined_call_operand.vmem [shape: f32[3,4,32], index: 1, kind: input, shape index: {}]
  %s2 = inlined_call_operand.vmem [shape: f32[1,32], index: 2, kind: input, shape index: {}]
  %s3 = inlined_call_operand.vmem [shape: f32[16,32], index: 3, kind: input, shape index: {}]
  %s4 = inlined_call_operand.vmem [shape: f32[16,32], index: 4, kind: output, shape index: {}]
  %s5 = sld [smem:[#allocation0]]
  $region26: #{trans_encoder_forward.6} parent=0
    _
  %s7 = ssub.s32 1, %s5
  %s8 = scalar_select 0, %s7, %s5
  // Predicated region
  $region2: #{trans_encoder_forward.6} parent=0 // pred_check
    _
  $region3: #{trans_encoder_forward.6} parent=0 // pred_check_branch
    %10 = sbr.rel (0) target = $region5
  $region4: #{trans_encoder_forward.6} parent=0 // pred_region
    _
  $region5: #{trans_encoder_forward.6} parent=0 // pred_fallthru
    _
  // Predicated region
  $region6: #{trans_encoder_forward.6} parent=0 // pred_check
    _
  $region7: #{trans_encoder_forward.6} parent=0 // pred_check_branch
    %12 = sbr.rel (0) target = $region9
  $region8: #{trans_encoder_forward.6} parent=0 // pred_region
    _
  $region9: #{trans_encoder_forward.6} parent=0 // pred_fallthru
    _
  // Predicated region
  $region10: #{trans_encoder_forward.6} parent=0 // pred_check
    _
  $region11: #{trans_encoder_forward.6} parent=0 // pred_check_branch
    %14 = sbr.rel (0) target = $region13
  $region12: #{trans_encoder_forward.6} parent=0 // pred_region
    _
  $region13: #{trans_encoder_forward.6} parent=0 // pred_fallthru
    _
  // Predicated region
  $region14: #{trans_encoder_forward.6} parent=0 // pred_check
    _
  $region15: #{trans_encoder_forward.6} parent=0 // pred_check_branch
    %16 = sbr.rel (0) target = $region17
  $region16: #{trans_encoder_forward.6} parent=0 // pred_region
    _
  $region17: #{trans_encoder_forward.6} parent=0 // pred_fallthru
    _
  %v17 = vld [vmem:[%s0] sm:$0xff]
  %v18 = vld [vmem:[%s0 + $0x8] sm:$0xff]
  %v20 = vrot.slane %v18, 6
  %vm23 = vcmask 1041408
  %v24 = vrot.slane %v17, 6
  %v25 = vsel %vm23, %v24, %v20
  %v27 = vsel %vm23, %v20, %v24
  %vm28 = vcmask 1045504
  %v29 = vrot.slane %v17, 2
  %v30 = vrot.slane %v18, 2
  %v31 = vsel %vm28, %v29, %v30
  %v34 = vsel %vm28, %v30, %v29
  %v35 = vld [vmem:[%s2] sm:$0x1]
  %v36 = vld [vmem:[%s3] sm:$0xff]
  %v37 = vld [vmem:[%s3 + $0x8] sm:$0xff]
  %v39 = vlaneseq
  %v40 = vshrl.u32 %v39, 7
  %v41 = vsub.s32 0, %v40
  %v42 = vrot.slane %v35, %v41
  %v44 = vadd.f32 %v42, %v36
  %v45 = vadd.f32 %v42, %v37
  %v46 = vld [vmem:[%s1] sm:$0xf]
  %vm47 = vcmask 31744
  %v49 = vsel %vm47, %v27, 0
  %v51 = vsel %vm47, %v25, 0
  %vm53 = vcmask 1043456
  %v55 = vsel %vm53, %v46, 0
  %57 = vmatprep.subr.mxu0 0.0
  %58 = vmatpush1.msra.mxu0 %v55
  %59 = vmatprep.subr.mxu0 0.0
  %60 = vmatpush1.msra.mxu0 0.0
  %61 = vmatprep.subr.mxu0 0.0
  %62 = vmatpush1.msra.mxu0 0.0
  %63 = vmatprep.subr.mxu0 0.0
  %64 = vmatpush1.msra.mxu0 0.0
  %65 = vmatprep.subr.mxu0 0.0
  %66 = vmatpush1.msra.mxu0 0.0
  %67 = vmatprep.subr.mxu0 0.0
  %68 = vmatpush1.msra.mxu0 0.0
  %69 = vmatprep.subr.mxu0 0.0
  %70 = vmatpush1.msra.mxu0 0.0
  %71 = vmatprep.subr.mxu0 0.0
  %72 = vmatpush1.msra.mxu0 0.0
  %73 = vmatprep.subr.mxu0 0.0
  %74 = vmatpush1.msra.mxu0 0.0
  %75 = vmatprep.subr.mxu0 0.0
  %76 = vmatpush1.msra.mxu0 0.0
  %77 = vmatprep.subr.mxu0 0.0
  %78 = vmatpush1.msra.mxu0 0.0
  %79 = vmatprep.subr.mxu0 0.0
  %80 = vmatpush1.msra.mxu0 0.0
  %81 = vmatprep.subr.mxu0 0.0
  %82 = vmatpush1.msra.mxu0 0.0
  %83 = vmatprep.subr.mxu0 0.0
  %84 = vmatpush1.msra.mxu0 0.0
  %85 = vmatprep.subr.mxu0 0.0
  %86 = vmatpush1.msra.mxu0 0.0
  %87 = vmatprep.subr.mxu0 0.0
  %88 = vmatpush1.msra.mxu0 0.0
  %89 = vmatprep.subr.mxu0 0.0
  %90 = vmatpush1.msra.mxu0 0.0
  %91 = vmatprep.subr.mxu0 0.0
  %92 = vmatpush1.msra.mxu0 0.0
  %93 = vmatprep.subr.mxu0 0.0
  %94 = vmatpush1.msra.mxu0 0.0
  %95 = vmatprep.subr.mxu0 0.0
  %96 = vmatpush1.msra.mxu0 0.0
  %97 = vmatprep.subr.mxu0 0.0
  %98 = vmatpush1.msra.mxu0 0.0
  %99 = vmatprep.subr.mxu0 0.0
  %100 = vmatpush1.msra.mxu0 0.0
  %101 = vmatprep.subr.mxu0 0.0
  %102 = vmatpush1.msra.mxu0 0.0
  %103 = vmatprep.subr.mxu0 0.0
  %104 = vmatpush1.msra.mxu0 0.0
  %105 = vmatprep.subr.mxu0 0.0
  %106 = vmatpush1.msra.mxu0 0.0
  %107 = vmatprep.subr.mxu0 0.0
  %108 = vmatpush1.msra.mxu0 0.0
  %109 = vmatprep.subr.mxu0 0.0
  %110 = vmatpush1.msra.mxu0 0.0
  %111 = vmatprep.subr.mxu0 0.0
  %112 = vmatpush1.msra.mxu0 0.0
  %113 = vmatprep.subr.mxu0 0.0
  %114 = vmatpush1.msra.mxu0 0.0
  %115 = vmatprep.subr.mxu0 0.0
  %116 = vmatpush1.msra.mxu0 0.0
  %117 = vmatprep.subr.mxu0 0.0
  %118 = vmatpush1.msra.mxu0 0.0
  %119 = vmatprep.subr.mxu0 0.0
  %120 = vmatpush1.msra.mxu0 0.0
  %121 = vmatprep.mubr.f32.mxu0 0.0
  %122 = vmatmul.mubr.f32.gmra.mrb[0].mxu0 %v49
  %v123 = vpop.f32.mrb[0].mxu0
  %v124 = vadd.f32 0.0, %v123
  %v125 = vpop.f32.mrb[0].mxu0
  %126 = vmatprep.mubr.f32.mxu0 0.0
  %127 = vmatmul.mubr.f32.gmra.mrb[0].mxu0 %v51
  %v128 = vpop.f32.mrb[0].mxu0
  %v129 = vadd.f32 0.0, %v128
  %v130 = vpop.f32.mrb[0].mxu0
  %131 = vdwg.mxu0
  %v132 = vadd.f32 %v44, %v124
  %v133 = vadd.f32 %v45, %v129
  %s134 = scalar_lea.vmem %s1, 4
  %v135 = vld [vmem:[%s134] sm:$0xf]
  %v136 = vsel %vm47, %v17, 0
  %v138 = vsel %vm47, %v18, 0
  %v141 = vsel %vm53, %v135, 0
  %143 = vmatprep.subr.mxu0 0.0
  %144 = vmatpush1.msra.mxu0 %v141
  %145 = vmatprep.subr.mxu0 0.0
  %146 = vmatpush1.msra.mxu0 0.0
  %147 = vmatprep.subr.mxu0 0.0
  %148 = vmatpush1.msra.mxu0 0.0
  %149 = vmatprep.subr.mxu0 0.0
  %150 = vmatpush1.msra.mxu0 0.0
  %151 = vmatprep.subr.mxu0 0.0
  %152 = vmatpush1.msra.mxu0 0.0
  %153 = vmatprep.subr.mxu0 0.0
  %154 = vmatpush1.msra.mxu0 0.0
  %155 = vmatprep.subr.mxu0 0.0
  %156 = vmatpush1.msra.mxu0 0.0
  %157 = vmatprep.subr.mxu0 0.0
  %158 = vmatpush1.msra.mxu0 0.0
  %159 = vmatprep.subr.mxu0 0.0
  %160 = vmatpush1.msra.mxu0 0.0
  %161 = vmatprep.subr.mxu0 0.0
  %162 = vmatpush1.msra.mxu0 0.0
  %163 = vmatprep.subr.mxu0 0.0
  %164 = vmatpush1.msra.mxu0 0.0
  %165 = vmatprep.subr.mxu0 0.0
  %166 = vmatpush1.msra.mxu0 0.0
  %167 = vmatprep.subr.mxu0 0.0
  %168 = vmatpush1.msra.mxu0 0.0
  %169 = vmatprep.subr.mxu0 0.0
  %170 = vmatpush1.msra.mxu0 0.0
  %171 = vmatprep.subr.mxu0 0.0
  %172 = vmatpush1.msra.mxu0 0.0
  %173 = vmatprep.subr.mxu0 0.0
  %174 = vmatpush1.msra.mxu0 0.0
  %175 = vmatprep.subr.mxu0 0.0
  %176 = vmatpush1.msra.mxu0 0.0
  %177 = vmatprep.subr.mxu0 0.0
  %178 = vmatpush1.msra.mxu0 0.0
  %179 = vmatprep.subr.mxu0 0.0
  %180 = vmatpush1.msra.mxu0 0.0
  %181 = vmatprep.subr.mxu0 0.0
  %182 = vmatpush1.msra.mxu0 0.0
  %183 = vmatprep.subr.mxu0 0.0
  %184 = vmatpush1.msra.mxu0 0.0
  %185 = vmatprep.subr.mxu0 0.0
  %186 = vmatpush1.msra.mxu0 0.0
  %187 = vmatprep.subr.mxu0 0.0
  %188 = vmatpush1.msra.mxu0 0.0
  %189 = vmatprep.subr.mxu0 0.0
  %190 = vmatpush1.msra.mxu0 0.0
  %191 = vmatprep.subr.mxu0 0.0
  %192 = vmatpush1.msra.mxu0 0.0
  %193 = vmatprep.subr.mxu0 0.0
  %194 = vmatpush1.msra.mxu0 0.0
  %195 = vmatprep.subr.mxu0 0.0
  %196 = vmatpush1.msra.mxu0 0.0
  %197 = vmatprep.subr.mxu0 0.0
  %198 = vmatpush1.msra.mxu0 0.0
  %199 = vmatprep.subr.mxu0 0.0
  %200 = vmatpush1.msra.mxu0 0.0
  %201 = vmatprep.subr.mxu0 0.0
  %202 = vmatpush1.msra.mxu0 0.0
  %203 = vmatprep.subr.mxu0 0.0
  %204 = vmatpush1.msra.mxu0 0.0
  %205 = vmatprep.subr.mxu0 0.0
  %206 = vmatpush1.msra.mxu0 0.0
  %207 = vmatprep.mubr.f32.mxu0 0.0
  %208 = vmatmul.mubr.f32.gmra.mrb[0].mxu0 %v136
  %v209 = vpop.f32.mrb[0].mxu0
  %v210 = vadd.f32 0.0, %v209
  %v211 = vpop.f32.mrb[0].mxu0
  %212 = vmatprep.mubr.f32.mxu0 0.0
  %213 = vmatmul.mubr.f32.gmra.mrb[0].mxu0 %v138
  %v214 = vpop.f32.mrb[0].mxu0
  %v215 = vadd.f32 0.0, %v214
  %v216 = vpop.f32.mrb[0].mxu0
  %217 = vdwg.mxu0
  %v218 = vadd.f32 %v132, %v210
  %v219 = vadd.f32 %v133, %v215
  %s220 = scalar_lea.vmem %s1, 8
  %v221 = vld [vmem:[%s220] sm:$0xf]
  %v222 = vsel %vm47, %v31, 0
  %v225 = vsel %vm47, %v34, 0
  %v228 = vsel %vm53, %v221, 0
  %230 = vmatprep.subr.mxu0 0.0
  %231 = vmatpush1.msra.mxu0 %v228
  %232 = vmatprep.subr.mxu0 0.0
  %233 = vmatpush1.msra.mxu0 0.0
  %234 = vmatprep.subr.mxu0 0.0
  %235 = vmatpush1.msra.mxu0 0.0
  %236 = vmatprep.subr.mxu0 0.0
  %237 = vmatpush1.msra.mxu0 0.0
  %238 = vmatprep.subr.mxu0 0.0
  %239 = vmatpush1.msra.mxu0 0.0
  %240 = vmatprep.subr.mxu0 0.0
  %241 = vmatpush1.msra.mxu0 0.0
  %242 = vmatprep.subr.mxu0 0.0
  %243 = vmatpush1.msra.mxu0 0.0
  %244 = vmatprep.subr.mxu0 0.0
  %245 = vmatpush1.msra.mxu0 0.0
  %246 = vmatprep.subr.mxu0 0.0
  %247 = vmatpush1.msra.mxu0 0.0
  %248 = vmatprep.subr.mxu0 0.0
  %249 = vmatpush1.msra.mxu0 0.0
  %250 = vmatprep.subr.mxu0 0.0
  %251 = vmatpush1.msra.mxu0 0.0
  %252 = vmatprep.subr.mxu0 0.0
  %253 = vmatpush1.msra.mxu0 0.0
  %254 = vmatprep.subr.mxu0 0.0
  %255 = vmatpush1.msra.mxu0 0.0
  %256 = vmatprep.subr.mxu0 0.0
  %257 = vmatpush1.msra.mxu0 0.0
  %258 = vmatprep.subr.mxu0 0.0
  %259 = vmatpush1.msra.mxu0 0.0
  %260 = vmatprep.subr.mxu0 0.0
  %261 = vmatpush1.msra.mxu0 0.0
  %262 = vmatprep.subr.mxu0 0.0
  %263 = vmatpush1.msra.mxu0 0.0
  %264 = vmatprep.subr.mxu0 0.0
  %265 = vmatpush1.msra.mxu0 0.0
  %266 = vmatprep.subr.mxu0 0.0
  %267 = vmatpush1.msra.mxu0 0.0
  %268 = vmatprep.subr.mxu0 0.0
  %269 = vmatpush1.msra.mxu0 0.0
  %270 = vmatprep.subr.mxu0 0.0
  %271 = vmatpush1.msra.mxu0 0.0
  %272 = vmatprep.subr.mxu0 0.0
  %273 = vmatpush1.msra.mxu0 0.0
  %274 = vmatprep.subr.mxu0 0.0
  %275 = vmatpush1.msra.mxu0 0.0
  %276 = vmatprep.subr.mxu0 0.0
  %277 = vmatpush1.msra.mxu0 0.0
  %278 = vmatprep.subr.mxu0 0.0
  %279 = vmatpush1.msra.mxu0 0.0
  %280 = vmatprep.subr.mxu0 0.0
  %281 = vmatpush1.msra.mxu0 0.0
  %282 = vmatprep.subr.mxu0 0.0
  %283 = vmatpush1.msra.mxu0 0.0
  %284 = vmatprep.subr.mxu0 0.0
  %285 = vmatpush1.msra.mxu0 0.0
  %286 = vmatprep.subr.mxu0 0.0
  %287 = vmatpush1.msra.mxu0 0.0
  %288 = vmatprep.subr.mxu0 0.0
  %289 = vmatpush1.msra.mxu0 0.0
  %290 = vmatprep.subr.mxu0 0.0
  %291 = vmatpush1.msra.mxu0 0.0
  %292 = vmatprep.subr.mxu0 0.0
  %293 = vmatpush1.msra.mxu0 0.0
  %294 = vmatprep.mubr.f32.mxu0 0.0
  %295 = vmatmul.mubr.f32.gmra.mrb[0].mxu0 %v222
  %v296 = vpop.f32.mrb[0].mxu0
  %v297 = vadd.f32 0.0, %v296
  %v298 = vpop.f32.mrb[0].mxu0
  %299 = vmatprep.mubr.f32.mxu0 0.0
  %300 = vmatmul.mubr.f32.gmra.mrb[0].mxu0 %v225
  %v301 = vpop.f32.mrb[0].mxu0
  %v302 = vadd.f32 0.0, %v301
  %v303 = vpop.f32.mrb[0].mxu0
  %304 = vdwg.mxu0
  %v305 = vadd.f32 %v218, %v297
  %v306 = vadd.f32 %v219, %v302
  %vm307 = vcmask 261120
  %308 = vst.msk [vmem:[%s4] sm:$0xff] %vm307, %v305
  %309 = vst.msk [vmem:[%s4 + $0x8] sm:$0xff] %vm307, %v306
  // Predicated region
  $region18: #{trans_encoder_forward.6} parent=0 // pred_check
    _
  $region19: #{trans_encoder_forward.6} parent=0 // pred_check_branch
    %311 = sbr.rel (0) target = $region21
  $region20: #{trans_encoder_forward.6} parent=0 // pred_region
    _
  $region21: #{trans_encoder_forward.6} parent=0 // pred_fallthru
    _
  // Predicated region
  $region22: #{trans_encoder_forward.6} parent=0 // pred_check
    _
  $region23: #{trans_encoder_forward.6} parent=0 // pred_check_branch
    %313 = sbr.rel (0) target = $region25
  $region24: #{trans_encoder_forward.6} parent=0 // pred_region
    _
  $region25: #{trans_encoder_forward.6} parent=0 // pred_fallthru
    _

// kernel: trans_encoder_forward.7
$region0: #{trans_encoder_forward.7}
  #allocation0 [shape = 'u32[]', space=smem, size = 0x4, offset = 0x4, fixed_abs, tag = 'smem constant byte address 0x4 - core index']
  #allocation1 [shape = 'u32[144,128]{1,0:T(1,128)}', space=vmem, size = 0x12000, scoped, tag = 'internal scratch']
  %s0 = inlined_call_operand.vmem [shape: f32[16,32], index: 0, kind: input, shape index: {}]
  %s1 = inlined_call_operand.vmem [shape: f32[32,24], index: 1, kind: input, shape index: {}]
  %s2 = inlined_call_operand.vmem [shape: f32[1,24], index: 2, kind: input, shape index: {}]
  %s3 = inlined_call_operand.vmem [shape: f32[16,24], index: 3, kind: output, shape index: {}]
  %s4 = sld [smem:[#allocation0]]
  $region22: #{trans_encoder_forward.7} parent=0
    _
  %s6 = ssub.s32 1, %s4
  %s7 = scalar_select 0, %s6, %s4
  // Predicated region
  $region2: #{trans_encoder_forward.7} parent=0 // pred_check
    _
  $region3: #{trans_encoder_forward.7} parent=0 // pred_check_branch
    %9 = sbr.rel (0) target = $region5
  $region4: #{trans_encoder_forward.7} parent=0 // pred_region
    _
  $region5: #{trans_encoder_forward.7} parent=0 // pred_fallthru
    _
  // Predicated region
  $region6: #{trans_encoder_forward.7} parent=0 // pred_check
    _
  $region7: #{trans_encoder_forward.7} parent=0 // pred_check_branch
    %11 = sbr.rel (0) target = $region9
  $region8: #{trans_encoder_forward.7} parent=0 // pred_region
    _
  $region9: #{trans_encoder_forward.7} parent=0 // pred_fallthru
    _
  // Predicated region
  $region10: #{trans_encoder_forward.7} parent=0 // pred_check
    _
  $region11: #{trans_encoder_forward.7} parent=0 // pred_check_branch
    %13 = sbr.rel (0) target = $region13
  $region12: #{trans_encoder_forward.7} parent=0 // pred_region
    _
  $region13: #{trans_encoder_forward.7} parent=0 // pred_fallthru
    _
  %v14 = vld [vmem:[%s0] sm:$0xff]
  %v15 = vld [vmem:[%s0 + $0x8] sm:$0xff]
  %v16 = vld [vmem:[%s1] sm:$0xff]
  %v17 = vld [vmem:[%s1 + $0x8] sm:$0xff]
  %v18 = vld [vmem:[%s1 + $0x10] sm:$0xff]
  %v19 = vld [vmem:[%s1 + $0x18] sm:$0xff]
  %v20 = vld [vmem:[%s2] sm:$0x1]
  %v22 = vlaneseq
  %v23 = vshrl.u32 %v22, 7
  %v24 = vsub.s32 0, %v23
  %v25 = vrot.slane %v20, %v24
  %vm27 = vcmask 261120
  %v29 = vsel %vm27, %v14, 0
  %v32 = vsel %vm27, %v15, 0
  %34 = vmatprep.subr.mxu0 0.0
  %35 = vmatpush1.msra.mxu0 %v16
  %36 = vmatprep.subr.mxu0 0.0
  %37 = vmatpush1.msra.mxu0 %v17
  %38 = vmatprep.subr.mxu0 0.0
  %39 = vmatpush1.msra.mxu0 %v18
  %40 = vmatprep.subr.mxu0 0.0
  %41 = vmatpush1.msra.mxu0 %v19
  %42 = vmatprep.subr.mxu0 0.0
  %43 = vmatpush1.msra.mxu0 0.0
  %44 = vmatprep.subr.mxu0 0.0
  %45 = vmatpush1.msra.mxu0 0.0
  %46 = vmatprep.subr.mxu0 0.0
  %47 = vmatpush1.msra.mxu0 0.0
  %48 = vmatprep.subr.mxu0 0.0
  %49 = vmatpush1.msra.mxu0 0.0
  %50 = vmatprep.subr.mxu0 0.0
  %51 = vmatpush1.msra.mxu0 0.0
  %52 = vmatprep.subr.mxu0 0.0
  %53 = vmatpush1.msra.mxu0 0.0
  %54 = vmatprep.subr.mxu0 0.0
  %55 = vmatpush1.msra.mxu0 0.0
  %56 = vmatprep.subr.mxu0 0.0
  %57 = vmatpush1.msra.mxu0 0.0
  %58 = vmatprep.subr.mxu0 0.0
  %59 = vmatpush1.msra.mxu0 0.0
  %60 = vmatprep.subr.mxu0 0.0
  %61 = vmatpush1.msra.mxu0 0.0
  %62 = vmatprep.subr.mxu0 0.0
  %63 = vmatpush1.msra.mxu0 0.0
  %64 = vmatprep.subr.mxu0 0.0
  %65 = vmatpush1.msra.mxu0 0.0
  %66 = vmatprep.subr.mxu0 0.0
  %67 = vmatpush1.msra.mxu0 0.0
  %68 = vmatprep.subr.mxu0 0.0
  %69 = vmatpush1.msra.mxu0 0.0
  %70 = vmatprep.subr.mxu0 0.0
  %71 = vmatpush1.msra.mxu0 0.0
  %72 = vmatprep.subr.mxu0 0.0
  %73 = vmatpush1.msra.mxu0 0.0
  %74 = vmatprep.subr.mxu0 0.0
  %75 = vmatpush1.msra.mxu0 0.0
  %76 = vmatprep.subr.mxu0 0.0
  %77 = vmatpush1.msra.mxu0 0.0
  %78 = vmatprep.subr.mxu0 0.0
  %79 = vmatpush1.msra.mxu0 0.0
  %80 = vmatprep.subr.mxu0 0.0
  %81 = vmatpush1.msra.mxu0 0.0
  %82 = vmatprep.subr.mxu0 0.0
  %83 = vmatpush1.msra.mxu0 0.0
  %84 = vmatprep.subr.mxu0 0.0
  %85 = vmatpush1.msra.mxu0 0.0
  %86 = vmatprep.subr.mxu0 0.0
  %87 = vmatpush1.msra.mxu0 0.0
  %88 = vmatprep.subr.mxu0 0.0
  %89 = vmatpush1.msra.mxu0 0.0
  %90 = vmatprep.subr.mxu0 0.0
  %91 = vmatpush1.msra.mxu0 0.0
  %92 = vmatprep.subr.mxu0 0.0
  %93 = vmatpush1.msra.mxu0 0.0
  %94 = vmatprep.subr.mxu0 0.0
  %95 = vmatpush1.msra.mxu0 0.0
  %96 = vmatprep.subr.mxu0 0.0
  %97 = vmatpush1.msra.mxu0 0.0
  %98 = vmatprep.mubr.f32.mxu0 0.0
  %99 = vmatmul.mubr.f32.gmra.mrb[0].mxu0 %v29
  %v100 = vpop.f32.mrb[0].mxu0
  %v101 = vadd.f32 %v25, %v100
  %v102 = vpop.f32.mrb[0].mxu0
  %103 = vmatprep.mubr.f32.mxu0 0.0
  %104 = vmatmul.mubr.f32.gmra.mrb[0].mxu0 %v32
  %v105 = vpop.f32.mrb[0].mxu0
  %v106 = vadd.f32 %v25, %v105
  %v107 = vpop.f32.mrb[0].mxu0
  %108 = vdwg.mxu0
  %vm109 = vcmask 195584
  %110 = vst.msk [vmem:[%s3] sm:$0xff] %vm109, %v101
  %111 = vst.msk [vmem:[%s3 + $0x8] sm:$0xff] %vm109, %v106
  // Predicated region
  $region14: #{trans_encoder_forward.7} parent=0 // pred_check
    _
  $region15: #{trans_encoder_forward.7} parent=0 // pred_check_branch
    %113 = sbr.rel (0) target = $region17
  $region16: #{trans_encoder_forward.7} parent=0 // pred_region
    _
  $region17: #{trans_encoder_forward.7} parent=0 // pred_fallthru
    _
  // Predicated region
  $region18: #{trans_encoder_forward.7} parent=0 // pred_check
    _
  $region19: #{trans_encoder_forward.7} parent=0 // pred_check_branch
    %115 = sbr.rel (0) target = $region21
  $region20: #{trans_encoder_forward.7} parent=0 // pred_region
    _
  $region21: #{trans_encoder_forward.7} parent=0 // pred_fallthru
    _

// kernel: reverse.0
$region0: #{reverse.0}
  %s0 = inlined_call_operand.vmem [shape: f32[4,4,4,3], index: 0, kind: input, shape index: {}]
  %s1 = inlined_call_operand.vmem [shape: f32[4,4,4,3], index: 1, kind: output, shape index: {}]
  %v2 = vlaneseq
  %v3 = vsub.s32 2, %v2
  %4 = vset.pattern.permute.xlu0 %v3
  $region1: #{reverse.0} parent=0
    #allocation0 [shape = 'u8[65536]{0}', space=vmem, size = 0x10000, scoped, tag = 'operand span for operand 0']
    #allocation1 [shape = 'u8[32768]{0}', space=vmem, size = 0x8000, scoped, tag = 'packed  for operand 0']
    #allocation2 [shape = 'u8[65536]{0}', space=vmem, size = 0x10000, scoped, tag = 'operand span for operand 1']
    #allocation3 [shape = 'u8[32768]{0}', space=vmem, size = 0x8000, scoped, tag = 'packed  for operand 1']
    // Predicated region
    $region2: #{reverse.0} parent=1 // pred_check
      _
    $region3: #{reverse.0} parent=1 // pred_check_branch
      %6 = sbr.rel (0) target = $region5
    $region4: #{reverse.0} parent=1 // pred_region
      // Predicated region
      $region6: #{reverse.0} parent=4 // pred_check
        _
      $region7: #{reverse.0} parent=4 // pred_check_branch
        %8 = sbr.rel target = $region9
      $region8: #{reverse.0} parent=4 // pred_region
        // Predicated region
        $region21: #{reverse.0} parent=8 // pred_check
          _
        $region22: #{reverse.0} parent=8 // pred_check_branch
          %53 = sbr.rel (0) target = $region24
        $region23: #{reverse.0} parent=8 // pred_region
          loop: start=0, step=1, limit=1
          $region25: #{reverse.0} parent=23 // loop_pre_header
            _
          $region26: #{reverse.0} parent=23 // loop_header
            %s55 = sphi 0, %s59
            %p56 = scmp.ge.s32.totalorder %s55, 1
            %s60 = sphi %s0, %s0
            %s61 = sphi [#allocation1], [#allocation1]
          $region27: #{reverse.0} parent=23 // loop_header_branch
            %58 = sbr.rel (%p56) target = $region31
          $region28: #{reverse.0} parent=23 // loop_body
            _
          $region29: #{reverse.0} parent=23 // loop_footer
            %s59 = sadd.s32 1, %s55
          $region30: #{reverse.0} parent=23 // loop_footer_branch
            %54 = sbr.rel target = $region26
          $region31: #{reverse.0} parent=23 // loop_exit
            _
          loop: start=0, step=1, limit=1
          $region32: #{reverse.0} parent=23 // loop_pre_header
            _
          $region33: #{reverse.0} parent=23 // loop_header
            %s64 = sphi 0, %s68
            %p65 = scmp.ge.s32.totalorder %s64, 1
            %s69 = sphi %s0, %s0
            %s70 = sphi [#allocation1], [#allocation1]
          $region34: #{reverse.0} parent=23 // loop_header_branch
            %67 = sbr.rel (%p65) target = $region38
          $region35: #{reverse.0} parent=23 // loop_body
            %v71 = vld [vmem:[%s69] sm:$0xf]
            %72 = vst [vmem:[%s70] sm:$0xf] %v71
            %v73 = vld [vmem:[%s69 + $0x4] sm:$0xf]
            %74 = vst [vmem:[%s70 + $0x4] sm:$0xf] %v73
            %v75 = vld [vmem:[%s69 + $0x8] sm:$0xf]
            %76 = vst [vmem:[%s70 + $0x8] sm:$0xf] %v75
            %v77 = vld [vmem:[%s69 + $0xc] sm:$0xf]
            %78 = vst [vmem:[%s70 + $0xc] sm:$0xf] %v77
            %v79 = vld [vmem:[%s69 + $0x10] sm:$0xf]
            %80 = vst [vmem:[%s70 + $0x10] sm:$0xf] %v79
            %v81 = vld [vmem:[%s69 + $0x14] sm:$0xf]
            %82 = vst [vmem:[%s70 + $0x14] sm:$0xf] %v81
            %v83 = vld [vmem:[%s69 + $0x18] sm:$0xf]
            %84 = vst [vmem:[%s70 + $0x18] sm:$0xf] %v83
            %v85 = vld [vmem:[%s69 + $0x1c] sm:$0xf]
            %86 = vst [vmem:[%s70 + $0x1c] sm:$0xf] %v85
            %v87 = vld [vmem:[%s69 + $0x20] sm:$0xf]
            %88 = vst [vmem:[%s70 + $0x20] sm:$0xf] %v87
            %v89 = vld [vmem:[%s69 + $0x24] sm:$0xf]
            %90 = vst [vmem:[%s70 + $0x24] sm:$0xf] %v89
            %v91 = vld [vmem:[%s69 + $0x28] sm:$0xf]
            %92 = vst [vmem:[%s70 + $0x28] sm:$0xf] %v91
            %v93 = vld [vmem:[%s69 + $0x2c] sm:$0xf]
            %94 = vst [vmem:[%s70 + $0x2c] sm:$0xf] %v93
            %v95 = vld [vmem:[%s69 + $0x30] sm:$0xf]
            %96 = vst [vmem:[%s70 + $0x30] sm:$0xf] %v95
            %v97 = vld [vmem:[%s69 + $0x34] sm:$0xf]
            %98 = vst [vmem:[%s70 + $0x34] sm:$0xf] %v97
            %v99 = vld [vmem:[%s69 + $0x38] sm:$0xf]
            %100 = vst [vmem:[%s70 + $0x38] sm:$0xf] %v99
            %v101 = vld [vmem:[%s69 + $0x3c] sm:$0xf]
            %102 = vst [vmem:[%s70 + $0x3c] sm:$0xf] %v101
          $region36: #{reverse.0} parent=23 // loop_footer
            %s68 = sadd.s32 1, %s64
          $region37: #{reverse.0} parent=23 // loop_footer_branch
            %63 = sbr.rel target = $region33
          $region38: #{reverse.0} parent=23 // loop_exit
            _
        $region24: #{reverse.0} parent=8 // pred_fallthru
          _
      $region9: #{reverse.0} parent=4 // pred_fallthru
        _
      // Predicated region
      $region10: #{reverse.0} parent=4 // pred_check
        _
      $region11: #{reverse.0} parent=4 // pred_check_branch
        %10 = sbr.rel (0) target = $region13
      $region12: #{reverse.0} parent=4 // pred_region
        loop: start=0, step=1, limit=1
        $region14: #{reverse.0} parent=12 // loop_pre_header
          _
        $region15: #{reverse.0} parent=12 // loop_header
          %s13 = sphi 0, %s17
          %p14 = scmp.ge.s32.totalorder %s13, 1
          %s18 = sphi %s0, %s0
          %s19 = sphi [#allocation1], [#allocation1]
        $region16: #{reverse.0} parent=12 // loop_header_branch
          %16 = sbr.rel (%p14) target = $region20
        $region17: #{reverse.0} parent=12 // loop_body
          %v20 = vld [vmem:[%s18] sm:$0xf]
          %21 = vst [vmem:[%s19] sm:$0xf] %v20
          %v22 = vld [vmem:[%s18 + $0x4] sm:$0xf]
          %23 = vst [vmem:[%s19 + $0x4] sm:$0xf] %v22
          %v24 = vld [vmem:[%s18 + $0x8] sm:$0xf]
          %25 = vst [vmem:[%s19 + $0x8] sm:$0xf] %v24
          %v26 = vld [vmem:[%s18 + $0xc] sm:$0xf]
          %27 = vst [vmem:[%s19 + $0xc] sm:$0xf] %v26
          %v28 = vld [vmem:[%s18 + $0x10] sm:$0xf]
          %29 = vst [vmem:[%s19 + $0x10] sm:$0xf] %v28
          %v30 = vld [vmem:[%s18 + $0x14] sm:$0xf]
          %31 = vst [vmem:[%s19 + $0x14] sm:$0xf] %v30
          %v32 = vld [vmem:[%s18 + $0x18] sm:$0xf]
          %33 = vst [vmem:[%s19 + $0x18] sm:$0xf] %v32
          %v34 = vld [vmem:[%s18 + $0x1c] sm:$0xf]
          %35 = vst [vmem:[%s19 + $0x1c] sm:$0xf] %v34
          %v36 = vld [vmem:[%s18 + $0x20] sm:$0xf]
          %37 = vst [vmem:[%s19 + $0x20] sm:$0xf] %v36
          %v38 = vld [vmem:[%s18 + $0x24] sm:$0xf]
          %39 = vst [vmem:[%s19 + $0x24] sm:$0xf] %v38
          %v40 = vld [vmem:[%s18 + $0x28] sm:$0xf]
          %41 = vst [vmem:[%s19 + $0x28] sm:$0xf] %v40
          %v42 = vld [vmem:[%s18 + $0x2c] sm:$0xf]
          %43 = vst [vmem:[%s19 + $0x2c] sm:$0xf] %v42
          %v44 = vld [vmem:[%s18 + $0x30] sm:$0xf]
          %45 = vst [vmem:[%s19 + $0x30] sm:$0xf] %v44
          %v46 = vld [vmem:[%s18 + $0x34] sm:$0xf]
          %47 = vst [vmem:[%s19 + $0x34] sm:$0xf] %v46
          %v48 = vld [vmem:[%s18 + $0x38] sm:$0xf]
          %49 = vst [vmem:[%s19 + $0x38] sm:$0xf] %v48
          %v50 = vld [vmem:[%s18 + $0x3c] sm:$0xf]
          %51 = vst [vmem:[%s19 + $0x3c] sm:$0xf] %v50
        $region18: #{reverse.0} parent=12 // loop_footer
          %s17 = sadd.s32 1, %s13
        $region19: #{reverse.0} parent=12 // loop_footer_branch
          %12 = sbr.rel target = $region15
        $region20: #{reverse.0} parent=12 // loop_exit
          _
      $region13: #{reverse.0} parent=4 // pred_fallthru
        _
    $region5: #{reverse.0} parent=1 // pred_fallthru
      _
    %103 = vnop
    %s105 = sshllo.u32 0, 4
    %s106 = smul.addr 4, 15
    %s107 = scalar_lea.vmem [#allocation1], %s106
    %v108 = vld [vmem:[%s107] sm:%s105]
    %s109 = scalar_lea.vmem [#allocation0], 120
    %110 = vst [vmem:[%s109] sm:%s105] %v108
    %s111 = smul.addr 4, 14
    %s112 = scalar_lea.vmem [#allocation1], %s111
    %v113 = vld [vmem:[%s112] sm:%s105]
    %s114 = scalar_lea.vmem [#allocation0], 112
    %115 = vst [vmem:[%s114] sm:%s105] %v113
    %s116 = smul.addr 4, 13
    %s117 = scalar_lea.vmem [#allocation1], %s116
    %v118 = vld [vmem:[%s117] sm:%s105]
    %s119 = scalar_lea.vmem [#allocation0], 104
    %120 = vst [vmem:[%s119] sm:%s105] %v118
    %s121 = smul.addr 4, 12
    %s122 = scalar_lea.vmem [#allocation1], %s121
    %v123 = vld [vmem:[%s122] sm:%s105]
    %s124 = scalar_lea.vmem [#allocation0], 96
    %125 = vst [vmem:[%s124] sm:%s105] %v123
    %s126 = smul.addr 4, 11
    %s127 = scalar_lea.vmem [#allocation1], %s126
    %v128 = vld [vmem:[%s127] sm:%s105]
    %s129 = scalar_lea.vmem [#allocation0], 88
    %130 = vst [vmem:[%s129] sm:%s105] %v128
    %s131 = smul.addr 4, 10
    %s132 = scalar_lea.vmem [#allocation1], %s131
    %v133 = vld [vmem:[%s132] sm:%s105]
    %s134 = scalar_lea.vmem [#allocation0], 80
    %135 = vst [vmem:[%s134] sm:%s105] %v133
    %s136 = smul.addr 4, 9
    %s137 = scalar_lea.vmem [#allocation1], %s136
    %v138 = vld [vmem:[%s137] sm:%s105]
    %s139 = scalar_lea.vmem [#allocation0], 72
    %140 = vst [vmem:[%s139] sm:%s105] %v138
    %s141 = smul.addr 4, 8
    %s142 = scalar_lea.vmem [#allocation1], %s141
    %v143 = vld [vmem:[%s142] sm:%s105]
    %s144 = scalar_lea.vmem [#allocation0], 64
    %145 = vst [vmem:[%s144] sm:%s105] %v143
    %s146 = smul.addr 4, 7
    %s147 = scalar_lea.vmem [#allocation1], %s146
    %v148 = vld [vmem:[%s147] sm:%s105]
    %s149 = scalar_lea.vmem [#allocation0], 56
    %150 = vst [vmem:[%s149] sm:%s105] %v148
    %s151 = smul.addr 4, 6
    %s152 = scalar_lea.vmem [#allocation1], %s151
    %v153 = vld [vmem:[%s152] sm:%s105]
    %s154 = scalar_lea.vmem [#allocation0], 48
    %155 = vst [vmem:[%s154] sm:%s105] %v153
    %s156 = smul.addr 4, 5
    %s157 = scalar_lea.vmem [#allocation1], %s156
    %v158 = vld [vmem:[%s157] sm:%s105]
    %s159 = scalar_lea.vmem [#allocation0], 40
    %160 = vst [vmem:[%s159] sm:%s105] %v158
    %s161 = smul.addr 4, 4
    %s162 = scalar_lea.vmem [#allocation1], %s161
    %v163 = vld [vmem:[%s162] sm:%s105]
    %s164 = scalar_lea.vmem [#allocation0], 32
    %165 = vst [vmem:[%s164] sm:%s105] %v163
    %s166 = smul.addr 4, 3
    %s167 = scalar_lea.vmem [#allocation1], %s166
    %v168 = vld [vmem:[%s167] sm:%s105]
    %s169 = scalar_lea.vmem [#allocation0], 24
    %170 = vst [vmem:[%s169] sm:%s105] %v168
    %s171 = smul.addr 4, 2
    %s172 = scalar_lea.vmem [#allocation1], %s171
    %v173 = vld [vmem:[%s172] sm:%s105]
    %s174 = scalar_lea.vmem [#allocation0], 16
    %175 = vst [vmem:[%s174] sm:%s105] %v173
    %s176 = scalar_lea.vmem [#allocation1], 4
    %v177 = vld [vmem:[%s176] sm:%s105]
    %s178 = scalar_lea.vmem [#allocation0], 8
    %179 = vst [vmem:[%s178] sm:%s105] %v177
    %v180 = vld [vmem:[#allocation1] sm:%s105]
    %181 = vst [vmem:[#allocation0] sm:%s105] %v180
    %v182 = vld [vmem:[#allocation0] sm:$0xff]
    %183 = vperm.xlu0 %4, %v182
    %v184 = vpop.permute.xlu0 %183
    %185 = vst [vmem:[#allocation2] sm:$0xff] %v184
    %s186 = scalar_lea.vmem [#allocation2], 8
    %s187 = scalar_lea.vmem [#allocation0], 8
    %v188 = vld [vmem:[%s187] sm:$0xff]
    %189 = vperm.xlu0 %4, %v188
    %v190 = vpop.permute.xlu0 %189
    %191 = vst [vmem:[%s186] sm:$0xff] %v190
    %s192 = scalar_lea.vmem [#allocation2], 16
    %s193 = scalar_lea.vmem [#allocation0], 16
    %v194 = vld [vmem:[%s193] sm:$0xff]
    %195 = vperm.xlu0 %4, %v194
    %v196 = vpop.permute.xlu0 %195
    %197 = vst [vmem:[%s192] sm:$0xff] %v196
    %s198 = scalar_lea.vmem [#allocation2], 24
    %s199 = scalar_lea.vmem [#allocation0], 24
    %v200 = vld [vmem:[%s199] sm:$0xff]
    %201 = vperm.xlu0 %4, %v200
    %v202 = vpop.permute.xlu0 %201
    %203 = vst [vmem:[%s198] sm:$0xff] %v202
    %s204 = scalar_lea.vmem [#allocation2], 32
    %s205 = scalar_lea.vmem [#allocation0], 32
    %v206 = vld [vmem:[%s205] sm:$0xff]
    %207 = vperm.xlu0 %4, %v206
    %v208 = vpop.permute.xlu0 %207
    %209 = vst [vmem:[%s204] sm:$0xff] %v208
    %s210 = scalar_lea.vmem [#allocation2], 40
    %s211 = scalar_lea.vmem [#allocation0], 40
    %v212 = vld [vmem:[%s211] sm:$0xff]
    %213 = vperm.xlu0 %4, %v212
    %v214 = vpop.permute.xlu0 %213
    %215 = vst [vmem:[%s210] sm:$0xff] %v214
    %s216 = scalar_lea.vmem [#allocation2], 48
    %s217 = scalar_lea.vmem [#allocation0], 48
    %v218 = vld [vmem:[%s217] sm:$0xff]
    %219 = vperm.xlu0 %4, %v218
    %v220 = vpop.permute.xlu0 %219
    %221 = vst [vmem:[%s216] sm:$0xff] %v220
    %s222 = scalar_lea.vmem [#allocation2], 56
    %s223 = scalar_lea.vmem [#allocation0], 56
    %v224 = vld [vmem:[%s223] sm:$0xff]
    %225 = vperm.xlu0 %4, %v224
    %v226 = vpop.permute.xlu0 %225
    %227 = vst [vmem:[%s222] sm:$0xff] %v226
    %s228 = scalar_lea.vmem [#allocation2], 64
    %s229 = scalar_lea.vmem [#allocation0], 64
    %v230 = vld [vmem:[%s229] sm:$0xff]
    %231 = vperm.xlu0 %4, %v230
    %v232 = vpop.permute.xlu0 %231
    %233 = vst [vmem:[%s228] sm:$0xff] %v232
    %s234 = scalar_lea.vmem [#allocation2], 72
    %s235 = scalar_lea.vmem [#allocation0], 72
    %v236 = vld [vmem:[%s235] sm:$0xff]
    %237 = vperm.xlu0 %4, %v236
    %v238 = vpop.permute.xlu0 %237
    %239 = vst [vmem:[%s234] sm:$0xff] %v238
    %s240 = scalar_lea.vmem [#allocation2], 80
    %s241 = scalar_lea.vmem [#allocation0], 80
    %v242 = vld [vmem:[%s241] sm:$0xff]
    %243 = vperm.xlu0 %4, %v242
    %v244 = vpop.permute.xlu0 %243
    %245 = vst [vmem:[%s240] sm:$0xff] %v244
    %s246 = scalar_lea.vmem [#allocation2], 88
    %s247 = scalar_lea.vmem [#allocation0], 88
    %v248 = vld [vmem:[%s247] sm:$0xff]
    %249 = vperm.xlu0 %4, %v248
    %v250 = vpop.permute.xlu0 %249
    %251 = vst [vmem:[%s246] sm:$0xff] %v250
    %s252 = scalar_lea.vmem [#allocation2], 96
    %s253 = scalar_lea.vmem [#allocation0], 96
    %v254 = vld [vmem:[%s253] sm:$0xff]
    %255 = vperm.xlu0 %4, %v254
    %v256 = vpop.permute.xlu0 %255
    %257 = vst [vmem:[%s252] sm:$0xff] %v256
    %s258 = scalar_lea.vmem [#allocation2], 104
    %s259 = scalar_lea.vmem [#allocation0], 104
    %v260 = vld [vmem:[%s259] sm:$0xff]
    %261 = vperm.xlu0 %4, %v260
    %v262 = vpop.permute.xlu0 %261
    %263 = vst [vmem:[%s258] sm:$0xff] %v262
    %s264 = scalar_lea.vmem [#allocation2], 112
    %s265 = scalar_lea.vmem [#allocation0], 112
    %v266 = vld [vmem:[%s265] sm:$0xff]
    %267 = vperm.xlu0 %4, %v266
    %v268 = vpop.permute.xlu0 %267
    %269 = vst [vmem:[%s264] sm:$0xff] %v268
    %s270 = scalar_lea.vmem [#allocation2], 120
    %s271 = scalar_lea.vmem [#allocation0], 120
    %v272 = vld [vmem:[%s271] sm:$0xff]
    %273 = vperm.xlu0 %4, %v272
    %v274 = vpop.permute.xlu0 %273
    %275 = vst [vmem:[%s270] sm:$0xff] %v274
    %s277 = sshllo.u32 0, 4
    %v279 = vld [vmem:[#allocation2] sm:%s277]
    %s280 = sshllo.u32 0, 4
    %281 = vst [vmem:[#allocation3] sm:%s280] %v279
    %s282 = scalar_lea.vmem [#allocation2], 8
    %v283 = vld [vmem:[%s282] sm:%s277]
    %s284 = sshllo.u32 0, 4
    %s285 = scalar_lea.vmem [#allocation3], 4
    %286 = vst [vmem:[%s285] sm:%s284] %v283
    %s287 = scalar_lea.vmem [#allocation2], 16
    %v288 = vld [vmem:[%s287] sm:%s277]
    %s289 = sshllo.u32 0, 4
    %s290 = smul.addr 4, 2
    %s291 = scalar_lea.vmem [#allocation3], %s290
    %292 = vst [vmem:[%s291] sm:%s289] %v288
    %s293 = scalar_lea.vmem [#allocation2], 24
    %v294 = vld [vmem:[%s293] sm:%s277]
    %s295 = sshllo.u32 0, 4
    %s296 = smul.addr 4, 3
    %s297 = scalar_lea.vmem [#allocation3], %s296
    %298 = vst [vmem:[%s297] sm:%s295] %v294
    %s299 = scalar_lea.vmem [#allocation2], 32
    %v300 = vld [vmem:[%s299] sm:%s277]
    %s301 = sshllo.u32 0, 4
    %s302 = smul.addr 4, 4
    %s303 = scalar_lea.vmem [#allocation3], %s302
    %304 = vst [vmem:[%s303] sm:%s301] %v300
    %s305 = scalar_lea.vmem [#allocation2], 40
    %v306 = vld [vmem:[%s305] sm:%s277]
    %s307 = sshllo.u32 0, 4
    %s308 = smul.addr 4, 5
    %s309 = scalar_lea.vmem [#allocation3], %s308
    %310 = vst [vmem:[%s309] sm:%s307] %v306
    %s311 = scalar_lea.vmem [#allocation2], 48
    %v312 = vld [vmem:[%s311] sm:%s277]
    %s313 = sshllo.u32 0, 4
    %s314 = smul.addr 4, 6
    %s315 = scalar_lea.vmem [#allocation3], %s314
    %316 = vst [vmem:[%s315] sm:%s313] %v312
    %s317 = scalar_lea.vmem [#allocation2], 56
    %v318 = vld [vmem:[%s317] sm:%s277]
    %s319 = sshllo.u32 0, 4
    %s320 = smul.addr 4, 7
    %s321 = scalar_lea.vmem [#allocation3], %s320
    %322 = vst [vmem:[%s321] sm:%s319] %v318
    %s323 = scalar_lea.vmem [#allocation2], 64
    %v324 = vld [vmem:[%s323] sm:%s277]
    %s325 = sshllo.u32 0, 4
    %s326 = smul.addr 4, 8
    %s327 = scalar_lea.vmem [#allocation3], %s326
    %328 = vst [vmem:[%s327] sm:%s325] %v324
    %s329 = scalar_lea.vmem [#allocation2], 72
    %v330 = vld [vmem:[%s329] sm:%s277]
    %s331 = sshllo.u32 0, 4
    %s332 = smul.addr 4, 9
    %s333 = scalar_lea.vmem [#allocation3], %s332
    %334 = vst [vmem:[%s333] sm:%s331] %v330
    %s335 = scalar_lea.vmem [#allocation2], 80
    %v336 = vld [vmem:[%s335] sm:%s277]
    %s337 = sshllo.u32 0, 4
    %s338 = smul.addr 4, 10
    %s339 = scalar_lea.vmem [#allocation3], %s338
    %340 = vst [vmem:[%s339] sm:%s337] %v336
    %s341 = scalar_lea.vmem [#allocation2], 88
    %v342 = vld [vmem:[%s341] sm:%s277]
    %s343 = sshllo.u32 0, 4
    %s344 = smul.addr 4, 11
    %s345 = scalar_lea.vmem [#allocation3], %s344
    %346 = vst [vmem:[%s345] sm:%s343] %v342
    %s347 = scalar_lea.vmem [#allocation2], 96
    %v348 = vld [vmem:[%s347] sm:%s277]
    %s349 = sshllo.u32 0, 4
    %s350 = smul.addr 4, 12
    %s351 = scalar_lea.vmem [#allocation3], %s350
    %352 = vst [vmem:[%s351] sm:%s349] %v348
    %s353 = scalar_lea.vmem [#allocation2], 104
    %v354 = vld [vmem:[%s353] sm:%s277]
    %s355 = sshllo.u32 0, 4
    %s356 = smul.addr 4, 13
    %s357 = scalar_lea.vmem [#allocation3], %s356
    %358 = vst [vmem:[%s357] sm:%s355] %v354
    %s359 = scalar_lea.vmem [#allocation2], 112
    %v360 = vld [vmem:[%s359] sm:%s277]
    %s361 = sshllo.u32 0, 4
    %s362 = smul.addr 4, 14
    %s363 = scalar_lea.vmem [#allocation3], %s362
    %364 = vst [vmem:[%s363] sm:%s361] %v360
    %s365 = scalar_lea.vmem [#allocation2], 120
    %v366 = vld [vmem:[%s365] sm:%s277]
    %s367 = sshllo.u32 0, 4
    %s368 = smul.addr 4, 15
    %s369 = scalar_lea.vmem [#allocation3], %s368
    %370 = vst [vmem:[%s369] sm:%s367] %v366
    // Predicated region
    $region39: #{reverse.0} parent=1 // pred_check
      _
    $region40: #{reverse.0} parent=1 // pred_check_branch
      %372 = sbr.rel (0) target = $region42
    $region41: #{reverse.0} parent=1 // pred_region
      // Predicated region
      $region43: #{reverse.0} parent=41 // pred_check
        _
      $region44: #{reverse.0} parent=41 // pred_check_branch
        %374 = sbr.rel target = $region46
      $region45: #{reverse.0} parent=41 // pred_region
        // Predicated region
        $region58: #{reverse.0} parent=45 // pred_check
          _
        $region59: #{reverse.0} parent=45 // pred_check_branch
          %419 = sbr.rel (0) target = $region61
        $region60: #{reverse.0} parent=45 // pred_region
          loop: start=0, step=1, limit=1
          $region62: #{reverse.0} parent=60 // loop_pre_header
            _
          $region63: #{reverse.0} parent=60 // loop_header
            %s421 = sphi 0, %s425
            %p422 = scmp.ge.s32.totalorder %s421, 1
            %s426 = sphi [#allocation3], [#allocation3]
            %s427 = sphi %s1, %s1
          $region64: #{reverse.0} parent=60 // loop_header_branch
            %424 = sbr.rel (%p422) target = $region68
          $region65: #{reverse.0} parent=60 // loop_body
            _
          $region66: #{reverse.0} parent=60 // loop_footer
            %s425 = sadd.s32 1, %s421
          $region67: #{reverse.0} parent=60 // loop_footer_branch
            %420 = sbr.rel target = $region63
          $region68: #{reverse.0} parent=60 // loop_exit
            _
          loop: start=0, step=1, limit=1
          $region69: #{reverse.0} parent=60 // loop_pre_header
            _
          $region70: #{reverse.0} parent=60 // loop_header
            %s430 = sphi 0, %s434
            %p431 = scmp.ge.s32.totalorder %s430, 1
            %s435 = sphi [#allocation3], [#allocation3]
            %s436 = sphi %s1, %s1
          $region71: #{reverse.0} parent=60 // loop_header_branch
            %433 = sbr.rel (%p431) target = $region75
          $region72: #{reverse.0} parent=60 // loop_body
            %v437 = vld [vmem:[%s435] sm:$0xf]
            %438 = vst [vmem:[%s436] sm:$0xf] %v437
            %v439 = vld [vmem:[%s435 + $0x4] sm:$0xf]
            %440 = vst [vmem:[%s436 + $0x4] sm:$0xf] %v439
            %v441 = vld [vmem:[%s435 + $0x8] sm:$0xf]
            %442 = vst [vmem:[%s436 + $0x8] sm:$0xf] %v441
            %v443 = vld [vmem:[%s435 + $0xc] sm:$0xf]
            %444 = vst [vmem:[%s436 + $0xc] sm:$0xf] %v443
            %v445 = vld [vmem:[%s435 + $0x10] sm:$0xf]
            %446 = vst [vmem:[%s436 + $0x10] sm:$0xf] %v445
            %v447 = vld [vmem:[%s435 + $0x14] sm:$0xf]
            %448 = vst [vmem:[%s436 + $0x14] sm:$0xf] %v447
            %v449 = vld [vmem:[%s435 + $0x18] sm:$0xf]
            %450 = vst [vmem:[%s436 + $0x18] sm:$0xf] %v449
            %v451 = vld [vmem:[%s435 + $0x1c] sm:$0xf]
            %452 = vst [vmem:[%s436 + $0x1c] sm:$0xf] %v451
            %v453 = vld [vmem:[%s435 + $0x20] sm:$0xf]
            %454 = vst [vmem:[%s436 + $0x20] sm:$0xf] %v453
            %v455 = vld [vmem:[%s435 + $0x24] sm:$0xf]
            %456 = vst [vmem:[%s436 + $0x24] sm:$0xf] %v455
            %v457 = vld [vmem:[%s435 + $0x28] sm:$0xf]
            %458 = vst [vmem:[%s436 + $0x28] sm:$0xf] %v457
            %v459 = vld [vmem:[%s435 + $0x2c] sm:$0xf]
            %460 = vst [vmem:[%s436 + $0x2c] sm:$0xf] %v459
            %v461 = vld [vmem:[%s435 + $0x30] sm:$0xf]
            %462 = vst [vmem:[%s436 + $0x30] sm:$0xf] %v461
            %v463 = vld [vmem:[%s435 + $0x34] sm:$0xf]
            %464 = vst [vmem:[%s436 + $0x34] sm:$0xf] %v463
            %v465 = vld [vmem:[%s435 + $0x38] sm:$0xf]
            %466 = vst [vmem:[%s436 + $0x38] sm:$0xf] %v465
            %v467 = vld [vmem:[%s435 + $0x3c] sm:$0xf]
            %468 = vst [vmem:[%s436 + $0x3c] sm:$0xf] %v467
          $region73: #{reverse.0} parent=60 // loop_footer
            %s434 = sadd.s32 1, %s430
          $region74: #{reverse.0} parent=60 // loop_footer_branch
            %429 = sbr.rel target = $region70
          $region75: #{reverse.0} parent=60 // loop_exit
            _
        $region61: #{reverse.0} parent=45 // pred_fallthru
          _
      $region46: #{reverse.0} parent=41 // pred_fallthru
        _
      // Predicated region
      $region47: #{reverse.0} parent=41 // pred_check
        _
      $region48: #{reverse.0} parent=41 // pred_check_branch
        %376 = sbr.rel (0) target = $region50
      $region49: #{reverse.0} parent=41 // pred_region
        loop: start=0, step=1, limit=1
        $region51: #{reverse.0} parent=49 // loop_pre_header
          _
        $region52: #{reverse.0} parent=49 // loop_header
          %s379 = sphi 0, %s383
          %p380 = scmp.ge.s32.totalorder %s379, 1
          %s384 = sphi [#allocation3], [#allocation3]
          %s385 = sphi %s1, %s1
        $region53: #{reverse.0} parent=49 // loop_header_branch
          %382 = sbr.rel (%p380) target = $region57
        $region54: #{reverse.0} parent=49 // loop_body
          %v386 = vld [vmem:[%s384] sm:$0xf]
          %387 = vst [vmem:[%s385] sm:$0xf] %v386
          %v388 = vld [vmem:[%s384 + $0x4] sm:$0xf]
          %389 = vst [vmem:[%s385 + $0x4] sm:$0xf] %v388
          %v390 = vld [vmem:[%s384 + $0x8] sm:$0xf]
          %391 = vst [vmem:[%s385 + $0x8] sm:$0xf] %v390
          %v392 = vld [vmem:[%s384 + $0xc] sm:$0xf]
          %393 = vst [vmem:[%s385 + $0xc] sm:$0xf] %v392
          %v394 = vld [vmem:[%s384 + $0x10] sm:$0xf]
          %395 = vst [vmem:[%s385 + $0x10] sm:$0xf] %v394
          %v396 = vld [vmem:[%s384 + $0x14] sm:$0xf]
          %397 = vst [vmem:[%s385 + $0x14] sm:$0xf] %v396
          %v398 = vld [vmem:[%s384 + $0x18] sm:$0xf]
          %399 = vst [vmem:[%s385 + $0x18] sm:$0xf] %v398
          %v400 = vld [vmem:[%s384 + $0x1c] sm:$0xf]
          %401 = vst [vmem:[%s385 + $0x1c] sm:$0xf] %v400
          %v402 = vld [vmem:[%s384 + $0x20] sm:$0xf]
          %403 = vst [vmem:[%s385 + $0x20] sm:$0xf] %v402
          %v404 = vld [vmem:[%s384 + $0x24] sm:$0xf]
          %405 = vst [vmem:[%s385 + $0x24] sm:$0xf] %v404
          %v406 = vld [vmem:[%s384 + $0x28] sm:$0xf]
          %407 = vst [vmem:[%s385 + $0x28] sm:$0xf] %v406
          %v408 = vld [vmem:[%s384 + $0x2c] sm:$0xf]
          %409 = vst [vmem:[%s385 + $0x2c] sm:$0xf] %v408
          %v410 = vld [vmem:[%s384 + $0x30] sm:$0xf]
          %411 = vst [vmem:[%s385 + $0x30] sm:$0xf] %v410
          %v412 = vld [vmem:[%s384 + $0x34] sm:$0xf]
          %413 = vst [vmem:[%s385 + $0x34] sm:$0xf] %v412
          %v414 = vld [vmem:[%s384 + $0x38] sm:$0xf]
          %415 = vst [vmem:[%s385 + $0x38] sm:$0xf] %v414
          %v416 = vld [vmem:[%s384 + $0x3c] sm:$0xf]
          %417 = vst [vmem:[%s385 + $0x3c] sm:$0xf] %v416
        $region55: #{reverse.0} parent=49 // loop_footer
          %s383 = sadd.s32 1, %s379
        $region56: #{reverse.0} parent=49 // loop_footer_branch
          %378 = sbr.rel target = $region52
        $region57: #{reverse.0} parent=49 // loop_exit
          _
      $region50: #{reverse.0} parent=41 // pred_fallthru
        _
    $region42: #{reverse.0} parent=1 // pred_fallthru
      _
    %469 = vnop

// kernel: trans_encoder_forward.8
$region0: #{trans_encoder_forward.8}
  #allocation0 [shape = 'u32[]', space=smem, size = 0x4, offset = 0x4, fixed_abs, tag = 'smem constant byte address 0x4 - core index']
  #allocation1 [shape = 'u32[144,128]{1,0:T(1,128)}', space=vmem, size = 0x12000, scoped, tag = 'internal scratch']
  %s0 = inlined_call_operand.vmem [shape: f32[4,4], index: 0, kind: input, shape index: {}]
  %s1 = inlined_call_operand.vmem [shape: f32[4,4], index: 1, kind: output, shape index: {0}]
  %s2 = inlined_call_operand.hbm [shape: f32[4,4], index: 2, kind: output, shape index: {1}]
  %3 = xla_tuple %s1, %s2
  %s4 = sld [smem:[#allocation0]]
  $region22: #{trans_encoder_forward.8} parent=0
    _
  %s6 = ssub.s32 1, %s4
  %s7 = scalar_select 0, %s6, %s4
  $region1: #{trans_encoder_forward.8} parent=0
    #allocation2 [shape = 'u8[2048]{0}', space=vmem, size = 0x800, scoped, tag = 'output window, operand 1, single buffered']
    #allocation3 [shape = 's32[1]{0}', space=sflag, size = 0x4, scoped, tag = 'scoped memory for trans_encoder_forward.8']
    %8 = vsyncpa [#allocation3], 0
    // Predicated region
    $region2: #{trans_encoder_forward.8} parent=1 // pred_check
      _
    $region3: #{trans_encoder_forward.8} parent=1 // pred_check_branch
      %10 = sbr.rel (0) target = $region5
    $region4: #{trans_encoder_forward.8} parent=1 // pred_region
      _
    $region5: #{trans_encoder_forward.8} parent=1 // pred_fallthru
      _
    %v11 = vld [vmem:[%s0] sm:$0xf]
    %vm12 = vcmask 31744
    %v14 = vsel %vm12, %v11, 0
    %16 = vmatprep.subr.mxu0 0.0
    %17 = vmatpush1.xpose.msra.mxu0 %v14
    %18 = vmatprep.subr.mxu0 0.0
    %19 = vmatpush1.xpose.msra.mxu0 0.0
    %20 = vmatprep.subr.mxu0 0.0
    %21 = vmatpush1.xpose.msra.mxu0 0.0
    %22 = vmatprep.subr.mxu0 0.0
    %23 = vmatpush1.xpose.msra.mxu0 0.0
    %24 = vmatprep.subr.mxu0 0.0
    %25 = vmatpush1.xpose.msra.mxu0 0.0
    %26 = vmatprep.subr.mxu0 0.0
    %27 = vmatpush1.xpose.msra.mxu0 0.0
    %28 = vmatprep.subr.mxu0 0.0
    %29 = vmatpush1.xpose.msra.mxu0 0.0
    %30 = vmatprep.subr.mxu0 0.0
    %31 = vmatpush1.xpose.msra.mxu0 0.0
    %32 = vmatprep.subr.mxu0 0.0
    %33 = vmatpush1.xpose.msra.mxu0 0.0
    %34 = vmatprep.subr.mxu0 0.0
    %35 = vmatpush1.xpose.msra.mxu0 0.0
    %36 = vmatprep.subr.mxu0 0.0
    %37 = vmatpush1.xpose.msra.mxu0 0.0
    %38 = vmatprep.subr.mxu0 0.0
    %39 = vmatpush1.xpose.msra.mxu0 0.0
    %40 = vmatprep.subr.mxu0 0.0
    %41 = vmatpush1.xpose.msra.mxu0 0.0
    %42 = vmatprep.subr.mxu0 0.0
    %43 = vmatpush1.xpose.msra.mxu0 0.0
    %44 = vmatprep.subr.mxu0 0.0
    %45 = vmatpush1.xpose.msra.mxu0 0.0
    %46 = vmatprep.subr.mxu0 0.0
    %47 = vmatpush1.xpose.msra.mxu0 0.0
    %48 = vmatprep.subr.mxu0 0.0
    %49 = vmatpush1.xpose.msra.mxu0 0.0
    %50 = vmatprep.subr.mxu0 0.0
    %51 = vmatpush1.xpose.msra.mxu0 0.0
    %52 = vmatprep.subr.mxu0 0.0
    %53 = vmatpush1.xpose.msra.mxu0 0.0
    %54 = vmatprep.subr.mxu0 0.0
    %55 = vmatpush1.xpose.msra.mxu0 0.0
    %56 = vmatprep.subr.mxu0 0.0
    %57 = vmatpush1.xpose.msra.mxu0 0.0
    %58 = vmatprep.subr.mxu0 0.0
    %59 = vmatpush1.xpose.msra.mxu0 0.0
    %60 = vmatprep.subr.mxu0 0.0
    %61 = vmatpush1.xpose.msra.mxu0 0.0
    %62 = vmatprep.subr.mxu0 0.0
    %63 = vmatpush1.xpose.msra.mxu0 0.0
    %64 = vmatprep.subr.mxu0 0.0
    %65 = vmatpush1.xpose.msra.mxu0 0.0
    %66 = vmatprep.subr.mxu0 0.0
    %67 = vmatpush1.xpose.msra.mxu0 0.0
    %68 = vmatprep.subr.mxu0 0.0
    %69 = vmatpush1.xpose.msra.mxu0 0.0
    %70 = vmatprep.subr.mxu0 0.0
    %71 = vmatpush1.xpose.msra.mxu0 0.0
    %72 = vmatprep.subr.mxu0 0.0
    %73 = vmatpush1.xpose.msra.mxu0 0.0
    %74 = vmatprep.subr.mxu0 0.0
    %75 = vmatpush1.xpose.msra.mxu0 0.0
    %76 = vmatprep.subr.mxu0 0.0
    %77 = vmatpush1.xpose.msra.mxu0 0.0
    %78 = vmatprep.subr.mxu0 0.0
    %79 = vmatpush1.xpose.msra.mxu0 0.0
    %80 = vmatprep.mubr.f32.mxu0 0.0
    %81 = vmatmul.mubr.f32.gmra.mrb[0].mxu0 %v14
    %v82 = vpop.f32.mrb[0].mxu0
    %v83 = vadd.f32 0.0, %v82
    %v84 = vpop.f32.mrb[0].mxu0
    %85 = vdwg.mxu0
    %v86 = vlaneseq
    %v87 = vshrl.u32 %v86, 7
    %v88 = vlaneseq
    %v89 = vand.u32 %v88, 127
    %vm90 = vcmp.eq.s32.totalorder %v87, %v89
    %v91 = vsel %vm90, %v83, 0.0
    %vm92 = vcmask 27648
    %v93 = vsel %vm92, %v91, 0.0
    %94 = vadd.xlane.f32.xlu0 %v93
    %v95 = vpop.xlane.xlu0 %94
    %v96 = vrot.slane %v93, 4
    %v97 = vadd.f32 %v93, %v96
    %v98 = vrot.slane %v97, 2
    %v99 = vadd.f32 %v97, %v98
    %v100 = vrot.slane %v99, 1
    %v101 = vadd.f32 %v99, %v100
    %v102 = vmul.f32 %v95, %v101
    %v103 = vrsqrt.pop %v102
    %v104 = vmul.f32 %v83, %v103
    %105 = vst.msk [vmem:[%s1] sm:$0xf] %vm92, %v104
    %v106 = vsel %vm92, %v104, -inf
    %107 = vmax.xlane.f32.xlu0 %v106
    %v108 = vpop.xlane.xlu0 %107
    %v109 = vsub.f32 %v104, %v108
    %v110 = vmul.f32 %v109, 1.442695
    %v111 = vpow.pop %v110
    %v112 = vsel %vm92, %v111, 0.0
    %113 = vadd.xlane.f32.xlu0 %v112
    %v114 = vpop.xlane.xlu0 %113
    %v115 = vrcp.pop %v114
    %v116 = vmul.f32 %v111, %v115
    %117 = vst.msk [vmem:[#allocation2] sm:$0xf] %vm92, %v116
    // Predicated region
    $region6: #{trans_encoder_forward.8} parent=1 // pred_check
      _
    $region7: #{trans_encoder_forward.8} parent=1 // pred_check_branch
      %119 = sbr.rel (0) target = $region9
    $region8: #{trans_encoder_forward.8} parent=1 // pred_region
      _
    $region9: #{trans_encoder_forward.8} parent=1 // pred_fallthru
      _
    // Predicated region
    $region10: #{trans_encoder_forward.8} parent=1 // pred_check
      _
    $region11: #{trans_encoder_forward.8} parent=1 // pred_check_branch
      %121 = sbr.rel (0) target = $region13
    $region12: #{trans_encoder_forward.8} parent=1 // pred_region
      %s123 = ssub.s32 64, 64
      %124 = vsyncadd [#allocation3], %s123
      %s126 = sshll.u32 [#allocation2], 4
      %s127 = int_to_ptr.vmem [resolvable:$true] %s126
      %129 = dma.vmem_to_hbm [thread:$0]  %s127, 64, %s2, [#allocation3]
    $region13: #{trans_encoder_forward.8} parent=1 // pred_fallthru
      _
    // Predicated region
    $region14: #{trans_encoder_forward.8} parent=1 // pred_check
      _
    $region15: #{trans_encoder_forward.8} parent=1 // pred_check_branch
      %131 = sbr.rel (0) target = $region17
    $region16: #{trans_encoder_forward.8} parent=1 // pred_region
      _
    $region17: #{trans_encoder_forward.8} parent=1 // pred_fallthru
      _
    // Predicated region
    $region18: #{trans_encoder_forward.8} parent=1 // pred_check
      _
    $region19: #{trans_encoder_forward.8} parent=1 // pred_check_branch
      %133 = sbr.rel (0) target = $region21
    $region20: #{trans_encoder_forward.8} parent=1 // pred_region
      %134 = dma.done [#allocation3], 64
    $region21: #{trans_encoder_forward.8} parent=1 // pred_fallthru
      _
    %135 = vsyncpa [#allocation3], 1

// kernel: branch_3_fun.2
$region0: #{branch_3_fun.2}
  #allocation0 [shape = 'u32[]', space=smem, size = 0x4, offset = 0x4, fixed_abs, tag = 'smem constant byte address 0x4 - core index']
  #allocation1 [shape = 'u32[144,128]{1,0:T(1,128)}', space=vmem, size = 0x12000, scoped, tag = 'internal scratch']
  %s0 = inlined_call_operand.vmem [shape: f32[32,8], index: 0, kind: input, shape index: {}]
  %s1 = inlined_call_operand.vmem [shape: f32[3,8,8], index: 1, kind: input, shape index: {}]
  %s2 = inlined_call_operand.vmem [shape: f32[1,8], index: 2, kind: input, shape index: {}, may-alias: {2,4}]
  %s3 = inlined_call_operand.vmem [shape: f32[3,8,8], index: 3, kind: input, shape index: {}]
  %s4 = inlined_call_operand.vmem [shape: f32[1,8], index: 4, kind: input, shape index: {}, may-alias: {2,4}]
  %s5 = inlined_call_operand.hbm [shape: f32[32,8], index: 5, kind: output, shape index: {}]
  %s6 = sld [smem:[#allocation0]]
  $region30: #{branch_3_fun.2} parent=0
    _
  %s8 = ssub.s32 1, %s6
  %s9 = scalar_select 0, %s8, %s6
  $region1: #{branch_3_fun.2} parent=0
    #allocation2 [shape = 'u8[16384]{0}', space=vmem, size = 0x4000, scoped, tag = 'output window, operand 0, single buffered']
    #allocation3 [shape = 's32[1]{0}', space=sflag, size = 0x4, scoped, tag = 'scoped memory for branch_3_fun.2']
    %10 = vsyncpa [#allocation3], 0
    // Predicated region
    $region2: #{branch_3_fun.2} parent=1 // pred_check
      _
    $region3: #{branch_3_fun.2} parent=1 // pred_check_branch
      %12 = sbr.rel (0) target = $region5
    $region4: #{branch_3_fun.2} parent=1 // pred_region
      _
    $region5: #{branch_3_fun.2} parent=1 // pred_fallthru
      _
    // Predicated region
    $region6: #{branch_3_fun.2} parent=1 // pred_check
      _
    $region7: #{branch_3_fun.2} parent=1 // pred_check_branch
      %14 = sbr.rel (0) target = $region9
    $region8: #{branch_3_fun.2} parent=1 // pred_region
      _
    $region9: #{branch_3_fun.2} parent=1 // pred_fallthru
      _
    // Predicated region
    $region10: #{branch_3_fun.2} parent=1 // pred_check
      _
    $region11: #{branch_3_fun.2} parent=1 // pred_check_branch
      %16 = sbr.rel (0) target = $region13
    $region12: #{branch_3_fun.2} parent=1 // pred_region
      _
    $region13: #{branch_3_fun.2} parent=1 // pred_fallthru
      _
    // Predicated region
    $region14: #{branch_3_fun.2} parent=1 // pred_check
      _
    $region15: #{branch_3_fun.2} parent=1 // pred_check_branch
      %18 = sbr.rel (0) target = $region17
    $region16: #{branch_3_fun.2} parent=1 // pred_region
      _
    $region17: #{branch_3_fun.2} parent=1 // pred_fallthru
      _
    // Predicated region
    $region18: #{branch_3_fun.2} parent=1 // pred_check
      _
    $region19: #{branch_3_fun.2} parent=1 // pred_check_branch
      %20 = sbr.rel (0) target = $region21
    $region20: #{branch_3_fun.2} parent=1 // pred_region
      _
    $region21: #{branch_3_fun.2} parent=1 // pred_fallthru
      _
    %v21 = vld [vmem:[%s0] sm:$0xff]
    %v22 = vld [vmem:[%s0 + $0x8] sm:$0xff]
    %v23 = vld [vmem:[%s0 + $0x10] sm:$0xff]
    %v24 = vld [vmem:[%s0 + $0x18] sm:$0xff]
    %v25 = vlaneseq
    %v26 = vshrl.u32 %v25, 7
    %v27 = vadd.s32 %v26, 8
    %v28 = vadd.s32 %v26, 16
    %v29 = vadd.s32 %v26, 24
    %v30 = vld [vmem:[%s2] sm:$0x1]
    %v32 = vlaneseq
    %v33 = vshrl.u32 %v32, 7
    %v34 = vsub.s32 0, %v33
    %v35 = vrot.slane %v30, %v34
    %v37 = vadd.f32 %v35, 0.0
    %vm38 = vcmp.lt.s32.totalorder %v26, 8
    %vm39 = vcmp.lt.s32.totalorder %v27, 8
    %vm40 = vcmp.lt.s32.totalorder %v28, 8
    %vm41 = vcmp.lt.s32.totalorder %v29, 8
    %v42 = vsel %vm38, 1, 0
    %v43 = vsel %vm39, 1, 0
    %v44 = vsel %vm40, 1, 0
    %v45 = vsel %vm41, 1, 0
    %vm46 = vcmp.eq.s32.totalorder %v42, 1
    %vm47 = vcmp.eq.s32.totalorder %v43, 1
    %vm48 = vcmp.eq.s32.totalorder %v44, 1
    %vm49 = vcmp.eq.s32.totalorder %v45, 1
    %v50 = vsel %vm46, 0.0, %v24
    %v51 = vsel %vm47, 0.0, %v21
    %v52 = vsel %vm48, 0.0, %v22
    %v53 = vsel %vm49, 0.0, %v23
    %v54 = vld [vmem:[%s1] sm:$0xff]
    %vm55 = vcmask 64512
    %v57 = vsel %vm55, %v50, 0
    %v60 = vsel %vm55, %v51, 0
    %v63 = vsel %vm55, %v52, 0
    %v66 = vsel %vm55, %v53, 0
    %68 = vmatprep.subr.mxu0 0.0
    %69 = vmatpush1.msra.mxu0 %v54
    %70 = vmatprep.subr.mxu0 0.0
    %71 = vmatpush1.msra.mxu0 0.0
    %72 = vmatprep.subr.mxu0 0.0
    %73 = vmatpush1.msra.mxu0 0.0
    %74 = vmatprep.subr.mxu0 0.0
    %75 = vmatpush1.msra.mxu0 0.0
    %76 = vmatprep.subr.mxu0 0.0
    %77 = vmatpush1.msra.mxu0 0.0
    %78 = vmatprep.subr.mxu0 0.0
    %79 = vmatpush1.msra.mxu0 0.0
    %80 = vmatprep.subr.mxu0 0.0
    %81 = vmatpush1.msra.mxu0 0.0
    %82 = vmatprep.subr.mxu0 0.0
    %83 = vmatpush1.msra.mxu0 0.0
    %84 = vmatprep.subr.mxu0 0.0
    %85 = vmatpush1.msra.mxu0 0.0
    %86 = vmatprep.subr.mxu0 0.0
    %87 = vmatpush1.msra.mxu0 0.0
    %88 = vmatprep.subr.mxu0 0.0
    %89 = vmatpush1.msra.mxu0 0.0
    %90 = vmatprep.subr.mxu0 0.0
    %91 = vmatpush1.msra.mxu0 0.0
    %92 = vmatprep.subr.mxu0 0.0
    %93 = vmatpush1.msra.mxu0 0.0
    %94 = vmatprep.subr.mxu0 0.0
    %95 = vmatpush1.msra.mxu0 0.0
    %96 = vmatprep.subr.mxu0 0.0
    %97 = vmatpush1.msra.mxu0 0.0
    %98 = vmatprep.subr.mxu0 0.0
    %99 = vmatpush1.msra.mxu0 0.0
    %100 = vmatprep.subr.mxu0 0.0
    %101 = vmatpush1.msra.mxu0 0.0
    %102 = vmatprep.subr.mxu0 0.0
    %103 = vmatpush1.msra.mxu0 0.0
    %104 = vmatprep.subr.mxu0 0.0
    %105 = vmatpush1.msra.mxu0 0.0
    %106 = vmatprep.subr.mxu0 0.0
    %107 = vmatpush1.msra.mxu0 0.0
    %108 = vmatprep.subr.mxu0 0.0
    %109 = vmatpush1.msra.mxu0 0.0
    %110 = vmatprep.subr.mxu0 0.0
    %111 = vmatpush1.msra.mxu0 0.0
    %112 = vmatprep.subr.mxu0 0.0
    %113 = vmatpush1.msra.mxu0 0.0
    %114 = vmatprep.subr.mxu0 0.0
    %115 = vmatpush1.msra.mxu0 0.0
    %116 = vmatprep.subr.mxu0 0.0
    %117 = vmatpush1.msra.mxu0 0.0
    %118 = vmatprep.subr.mxu0 0.0
    %119 = vmatpush1.msra.mxu0 0.0
    %120 = vmatprep.subr.mxu0 0.0
    %121 = vmatpush1.msra.mxu0 0.0
    %122 = vmatprep.subr.mxu0 0.0
    %123 = vmatpush1.msra.mxu0 0.0
    %124 = vmatprep.subr.mxu0 0.0
    %125 = vmatpush1.msra.mxu0 0.0
    %126 = vmatprep.subr.mxu0 0.0
    %127 = vmatpush1.msra.mxu0 0.0
    %128 = vmatprep.subr.mxu0 0.0
    %129 = vmatpush1.msra.mxu0 0.0
    %130 = vmatprep.subr.mxu0 0.0
    %131 = vmatpush1.msra.mxu0 0.0
    %132 = vmatprep.mubr.f32.mxu0 0.0
    %133 = vmatmul.mubr.f32.gmra.mrb[0].mxu0 %v57
    %v134 = vpop.f32.mrb[0].mxu0
    %v135 = vadd.f32 0.0, %v134
    %v136 = vpop.f32.mrb[0].mxu0
    %137 = vmatprep.mubr.f32.mxu0 0.0
    %138 = vmatmul.mubr.f32.gmra.mrb[0].mxu0 %v60
    %v139 = vpop.f32.mrb[0].mxu0
    %v140 = vadd.f32 0.0, %v139
    %v141 = vpop.f32.mrb[0].mxu0
    %142 = vmatprep.mubr.f32.mxu0 0.0
    %143 = vmatmul.mubr.f32.gmra.mrb[0].mxu0 %v63
    %v144 = vpop.f32.mrb[0].mxu0
    %v145 = vadd.f32 0.0, %v144
    %v146 = vpop.f32.mrb[0].mxu0
    %147 = vmatprep.mubr.f32.mxu0 0.0
    %148 = vmatmul.mubr.f32.gmra.mrb[0].mxu0 %v66
    %v149 = vpop.f32.mrb[0].mxu0
    %v150 = vadd.f32 0.0, %v149
    %v151 = vpop.f32.mrb[0].mxu0
    %152 = vdwg.mxu0
    %v153 = vadd.f32 %v37, %v135
    %v154 = vadd.f32 %v37, %v140
    %v155 = vadd.f32 %v37, %v145
    %v156 = vadd.f32 %v37, %v150
    %vm157 = vcmp.lt.s32.totalorder %v26, 4
    %vm158 = vcmp.lt.s32.totalorder %v27, 4
    %vm159 = vcmp.lt.s32.totalorder %v28, 4
    %vm160 = vcmp.lt.s32.totalorder %v29, 4
    %v162 = vrot.slane %v24, 4
    %vm167 = vcmask 1043456
    %v168 = vrot.slane %v21, 4
    %v169 = vrot.slane %v22, 4
    %v170 = vsel %vm167, %v168, %v169
    %v171 = vrot.slane %v23, 4
    %v172 = vsel %vm167, %v169, %v171
    %v173 = vsel %vm167, %v171, %v162
    %v178 = vsel %vm167, %v162, %v168
    %v179 = vsel %vm157, 1, 0
    %v180 = vsel %vm158, 1, 0
    %v181 = vsel %vm159, 1, 0
    %v182 = vsel %vm160, 1, 0
    %vm183 = vcmp.eq.s32.totalorder %v179, 1
    %vm184 = vcmp.eq.s32.totalorder %v180, 1
    %vm185 = vcmp.eq.s32.totalorder %v181, 1
    %vm186 = vcmp.eq.s32.totalorder %v182, 1
    %v187 = vsel %vm183, 0.0, %v178
    %v188 = vsel %vm184, 0.0, %v170
    %v189 = vsel %vm185, 0.0, %v172
    %v190 = vsel %vm186, 0.0, %v173
    %s191 = scalar_lea.vmem %s1, 8
    %v192 = vld [vmem:[%s191] sm:$0xff]
    %v194 = vsel %vm55, %v187, 0
    %v197 = vsel %vm55, %v188, 0
    %v200 = vsel %vm55, %v189, 0
    %v203 = vsel %vm55, %v190, 0
    %205 = vmatprep.subr.mxu0 0.0
    %206 = vmatpush1.msra.mxu0 %v192
    %207 = vmatprep.subr.mxu0 0.0
    %208 = vmatpush1.msra.mxu0 0.0
    %209 = vmatprep.subr.mxu0 0.0
    %210 = vmatpush1.msra.mxu0 0.0
    %211 = vmatprep.subr.mxu0 0.0
    %212 = vmatpush1.msra.mxu0 0.0
    %213 = vmatprep.subr.mxu0 0.0
    %214 = vmatpush1.msra.mxu0 0.0
    %215 = vmatprep.subr.mxu0 0.0
    %216 = vmatpush1.msra.mxu0 0.0
    %217 = vmatprep.subr.mxu0 0.0
    %218 = vmatpush1.msra.mxu0 0.0
    %219 = vmatprep.subr.mxu0 0.0
    %220 = vmatpush1.msra.mxu0 0.0
    %221 = vmatprep.subr.mxu0 0.0
    %222 = vmatpush1.msra.mxu0 0.0
    %223 = vmatprep.subr.mxu0 0.0
    %224 = vmatpush1.msra.mxu0 0.0
    %225 = vmatprep.subr.mxu0 0.0
    %226 = vmatpush1.msra.mxu0 0.0
    %227 = vmatprep.subr.mxu0 0.0
    %228 = vmatpush1.msra.mxu0 0.0
    %229 = vmatprep.subr.mxu0 0.0
    %230 = vmatpush1.msra.mxu0 0.0
    %231 = vmatprep.subr.mxu0 0.0
    %232 = vmatpush1.msra.mxu0 0.0
    %233 = vmatprep.subr.mxu0 0.0
    %234 = vmatpush1.msra.mxu0 0.0
    %235 = vmatprep.subr.mxu0 0.0
    %236 = vmatpush1.msra.mxu0 0.0
    %237 = vmatprep.subr.mxu0 0.0
    %238 = vmatpush1.msra.mxu0 0.0
    %239 = vmatprep.subr.mxu0 0.0
    %240 = vmatpush1.msra.mxu0 0.0
    %241 = vmatprep.subr.mxu0 0.0
    %242 = vmatpush1.msra.mxu0 0.0
    %243 = vmatprep.subr.mxu0 0.0
    %244 = vmatpush1.msra.mxu0 0.0
    %245 = vmatprep.subr.mxu0 0.0
    %246 = vmatpush1.msra.mxu0 0.0
    %247 = vmatprep.subr.mxu0 0.0
    %248 = vmatpush1.msra.mxu0 0.0
    %249 = vmatprep.subr.mxu0 0.0
    %250 = vmatpush1.msra.mxu0 0.0
    %251 = vmatprep.subr.mxu0 0.0
    %252 = vmatpush1.msra.mxu0 0.0
    %253 = vmatprep.subr.mxu0 0.0
    %254 = vmatpush1.msra.mxu0 0.0
    %255 = vmatprep.subr.mxu0 0.0
    %256 = vmatpush1.msra.mxu0 0.0
    %257 = vmatprep.subr.mxu0 0.0
    %258 = vmatpush1.msra.mxu0 0.0
    %259 = vmatprep.subr.mxu0 0.0
    %260 = vmatpush1.msra.mxu0 0.0
    %261 = vmatprep.subr.mxu0 0.0
    %262 = vmatpush1.msra.mxu0 0.0
    %263 = vmatprep.subr.mxu0 0.0
    %264 = vmatpush1.msra.mxu0 0.0
    %265 = vmatprep.subr.mxu0 0.0
    %266 = vmatpush1.msra.mxu0 0.0
    %267 = vmatprep.subr.mxu0 0.0
    %268 = vmatpush1.msra.mxu0 0.0
    %269 = vmatprep.mubr.f32.mxu0 0.0
    %270 = vmatmul.mubr.f32.gmra.mrb[0].mxu0 %v194
    %v271 = vpop.f32.mrb[0].mxu0
    %v272 = vadd.f32 0.0, %v271
    %v273 = vpop.f32.mrb[0].mxu0
    %274 = vmatprep.mubr.f32.mxu0 0.0
    %275 = vmatmul.mubr.f32.gmra.mrb[0].mxu0 %v197
    %v276 = vpop.f32.mrb[0].mxu0
    %v277 = vadd.f32 0.0, %v276
    %v278 = vpop.f32.mrb[0].mxu0
    %279 = vmatprep.mubr.f32.mxu0 0.0
    %280 = vmatmul.mubr.f32.gmra.mrb[0].mxu0 %v200
    %v281 = vpop.f32.mrb[0].mxu0
    %v282 = vadd.f32 0.0, %v281
    %v283 = vpop.f32.mrb[0].mxu0
    %284 = vmatprep.mubr.f32.mxu0 0.0
    %285 = vmatmul.mubr.f32.gmra.mrb[0].mxu0 %v203
    %v286 = vpop.f32.mrb[0].mxu0
    %v287 = vadd.f32 0.0, %v286
    %v288 = vpop.f32.mrb[0].mxu0
    %289 = vdwg.mxu0
    %v290 = vadd.f32 %v153, %v272
    %v291 = vadd.f32 %v154, %v277
    %v292 = vadd.f32 %v155, %v282
    %v293 = vadd.f32 %v156, %v287
    %s294 = scalar_lea.vmem %s1, 16
    %v295 = vld [vmem:[%s294] sm:$0xff]
    %v296 = vsel %vm55, %v21, 0
    %v298 = vsel %vm55, %v22, 0
    %v300 = vsel %vm55, %v23, 0
    %v302 = vsel %vm55, %v24, 0
    %304 = vmatprep.subr.mxu0 0.0
    %305 = vmatpush1.msra.mxu0 %v295
    %306 = vmatprep.subr.mxu0 0.0
    %307 = vmatpush1.msra.mxu0 0.0
    %308 = vmatprep.subr.mxu0 0.0
    %309 = vmatpush1.msra.mxu0 0.0
    %310 = vmatprep.subr.mxu0 0.0
    %311 = vmatpush1.msra.mxu0 0.0
    %312 = vmatprep.subr.mxu0 0.0
    %313 = vmatpush1.msra.mxu0 0.0
    %314 = vmatprep.subr.mxu0 0.0
    %315 = vmatpush1.msra.mxu0 0.0
    %316 = vmatprep.subr.mxu0 0.0
    %317 = vmatpush1.msra.mxu0 0.0
    %318 = vmatprep.subr.mxu0 0.0
    %319 = vmatpush1.msra.mxu0 0.0
    %320 = vmatprep.subr.mxu0 0.0
    %321 = vmatpush1.msra.mxu0 0.0
    %322 = vmatprep.subr.mxu0 0.0
    %323 = vmatpush1.msra.mxu0 0.0
    %324 = vmatprep.subr.mxu0 0.0
    %325 = vmatpush1.msra.mxu0 0.0
    %326 = vmatprep.subr.mxu0 0.0
    %327 = vmatpush1.msra.mxu0 0.0
    %328 = vmatprep.subr.mxu0 0.0
    %329 = vmatpush1.msra.mxu0 0.0
    %330 = vmatprep.subr.mxu0 0.0
    %331 = vmatpush1.msra.mxu0 0.0
    %332 = vmatprep.subr.mxu0 0.0
    %333 = vmatpush1.msra.mxu0 0.0
    %334 = vmatprep.subr.mxu0 0.0
    %335 = vmatpush1.msra.mxu0 0.0
    %336 = vmatprep.subr.mxu0 0.0
    %337 = vmatpush1.msra.mxu0 0.0
    %338 = vmatprep.subr.mxu0 0.0
    %339 = vmatpush1.msra.mxu0 0.0
    %340 = vmatprep.subr.mxu0 0.0
    %341 = vmatpush1.msra.mxu0 0.0
    %342 = vmatprep.subr.mxu0 0.0
    %343 = vmatpush1.msra.mxu0 0.0
    %344 = vmatprep.subr.mxu0 0.0
    %345 = vmatpush1.msra.mxu0 0.0
    %346 = vmatprep.subr.mxu0 0.0
    %347 = vmatpush1.msra.mxu0 0.0
    %348 = vmatprep.subr.mxu0 0.0
    %349 = vmatpush1.msra.mxu0 0.0
    %350 = vmatprep.subr.mxu0 0.0
    %351 = vmatpush1.msra.mxu0 0.0
    %352 = vmatprep.subr.mxu0 0.0
    %353 = vmatpush1.msra.mxu0 0.0
    %354 = vmatprep.subr.mxu0 0.0
    %355 = vmatpush1.msra.mxu0 0.0
    %356 = vmatprep.subr.mxu0 0.0
    %357 = vmatpush1.msra.mxu0 0.0
    %358 = vmatprep.subr.mxu0 0.0
    %359 = vmatpush1.msra.mxu0 0.0
    %360 = vmatprep.subr.mxu0 0.0
    %361 = vmatpush1.msra.mxu0 0.0
    %362 = vmatprep.subr.mxu0 0.0
    %363 = vmatpush1.msra.mxu0 0.0
    %364 = vmatprep.subr.mxu0 0.0
    %365 = vmatpush1.msra.mxu0 0.0
    %366 = vmatprep.subr.mxu0 0.0
    %367 = vmatpush1.msra.mxu0 0.0
    %368 = vmatprep.mubr.f32.mxu0 0.0
    %369 = vmatmul.mubr.f32.gmra.mrb[0].mxu0 %v296
    %v370 = vpop.f32.mrb[0].mxu0
    %v371 = vadd.f32 0.0, %v370
    %v372 = vpop.f32.mrb[0].mxu0
    %373 = vmatprep.mubr.f32.mxu0 0.0
    %374 = vmatmul.mubr.f32.gmra.mrb[0].mxu0 %v298
    %v375 = vpop.f32.mrb[0].mxu0
    %v376 = vadd.f32 0.0, %v375
    %v377 = vpop.f32.mrb[0].mxu0
    %378 = vmatprep.mubr.f32.mxu0 0.0
    %379 = vmatmul.mubr.f32.gmra.mrb[0].mxu0 %v300
    %v380 = vpop.f32.mrb[0].mxu0
    %v381 = vadd.f32 0.0, %v380
    %v382 = vpop.f32.mrb[0].mxu0
    %383 = vmatprep.mubr.f32.mxu0 0.0
    %384 = vmatmul.mubr.f32.gmra.mrb[0].mxu0 %v302
    %v385 = vpop.f32.mrb[0].mxu0
    %v386 = vadd.f32 0.0, %v385
    %v387 = vpop.f32.mrb[0].mxu0
    %388 = vdwg.mxu0
    %v389 = vadd.f32 %v290, %v371
    %v390 = vadd.f32 %v291, %v376
    %v391 = vadd.f32 %v292, %v381
    %v392 = vadd.f32 %v293, %v386
    %v393 = vmax.f32 %v389, 0.0
    %v394 = vmax.f32 %v390, 0.0
    %v395 = vmax.f32 %v391, 0.0
    %v396 = vmax.f32 %v392, 0.0
    %v397 = vld [vmem:[%s4] sm:$0x1]
    %v399 = vlaneseq
    %v400 = vshrl.u32 %v399, 7
    %v401 = vsub.s32 0, %v400
    %v402 = vrot.slane %v397, %v401
    %v404 = vadd.f32 %v402, 0.0
    %v405 = vsel %vm46, 0.0, %v396
    %v406 = vsel %vm47, 0.0, %v393
    %v407 = vsel %vm48, 0.0, %v394
    %v408 = vsel %vm49, 0.0, %v395
    %v409 = vld [vmem:[%s3] sm:$0xff]
    %v411 = vsel %vm55, %v405, 0
    %v414 = vsel %vm55, %v406, 0
    %v417 = vsel %vm55, %v407, 0
    %v420 = vsel %vm55, %v408, 0
    %422 = vmatprep.subr.mxu0 0.0
    %423 = vmatpush1.msra.mxu0 %v409
    %424 = vmatprep.subr.mxu0 0.0
    %425 = vmatpush1.msra.mxu0 0.0
    %426 = vmatprep.subr.mxu0 0.0
    %427 = vmatpush1.msra.mxu0 0.0
    %428 = vmatprep.subr.mxu0 0.0
    %429 = vmatpush1.msra.mxu0 0.0
    %430 = vmatprep.subr.mxu0 0.0
    %431 = vmatpush1.msra.mxu0 0.0
    %432 = vmatprep.subr.mxu0 0.0
    %433 = vmatpush1.msra.mxu0 0.0
    %434 = vmatprep.subr.mxu0 0.0
    %435 = vmatpush1.msra.mxu0 0.0
    %436 = vmatprep.subr.mxu0 0.0
    %437 = vmatpush1.msra.mxu0 0.0
    %438 = vmatprep.subr.mxu0 0.0
    %439 = vmatpush1.msra.mxu0 0.0
    %440 = vmatprep.subr.mxu0 0.0
    %441 = vmatpush1.msra.mxu0 0.0
    %442 = vmatprep.subr.mxu0 0.0
    %443 = vmatpush1.msra.mxu0 0.0
    %444 = vmatprep.subr.mxu0 0.0
    %445 = vmatpush1.msra.mxu0 0.0
    %446 = vmatprep.subr.mxu0 0.0
    %447 = vmatpush1.msra.mxu0 0.0
    %448 = vmatprep.subr.mxu0 0.0
    %449 = vmatpush1.msra.mxu0 0.0
    %450 = vmatprep.subr.mxu0 0.0
    %451 = vmatpush1.msra.mxu0 0.0
    %452 = vmatprep.subr.mxu0 0.0
    %453 = vmatpush1.msra.mxu0 0.0
    %454 = vmatprep.subr.mxu0 0.0
    %455 = vmatpush1.msra.mxu0 0.0
    %456 = vmatprep.subr.mxu0 0.0
    %457 = vmatpush1.msra.mxu0 0.0
    %458 = vmatprep.subr.mxu0 0.0
    %459 = vmatpush1.msra.mxu0 0.0
    %460 = vmatprep.subr.mxu0 0.0
    %461 = vmatpush1.msra.mxu0 0.0
    %462 = vmatprep.subr.mxu0 0.0
    %463 = vmatpush1.msra.mxu0 0.0
    %464 = vmatprep.subr.mxu0 0.0
    %465 = vmatpush1.msra.mxu0 0.0
    %466 = vmatprep.subr.mxu0 0.0
    %467 = vmatpush1.msra.mxu0 0.0
    %468 = vmatprep.subr.mxu0 0.0
    %469 = vmatpush1.msra.mxu0 0.0
    %470 = vmatprep.subr.mxu0 0.0
    %471 = vmatpush1.msra.mxu0 0.0
    %472 = vmatprep.subr.mxu0 0.0
    %473 = vmatpush1.msra.mxu0 0.0
    %474 = vmatprep.subr.mxu0 0.0
    %475 = vmatpush1.msra.mxu0 0.0
    %476 = vmatprep.subr.mxu0 0.0
    %477 = vmatpush1.msra.mxu0 0.0
    %478 = vmatprep.subr.mxu0 0.0
    %479 = vmatpush1.msra.mxu0 0.0
    %480 = vmatprep.subr.mxu0 0.0
    %481 = vmatpush1.msra.mxu0 0.0
    %482 = vmatprep.subr.mxu0 0.0
    %483 = vmatpush1.msra.mxu0 0.0
    %484 = vmatprep.subr.mxu0 0.0
    %485 = vmatpush1.msra.mxu0 0.0
    %486 = vmatprep.mubr.f32.mxu0 0.0
    %487 = vmatmul.mubr.f32.gmra.mrb[0].mxu0 %v411
    %v488 = vpop.f32.mrb[0].mxu0
    %v489 = vadd.f32 0.0, %v488
    %v490 = vpop.f32.mrb[0].mxu0
    %491 = vmatprep.mubr.f32.mxu0 0.0
    %492 = vmatmul.mubr.f32.gmra.mrb[0].mxu0 %v414
    %v493 = vpop.f32.mrb[0].mxu0
    %v494 = vadd.f32 0.0, %v493
    %v495 = vpop.f32.mrb[0].mxu0
    %496 = vmatprep.mubr.f32.mxu0 0.0
    %497 = vmatmul.mubr.f32.gmra.mrb[0].mxu0 %v417
    %v498 = vpop.f32.mrb[0].mxu0
    %v499 = vadd.f32 0.0, %v498
    %v500 = vpop.f32.mrb[0].mxu0
    %501 = vmatprep.mubr.f32.mxu0 0.0
    %502 = vmatmul.mubr.f32.gmra.mrb[0].mxu0 %v420
    %v503 = vpop.f32.mrb[0].mxu0
    %v504 = vadd.f32 0.0, %v503
    %v505 = vpop.f32.mrb[0].mxu0
    %506 = vdwg.mxu0
    %v507 = vadd.f32 %v404, %v489
    %v508 = vadd.f32 %v404, %v494
    %v509 = vadd.f32 %v404, %v499
    %v510 = vadd.f32 %v404, %v504
    %v512 = vrot.slane %v396, 4
    %v517 = vrot.slane %v393, 4
    %v518 = vrot.slane %v394, 4
    %v519 = vsel %vm167, %v517, %v518
    %v520 = vrot.slane %v395, 4
    %v521 = vsel %vm167, %v518, %v520
    %v522 = vsel %vm167, %v520, %v512
    %v527 = vsel %vm167, %v512, %v517
    %v528 = vsel %vm183, 0.0, %v527
    %v529 = vsel %vm184, 0.0, %v519
    %v530 = vsel %vm185, 0.0, %v521
    %v531 = vsel %vm186, 0.0, %v522
    %s532 = scalar_lea.vmem %s3, 8
    %v533 = vld [vmem:[%s532] sm:$0xff]
    %v535 = vsel %vm55, %v528, 0
    %v538 = vsel %vm55, %v529, 0
    %v541 = vsel %vm55, %v530, 0
    %v544 = vsel %vm55, %v531, 0
    %546 = vmatprep.subr.mxu0 0.0
    %547 = vmatpush1.msra.mxu0 %v533
    %548 = vmatprep.subr.mxu0 0.0
    %549 = vmatpush1.msra.mxu0 0.0
    %550 = vmatprep.subr.mxu0 0.0
    %551 = vmatpush1.msra.mxu0 0.0
    %552 = vmatprep.subr.mxu0 0.0
    %553 = vmatpush1.msra.mxu0 0.0
    %554 = vmatprep.subr.mxu0 0.0
    %555 = vmatpush1.msra.mxu0 0.0
    %556 = vmatprep.subr.mxu0 0.0
    %557 = vmatpush1.msra.mxu0 0.0
    %558 = vmatprep.subr.mxu0 0.0
    %559 = vmatpush1.msra.mxu0 0.0
    %560 = vmatprep.subr.mxu0 0.0
    %561 = vmatpush1.msra.mxu0 0.0
    %562 = vmatprep.subr.mxu0 0.0
    %563 = vmatpush1.msra.mxu0 0.0
    %564 = vmatprep.subr.mxu0 0.0
    %565 = vmatpush1.msra.mxu0 0.0
    %566 = vmatprep.subr.mxu0 0.0
    %567 = vmatpush1.msra.mxu0 0.0
    %568 = vmatprep.subr.mxu0 0.0
    %569 = vmatpush1.msra.mxu0 0.0
    %570 = vmatprep.subr.mxu0 0.0
    %571 = vmatpush1.msra.mxu0 0.0
    %572 = vmatprep.subr.mxu0 0.0
    %573 = vmatpush1.msra.mxu0 0.0
    %574 = vmatprep.subr.mxu0 0.0
    %575 = vmatpush1.msra.mxu0 0.0
    %576 = vmatprep.subr.mxu0 0.0
    %577 = vmatpush1.msra.mxu0 0.0
    %578 = vmatprep.subr.mxu0 0.0
    %579 = vmatpush1.msra.mxu0 0.0
    %580 = vmatprep.subr.mxu0 0.0
    %581 = vmatpush1.msra.mxu0 0.0
    %582 = vmatprep.subr.mxu0 0.0
    %583 = vmatpush1.msra.mxu0 0.0
    %584 = vmatprep.subr.mxu0 0.0
    %585 = vmatpush1.msra.mxu0 0.0
    %586 = vmatprep.subr.mxu0 0.0
    %587 = vmatpush1.msra.mxu0 0.0
    %588 = vmatprep.subr.mxu0 0.0
    %589 = vmatpush1.msra.mxu0 0.0
    %590 = vmatprep.subr.mxu0 0.0
    %591 = vmatpush1.msra.mxu0 0.0
    %592 = vmatprep.subr.mxu0 0.0
    %593 = vmatpush1.msra.mxu0 0.0
    %594 = vmatprep.subr.mxu0 0.0
    %595 = vmatpush1.msra.mxu0 0.0
    %596 = vmatprep.subr.mxu0 0.0
    %597 = vmatpush1.msra.mxu0 0.0
    %598 = vmatprep.subr.mxu0 0.0
    %599 = vmatpush1.msra.mxu0 0.0
    %600 = vmatprep.subr.mxu0 0.0
    %601 = vmatpush1.msra.mxu0 0.0
    %602 = vmatprep.subr.mxu0 0.0
    %603 = vmatpush1.msra.mxu0 0.0
    %604 = vmatprep.subr.mxu0 0.0
    %605 = vmatpush1.msra.mxu0 0.0
    %606 = vmatprep.subr.mxu0 0.0
    %607 = vmatpush1.msra.mxu0 0.0
    %608 = vmatprep.subr.mxu0 0.0
    %609 = vmatpush1.msra.mxu0 0.0
    %610 = vmatprep.mubr.f32.mxu0 0.0
    %611 = vmatmul.mubr.f32.gmra.mrb[0].mxu0 %v535
    %v612 = vpop.f32.mrb[0].mxu0
    %v613 = vadd.f32 0.0, %v612
    %v614 = vpop.f32.mrb[0].mxu0
    %615 = vmatprep.mubr.f32.mxu0 0.0
    %616 = vmatmul.mubr.f32.gmra.mrb[0].mxu0 %v538
    %v617 = vpop.f32.mrb[0].mxu0
    %v618 = vadd.f32 0.0, %v617
    %v619 = vpop.f32.mrb[0].mxu0
    %620 = vmatprep.mubr.f32.mxu0 0.0
    %621 = vmatmul.mubr.f32.gmra.mrb[0].mxu0 %v541
    %v622 = vpop.f32.mrb[0].mxu0
    %v623 = vadd.f32 0.0, %v622
    %v624 = vpop.f32.mrb[0].mxu0
    %625 = vmatprep.mubr.f32.mxu0 0.0
    %626 = vmatmul.mubr.f32.gmra.mrb[0].mxu0 %v544
    %v627 = vpop.f32.mrb[0].mxu0
    %v628 = vadd.f32 0.0, %v627
    %v629 = vpop.f32.mrb[0].mxu0
    %630 = vdwg.mxu0
    %v631 = vadd.f32 %v507, %v613
    %v632 = vadd.f32 %v508, %v618
    %v633 = vadd.f32 %v509, %v623
    %v634 = vadd.f32 %v510, %v628
    %s635 = scalar_lea.vmem %s3, 16
    %v636 = vld [vmem:[%s635] sm:$0xff]
    %v637 = vsel %vm55, %v393, 0
    %v639 = vsel %vm55, %v394, 0
    %v641 = vsel %vm55, %v395, 0
    %v643 = vsel %vm55, %v396, 0
    %645 = vmatprep.subr.mxu0 0.0
    %646 = vmatpush1.msra.mxu0 %v636
    %647 = vmatprep.subr.mxu0 0.0
    %648 = vmatpush1.msra.mxu0 0.0
    %649 = vmatprep.subr.mxu0 0.0
    %650 = vmatpush1.msra.mxu0 0.0
    %651 = vmatprep.subr.mxu0 0.0
    %652 = vmatpush1.msra.mxu0 0.0
    %653 = vmatprep.subr.mxu0 0.0
    %654 = vmatpush1.msra.mxu0 0.0
    %655 = vmatprep.subr.mxu0 0.0
    %656 = vmatpush1.msra.mxu0 0.0
    %657 = vmatprep.subr.mxu0 0.0
    %658 = vmatpush1.msra.mxu0 0.0
    %659 = vmatprep.subr.mxu0 0.0
    %660 = vmatpush1.msra.mxu0 0.0
    %661 = vmatprep.subr.mxu0 0.0
    %662 = vmatpush1.msra.mxu0 0.0
    %663 = vmatprep.subr.mxu0 0.0
    %664 = vmatpush1.msra.mxu0 0.0
    %665 = vmatprep.subr.mxu0 0.0
    %666 = vmatpush1.msra.mxu0 0.0
    %667 = vmatprep.subr.mxu0 0.0
    %668 = vmatpush1.msra.mxu0 0.0
    %669 = vmatprep.subr.mxu0 0.0
    %670 = vmatpush1.msra.mxu0 0.0
    %671 = vmatprep.subr.mxu0 0.0
    %672 = vmatpush1.msra.mxu0 0.0
    %673 = vmatprep.subr.mxu0 0.0
    %674 = vmatpush1.msra.mxu0 0.0
    %675 = vmatprep.subr.mxu0 0.0
    %676 = vmatpush1.msra.mxu0 0.0
    %677 = vmatprep.subr.mxu0 0.0
    %678 = vmatpush1.msra.mxu0 0.0
    %679 = vmatprep.subr.mxu0 0.0
    %680 = vmatpush1.msra.mxu0 0.0
    %681 = vmatprep.subr.mxu0 0.0
    %682 = vmatpush1.msra.mxu0 0.0
    %683 = vmatprep.subr.mxu0 0.0
    %684 = vmatpush1.msra.mxu0 0.0
    %685 = vmatprep.subr.mxu0 0.0
    %686 = vmatpush1.msra.mxu0 0.0
    %687 = vmatprep.subr.mxu0 0.0
    %688 = vmatpush1.msra.mxu0 0.0
    %689 = vmatprep.subr.mxu0 0.0
    %690 = vmatpush1.msra.mxu0 0.0
    %691 = vmatprep.subr.mxu0 0.0
    %692 = vmatpush1.msra.mxu0 0.0
    %693 = vmatprep.subr.mxu0 0.0
    %694 = vmatpush1.msra.mxu0 0.0
    %695 = vmatprep.subr.mxu0 0.0
    %696 = vmatpush1.msra.mxu0 0.0
    %697 = vmatprep.subr.mxu0 0.0
    %698 = vmatpush1.msra.mxu0 0.0
    %699 = vmatprep.subr.mxu0 0.0
    %700 = vmatpush1.msra.mxu0 0.0
    %701 = vmatprep.subr.mxu0 0.0
    %702 = vmatpush1.msra.mxu0 0.0
    %703 = vmatprep.subr.mxu0 0.0
    %704 = vmatpush1.msra.mxu0 0.0
    %705 = vmatprep.subr.mxu0 0.0
    %706 = vmatpush1.msra.mxu0 0.0
    %707 = vmatprep.subr.mxu0 0.0
    %708 = vmatpush1.msra.mxu0 0.0
    %709 = vmatprep.mubr.f32.mxu0 0.0
    %710 = vmatmul.mubr.f32.gmra.mrb[0].mxu0 %v637
    %v711 = vpop.f32.mrb[0].mxu0
    %v712 = vadd.f32 0.0, %v711
    %v713 = vpop.f32.mrb[0].mxu0
    %714 = vmatprep.mubr.f32.mxu0 0.0
    %715 = vmatmul.mubr.f32.gmra.mrb[0].mxu0 %v639
    %v716 = vpop.f32.mrb[0].mxu0
    %v717 = vadd.f32 0.0, %v716
    %v718 = vpop.f32.mrb[0].mxu0
    %719 = vmatprep.mubr.f32.mxu0 0.0
    %720 = vmatmul.mubr.f32.gmra.mrb[0].mxu0 %v641
    %v721 = vpop.f32.mrb[0].mxu0
    %v722 = vadd.f32 0.0, %v721
    %v723 = vpop.f32.mrb[0].mxu0
    %724 = vmatprep.mubr.f32.mxu0 0.0
    %725 = vmatmul.mubr.f32.gmra.mrb[0].mxu0 %v643
    %v726 = vpop.f32.mrb[0].mxu0
    %v727 = vadd.f32 0.0, %v726
    %v728 = vpop.f32.mrb[0].mxu0
    %729 = vdwg.mxu0
    %v730 = vadd.f32 %v631, %v712
    %v731 = vadd.f32 %v632, %v717
    %v732 = vadd.f32 %v633, %v722
    %v733 = vadd.f32 %v634, %v727
    %v734 = vmax.f32 %v730, 0.0
    %v735 = vmax.f32 %v731, 0.0
    %v736 = vmax.f32 %v732, 0.0
    %v737 = vmax.f32 %v733, 0.0
    %v738 = vadd.f32 %v734, %v21
    %v739 = vadd.f32 %v735, %v22
    %v740 = vadd.f32 %v736, %v23
    %v741 = vadd.f32 %v737, %v24
    %v742 = vmax.f32 %v738, 0.0
    %v743 = vmax.f32 %v739, 0.0
    %v744 = vmax.f32 %v740, 0.0
    %v745 = vmax.f32 %v741, 0.0
    %746 = vst.msk [vmem:[#allocation2] sm:$0xff] %vm55, %v742
    %747 = vst.msk [vmem:[#allocation2 + $0x8] sm:$0xff] %vm55, %v743
    %748 = vst.msk [vmem:[#allocation2 + $0x10] sm:$0xff] %vm55, %v744
    %749 = vst.msk [vmem:[#allocation2 + $0x18] sm:$0xff] %vm55, %v745
    // Predicated region
    $region22: #{branch_3_fun.2} parent=1 // pred_check
      _
    $region23: #{branch_3_fun.2} parent=1 // pred_check_branch
      %751 = sbr.rel (0) target = $region25
    $region24: #{branch_3_fun.2} parent=1 // pred_region
      %s753 = ssub.s32 512, 512
      %754 = vsyncadd [#allocation3], %s753
      %s755 = sshll.u32 [#allocation2], 4
      %s756 = int_to_ptr.vmem [resolvable:$true] %s755
      %761 = dma.vmem_to_hbm [thread:$0]  %s756, 512, %s5, [#allocation3], 128, 128, 8
    $region25: #{branch_3_fun.2} parent=1 // pred_fallthru
      _
    // Predicated region
    $region26: #{branch_3_fun.2} parent=1 // pred_check
      _
    $region27: #{branch_3_fun.2} parent=1 // pred_check_branch
      %763 = sbr.rel (0) target = $region29
    $region28: #{branch_3_fun.2} parent=1 // pred_region
      %764 = dma.done [#allocation3], 512
    $region29: #{branch_3_fun.2} parent=1 // pred_fallthru
      _
    %765 = vsyncpa [#allocation3], 1

// kernel: branch_2_fun.2
$region0: #{branch_2_fun.2}
  #allocation0 [shape = 'u32[]', space=smem, size = 0x4, offset = 0x4, fixed_abs, tag = 'smem constant byte address 0x4 - core index']
  #allocation1 [shape = 'u32[144,128]{1,0:T(1,128)}', space=vmem, size = 0x12000, scoped, tag = 'internal scratch']
  %s0 = inlined_call_operand.vmem [shape: f32[32,8], index: 0, kind: input, shape index: {}]
  %s1 = inlined_call_operand.vmem [shape: f32[2,8,8], index: 1, kind: input, shape index: {}]
  %s2 = inlined_call_operand.vmem [shape: f32[1,8], index: 2, kind: input, shape index: {}, may-alias: {2,4}]
  %s3 = inlined_call_operand.vmem [shape: f32[2,8,8], index: 3, kind: input, shape index: {}]
  %s4 = inlined_call_operand.vmem [shape: f32[1,8], index: 4, kind: input, shape index: {}, may-alias: {2,4}]
  %s5 = inlined_call_operand.hbm [shape: f32[32,8], index: 5, kind: output, shape index: {}]
  %s6 = sld [smem:[#allocation0]]
  $region30: #{branch_2_fun.2} parent=0
    _
  %s8 = ssub.s32 1, %s6
  %s9 = scalar_select 0, %s8, %s6
  $region1: #{branch_2_fun.2} parent=0
    #allocation2 [shape = 'u8[16384]{0}', space=vmem, size = 0x4000, scoped, tag = 'output window, operand 0, single buffered']
    #allocation3 [shape = 's32[1]{0}', space=sflag, size = 0x4, scoped, tag = 'scoped memory for branch_2_fun.2']
    %10 = vsyncpa [#allocation3], 0
    // Predicated region
    $region2: #{branch_2_fun.2} parent=1 // pred_check
      _
    $region3: #{branch_2_fun.2} parent=1 // pred_check_branch
      %12 = sbr.rel (0) target = $region5
    $region4: #{branch_2_fun.2} parent=1 // pred_region
      _
    $region5: #{branch_2_fun.2} parent=1 // pred_fallthru
      _
    // Predicated region
    $region6: #{branch_2_fun.2} parent=1 // pred_check
      _
    $region7: #{branch_2_fun.2} parent=1 // pred_check_branch
      %14 = sbr.rel (0) target = $region9
    $region8: #{branch_2_fun.2} parent=1 // pred_region
      _
    $region9: #{branch_2_fun.2} parent=1 // pred_fallthru
      _
    // Predicated region
    $region10: #{branch_2_fun.2} parent=1 // pred_check
      _
    $region11: #{branch_2_fun.2} parent=1 // pred_check_branch
      %16 = sbr.rel (0) target = $region13
    $region12: #{branch_2_fun.2} parent=1 // pred_region
      _
    $region13: #{branch_2_fun.2} parent=1 // pred_fallthru
      _
    // Predicated region
    $region14: #{branch_2_fun.2} parent=1 // pred_check
      _
    $region15: #{branch_2_fun.2} parent=1 // pred_check_branch
      %18 = sbr.rel (0) target = $region17
    $region16: #{branch_2_fun.2} parent=1 // pred_region
      _
    $region17: #{branch_2_fun.2} parent=1 // pred_fallthru
      _
    // Predicated region
    $region18: #{branch_2_fun.2} parent=1 // pred_check
      _
    $region19: #{branch_2_fun.2} parent=1 // pred_check_branch
      %20 = sbr.rel (0) target = $region21
    $region20: #{branch_2_fun.2} parent=1 // pred_region
      _
    $region21: #{branch_2_fun.2} parent=1 // pred_fallthru
      _
    %v21 = vld [vmem:[%s0] sm:$0xff]
    %v22 = vld [vmem:[%s0 + $0x8] sm:$0xff]
    %v23 = vld [vmem:[%s0 + $0x10] sm:$0xff]
    %v24 = vld [vmem:[%s0 + $0x18] sm:$0xff]
    %v25 = vlaneseq
    %v26 = vshrl.u32 %v25, 7
    %v27 = vadd.s32 %v26, 8
    %v28 = vadd.s32 %v26, 16
    %v29 = vadd.s32 %v26, 24
    %v30 = vld [vmem:[%s2] sm:$0x1]
    %v32 = vlaneseq
    %v33 = vshrl.u32 %v32, 7
    %v34 = vsub.s32 0, %v33
    %v35 = vrot.slane %v30, %v34
    %v37 = vadd.f32 %v35, 0.0
    %vm38 = vcmp.lt.s32.totalorder %v26, 4
    %vm39 = vcmp.lt.s32.totalorder %v27, 4
    %vm40 = vcmp.lt.s32.totalorder %v28, 4
    %vm41 = vcmp.lt.s32.totalorder %v29, 4
    %v43 = vrot.slane %v24, 4
    %vm48 = vcmask 1043456
    %v49 = vrot.slane %v21, 4
    %v50 = vrot.slane %v22, 4
    %v51 = vsel %vm48, %v49, %v50
    %v52 = vrot.slane %v23, 4
    %v53 = vsel %vm48, %v50, %v52
    %v54 = vsel %vm48, %v52, %v43
    %v59 = vsel %vm48, %v43, %v49
    %v60 = vsel %vm38, 1, 0
    %v61 = vsel %vm39, 1, 0
    %v62 = vsel %vm40, 1, 0
    %v63 = vsel %vm41, 1, 0
    %vm64 = vcmp.eq.s32.totalorder %v60, 1
    %vm65 = vcmp.eq.s32.totalorder %v61, 1
    %vm66 = vcmp.eq.s32.totalorder %v62, 1
    %vm67 = vcmp.eq.s32.totalorder %v63, 1
    %v68 = vsel %vm64, 0.0, %v59
    %v69 = vsel %vm65, 0.0, %v51
    %v70 = vsel %vm66, 0.0, %v53
    %v71 = vsel %vm67, 0.0, %v54
    %v72 = vld [vmem:[%s1] sm:$0xff]
    %vm73 = vcmask 64512
    %v75 = vsel %vm73, %v68, 0
    %v78 = vsel %vm73, %v69, 0
    %v81 = vsel %vm73, %v70, 0
    %v84 = vsel %vm73, %v71, 0
    %86 = vmatprep.subr.mxu0 0.0
    %87 = vmatpush1.msra.mxu0 %v72
    %88 = vmatprep.subr.mxu0 0.0
    %89 = vmatpush1.msra.mxu0 0.0
    %90 = vmatprep.subr.mxu0 0.0
    %91 = vmatpush1.msra.mxu0 0.0
    %92 = vmatprep.subr.mxu0 0.0
    %93 = vmatpush1.msra.mxu0 0.0
    %94 = vmatprep.subr.mxu0 0.0
    %95 = vmatpush1.msra.mxu0 0.0
    %96 = vmatprep.subr.mxu0 0.0
    %97 = vmatpush1.msra.mxu0 0.0
    %98 = vmatprep.subr.mxu0 0.0
    %99 = vmatpush1.msra.mxu0 0.0
    %100 = vmatprep.subr.mxu0 0.0
    %101 = vmatpush1.msra.mxu0 0.0
    %102 = vmatprep.subr.mxu0 0.0
    %103 = vmatpush1.msra.mxu0 0.0
    %104 = vmatprep.subr.mxu0 0.0
    %105 = vmatpush1.msra.mxu0 0.0
    %106 = vmatprep.subr.mxu0 0.0
    %107 = vmatpush1.msra.mxu0 0.0
    %108 = vmatprep.subr.mxu0 0.0
    %109 = vmatpush1.msra.mxu0 0.0
    %110 = vmatprep.subr.mxu0 0.0
    %111 = vmatpush1.msra.mxu0 0.0
    %112 = vmatprep.subr.mxu0 0.0
    %113 = vmatpush1.msra.mxu0 0.0
    %114 = vmatprep.subr.mxu0 0.0
    %115 = vmatpush1.msra.mxu0 0.0
    %116 = vmatprep.subr.mxu0 0.0
    %117 = vmatpush1.msra.mxu0 0.0
    %118 = vmatprep.subr.mxu0 0.0
    %119 = vmatpush1.msra.mxu0 0.0
    %120 = vmatprep.subr.mxu0 0.0
    %121 = vmatpush1.msra.mxu0 0.0
    %122 = vmatprep.subr.mxu0 0.0
    %123 = vmatpush1.msra.mxu0 0.0
    %124 = vmatprep.subr.mxu0 0.0
    %125 = vmatpush1.msra.mxu0 0.0
    %126 = vmatprep.subr.mxu0 0.0
    %127 = vmatpush1.msra.mxu0 0.0
    %128 = vmatprep.subr.mxu0 0.0
    %129 = vmatpush1.msra.mxu0 0.0
    %130 = vmatprep.subr.mxu0 0.0
    %131 = vmatpush1.msra.mxu0 0.0
    %132 = vmatprep.subr.mxu0 0.0
    %133 = vmatpush1.msra.mxu0 0.0
    %134 = vmatprep.subr.mxu0 0.0
    %135 = vmatpush1.msra.mxu0 0.0
    %136 = vmatprep.subr.mxu0 0.0
    %137 = vmatpush1.msra.mxu0 0.0
    %138 = vmatprep.subr.mxu0 0.0
    %139 = vmatpush1.msra.mxu0 0.0
    %140 = vmatprep.subr.mxu0 0.0
    %141 = vmatpush1.msra.mxu0 0.0
    %142 = vmatprep.subr.mxu0 0.0
    %143 = vmatpush1.msra.mxu0 0.0
    %144 = vmatprep.subr.mxu0 0.0
    %145 = vmatpush1.msra.mxu0 0.0
    %146 = vmatprep.subr.mxu0 0.0
    %147 = vmatpush1.msra.mxu0 0.0
    %148 = vmatprep.subr.mxu0 0.0
    %149 = vmatpush1.msra.mxu0 0.0
    %150 = vmatprep.mubr.f32.mxu0 0.0
    %151 = vmatmul.mubr.f32.gmra.mrb[0].mxu0 %v75
    %v152 = vpop.f32.mrb[0].mxu0
    %v153 = vadd.f32 0.0, %v152
    %v154 = vpop.f32.mrb[0].mxu0
    %155 = vmatprep.mubr.f32.mxu0 0.0
    %156 = vmatmul.mubr.f32.gmra.mrb[0].mxu0 %v78
    %v157 = vpop.f32.mrb[0].mxu0
    %v158 = vadd.f32 0.0, %v157
    %v159 = vpop.f32.mrb[0].mxu0
    %160 = vmatprep.mubr.f32.mxu0 0.0
    %161 = vmatmul.mubr.f32.gmra.mrb[0].mxu0 %v81
    %v162 = vpop.f32.mrb[0].mxu0
    %v163 = vadd.f32 0.0, %v162
    %v164 = vpop.f32.mrb[0].mxu0
    %165 = vmatprep.mubr.f32.mxu0 0.0
    %166 = vmatmul.mubr.f32.gmra.mrb[0].mxu0 %v84
    %v167 = vpop.f32.mrb[0].mxu0
    %v168 = vadd.f32 0.0, %v167
    %v169 = vpop.f32.mrb[0].mxu0
    %170 = vdwg.mxu0
    %v171 = vadd.f32 %v37, %v153
    %v172 = vadd.f32 %v37, %v158
    %v173 = vadd.f32 %v37, %v163
    %v174 = vadd.f32 %v37, %v168
    %s175 = scalar_lea.vmem %s1, 8
    %v176 = vld [vmem:[%s175] sm:$0xff]
    %v177 = vsel %vm73, %v21, 0
    %v179 = vsel %vm73, %v22, 0
    %v181 = vsel %vm73, %v23, 0
    %v183 = vsel %vm73, %v24, 0
    %185 = vmatprep.subr.mxu0 0.0
    %186 = vmatpush1.msra.mxu0 %v176
    %187 = vmatprep.subr.mxu0 0.0
    %188 = vmatpush1.msra.mxu0 0.0
    %189 = vmatprep.subr.mxu0 0.0
    %190 = vmatpush1.msra.mxu0 0.0
    %191 = vmatprep.subr.mxu0 0.0
    %192 = vmatpush1.msra.mxu0 0.0
    %193 = vmatprep.subr.mxu0 0.0
    %194 = vmatpush1.msra.mxu0 0.0
    %195 = vmatprep.subr.mxu0 0.0
    %196 = vmatpush1.msra.mxu0 0.0
    %197 = vmatprep.subr.mxu0 0.0
    %198 = vmatpush1.msra.mxu0 0.0
    %199 = vmatprep.subr.mxu0 0.0
    %200 = vmatpush1.msra.mxu0 0.0
    %201 = vmatprep.subr.mxu0 0.0
    %202 = vmatpush1.msra.mxu0 0.0
    %203 = vmatprep.subr.mxu0 0.0
    %204 = vmatpush1.msra.mxu0 0.0
    %205 = vmatprep.subr.mxu0 0.0
    %206 = vmatpush1.msra.mxu0 0.0
    %207 = vmatprep.subr.mxu0 0.0
    %208 = vmatpush1.msra.mxu0 0.0
    %209 = vmatprep.subr.mxu0 0.0
    %210 = vmatpush1.msra.mxu0 0.0
    %211 = vmatprep.subr.mxu0 0.0
    %212 = vmatpush1.msra.mxu0 0.0
    %213 = vmatprep.subr.mxu0 0.0
    %214 = vmatpush1.msra.mxu0 0.0
    %215 = vmatprep.subr.mxu0 0.0
    %216 = vmatpush1.msra.mxu0 0.0
    %217 = vmatprep.subr.mxu0 0.0
    %218 = vmatpush1.msra.mxu0 0.0
    %219 = vmatprep.subr.mxu0 0.0
    %220 = vmatpush1.msra.mxu0 0.0
    %221 = vmatprep.subr.mxu0 0.0
    %222 = vmatpush1.msra.mxu0 0.0
    %223 = vmatprep.subr.mxu0 0.0
    %224 = vmatpush1.msra.mxu0 0.0
    %225 = vmatprep.subr.mxu0 0.0
    %226 = vmatpush1.msra.mxu0 0.0
    %227 = vmatprep.subr.mxu0 0.0
    %228 = vmatpush1.msra.mxu0 0.0
    %229 = vmatprep.subr.mxu0 0.0
    %230 = vmatpush1.msra.mxu0 0.0
    %231 = vmatprep.subr.mxu0 0.0
    %232 = vmatpush1.msra.mxu0 0.0
    %233 = vmatprep.subr.mxu0 0.0
    %234 = vmatpush1.msra.mxu0 0.0
    %235 = vmatprep.subr.mxu0 0.0
    %236 = vmatpush1.msra.mxu0 0.0
    %237 = vmatprep.subr.mxu0 0.0
    %238 = vmatpush1.msra.mxu0 0.0
    %239 = vmatprep.subr.mxu0 0.0
    %240 = vmatpush1.msra.mxu0 0.0
    %241 = vmatprep.subr.mxu0 0.0
    %242 = vmatpush1.msra.mxu0 0.0
    %243 = vmatprep.subr.mxu0 0.0
    %244 = vmatpush1.msra.mxu0 0.0
    %245 = vmatprep.subr.mxu0 0.0
    %246 = vmatpush1.msra.mxu0 0.0
    %247 = vmatprep.subr.mxu0 0.0
    %248 = vmatpush1.msra.mxu0 0.0
    %249 = vmatprep.mubr.f32.mxu0 0.0
    %250 = vmatmul.mubr.f32.gmra.mrb[0].mxu0 %v177
    %v251 = vpop.f32.mrb[0].mxu0
    %v252 = vadd.f32 0.0, %v251
    %v253 = vpop.f32.mrb[0].mxu0
    %254 = vmatprep.mubr.f32.mxu0 0.0
    %255 = vmatmul.mubr.f32.gmra.mrb[0].mxu0 %v179
    %v256 = vpop.f32.mrb[0].mxu0
    %v257 = vadd.f32 0.0, %v256
    %v258 = vpop.f32.mrb[0].mxu0
    %259 = vmatprep.mubr.f32.mxu0 0.0
    %260 = vmatmul.mubr.f32.gmra.mrb[0].mxu0 %v181
    %v261 = vpop.f32.mrb[0].mxu0
    %v262 = vadd.f32 0.0, %v261
    %v263 = vpop.f32.mrb[0].mxu0
    %264 = vmatprep.mubr.f32.mxu0 0.0
    %265 = vmatmul.mubr.f32.gmra.mrb[0].mxu0 %v183
    %v266 = vpop.f32.mrb[0].mxu0
    %v267 = vadd.f32 0.0, %v266
    %v268 = vpop.f32.mrb[0].mxu0
    %269 = vdwg.mxu0
    %v270 = vadd.f32 %v171, %v252
    %v271 = vadd.f32 %v172, %v257
    %v272 = vadd.f32 %v173, %v262
    %v273 = vadd.f32 %v174, %v267
    %v274 = vmax.f32 %v270, 0.0
    %v275 = vmax.f32 %v271, 0.0
    %v276 = vmax.f32 %v272, 0.0
    %v277 = vmax.f32 %v273, 0.0
    %v278 = vld [vmem:[%s4] sm:$0x1]
    %v280 = vlaneseq
    %v281 = vshrl.u32 %v280, 7
    %v282 = vsub.s32 0, %v281
    %v283 = vrot.slane %v278, %v282
    %v285 = vadd.f32 %v283, 0.0
    %v287 = vrot.slane %v277, 4
    %v292 = vrot.slane %v274, 4
    %v293 = vrot.slane %v275, 4
    %v294 = vsel %vm48, %v292, %v293
    %v295 = vrot.slane %v276, 4
    %v296 = vsel %vm48, %v293, %v295
    %v297 = vsel %vm48, %v295, %v287
    %v302 = vsel %vm48, %v287, %v292
    %v303 = vsel %vm64, 0.0, %v302
    %v304 = vsel %vm65, 0.0, %v294
    %v305 = vsel %vm66, 0.0, %v296
    %v306 = vsel %vm67, 0.0, %v297
    %v307 = vld [vmem:[%s3] sm:$0xff]
    %v309 = vsel %vm73, %v303, 0
    %v312 = vsel %vm73, %v304, 0
    %v315 = vsel %vm73, %v305, 0
    %v318 = vsel %vm73, %v306, 0
    %320 = vmatprep.subr.mxu0 0.0
    %321 = vmatpush1.msra.mxu0 %v307
    %322 = vmatprep.subr.mxu0 0.0
    %323 = vmatpush1.msra.mxu0 0.0
    %324 = vmatprep.subr.mxu0 0.0
    %325 = vmatpush1.msra.mxu0 0.0
    %326 = vmatprep.subr.mxu0 0.0
    %327 = vmatpush1.msra.mxu0 0.0
    %328 = vmatprep.subr.mxu0 0.0
    %329 = vmatpush1.msra.mxu0 0.0
    %330 = vmatprep.subr.mxu0 0.0
    %331 = vmatpush1.msra.mxu0 0.0
    %332 = vmatprep.subr.mxu0 0.0
    %333 = vmatpush1.msra.mxu0 0.0
    %334 = vmatprep.subr.mxu0 0.0
    %335 = vmatpush1.msra.mxu0 0.0
    %336 = vmatprep.subr.mxu0 0.0
    %337 = vmatpush1.msra.mxu0 0.0
    %338 = vmatprep.subr.mxu0 0.0
    %339 = vmatpush1.msra.mxu0 0.0
    %340 = vmatprep.subr.mxu0 0.0
    %341 = vmatpush1.msra.mxu0 0.0
    %342 = vmatprep.subr.mxu0 0.0
    %343 = vmatpush1.msra.mxu0 0.0
    %344 = vmatprep.subr.mxu0 0.0
    %345 = vmatpush1.msra.mxu0 0.0
    %346 = vmatprep.subr.mxu0 0.0
    %347 = vmatpush1.msra.mxu0 0.0
    %348 = vmatprep.subr.mxu0 0.0
    %349 = vmatpush1.msra.mxu0 0.0
    %350 = vmatprep.subr.mxu0 0.0
    %351 = vmatpush1.msra.mxu0 0.0
    %352 = vmatprep.subr.mxu0 0.0
    %353 = vmatpush1.msra.mxu0 0.0
    %354 = vmatprep.subr.mxu0 0.0
    %355 = vmatpush1.msra.mxu0 0.0
    %356 = vmatprep.subr.mxu0 0.0
    %357 = vmatpush1.msra.mxu0 0.0
    %358 = vmatprep.subr.mxu0 0.0
    %359 = vmatpush1.msra.mxu0 0.0
    %360 = vmatprep.subr.mxu0 0.0
    %361 = vmatpush1.msra.mxu0 0.0
    %362 = vmatprep.subr.mxu0 0.0
    %363 = vmatpush1.msra.mxu0 0.0
    %364 = vmatprep.subr.mxu0 0.0
    %365 = vmatpush1.msra.mxu0 0.0
    %366 = vmatprep.subr.mxu0 0.0
    %367 = vmatpush1.msra.mxu0 0.0
    %368 = vmatprep.subr.mxu0 0.0
    %369 = vmatpush1.msra.mxu0 0.0
    %370 = vmatprep.subr.mxu0 0.0
    %371 = vmatpush1.msra.mxu0 0.0
    %372 = vmatprep.subr.mxu0 0.0
    %373 = vmatpush1.msra.mxu0 0.0
    %374 = vmatprep.subr.mxu0 0.0
    %375 = vmatpush1.msra.mxu0 0.0
    %376 = vmatprep.subr.mxu0 0.0
    %377 = vmatpush1.msra.mxu0 0.0
    %378 = vmatprep.subr.mxu0 0.0
    %379 = vmatpush1.msra.mxu0 0.0
    %380 = vmatprep.subr.mxu0 0.0
    %381 = vmatpush1.msra.mxu0 0.0
    %382 = vmatprep.subr.mxu0 0.0
    %383 = vmatpush1.msra.mxu0 0.0
    %384 = vmatprep.mubr.f32.mxu0 0.0
    %385 = vmatmul.mubr.f32.gmra.mrb[0].mxu0 %v309
    %v386 = vpop.f32.mrb[0].mxu0
    %v387 = vadd.f32 0.0, %v386
    %v388 = vpop.f32.mrb[0].mxu0
    %389 = vmatprep.mubr.f32.mxu0 0.0
    %390 = vmatmul.mubr.f32.gmra.mrb[0].mxu0 %v312
    %v391 = vpop.f32.mrb[0].mxu0
    %v392 = vadd.f32 0.0, %v391
    %v393 = vpop.f32.mrb[0].mxu0
    %394 = vmatprep.mubr.f32.mxu0 0.0
    %395 = vmatmul.mubr.f32.gmra.mrb[0].mxu0 %v315
    %v396 = vpop.f32.mrb[0].mxu0
    %v397 = vadd.f32 0.0, %v396
    %v398 = vpop.f32.mrb[0].mxu0
    %399 = vmatprep.mubr.f32.mxu0 0.0
    %400 = vmatmul.mubr.f32.gmra.mrb[0].mxu0 %v318
    %v401 = vpop.f32.mrb[0].mxu0
    %v402 = vadd.f32 0.0, %v401
    %v403 = vpop.f32.mrb[0].mxu0
    %404 = vdwg.mxu0
    %v405 = vadd.f32 %v285, %v387
    %v406 = vadd.f32 %v285, %v392
    %v407 = vadd.f32 %v285, %v397
    %v408 = vadd.f32 %v285, %v402
    %s409 = scalar_lea.vmem %s3, 8
    %v410 = vld [vmem:[%s409] sm:$0xff]
    %v411 = vsel %vm73, %v274, 0
    %v413 = vsel %vm73, %v275, 0
    %v415 = vsel %vm73, %v276, 0
    %v417 = vsel %vm73, %v277, 0
    %419 = vmatprep.subr.mxu0 0.0
    %420 = vmatpush1.msra.mxu0 %v410
    %421 = vmatprep.subr.mxu0 0.0
    %422 = vmatpush1.msra.mxu0 0.0
    %423 = vmatprep.subr.mxu0 0.0
    %424 = vmatpush1.msra.mxu0 0.0
    %425 = vmatprep.subr.mxu0 0.0
    %426 = vmatpush1.msra.mxu0 0.0
    %427 = vmatprep.subr.mxu0 0.0
    %428 = vmatpush1.msra.mxu0 0.0
    %429 = vmatprep.subr.mxu0 0.0
    %430 = vmatpush1.msra.mxu0 0.0
    %431 = vmatprep.subr.mxu0 0.0
    %432 = vmatpush1.msra.mxu0 0.0
    %433 = vmatprep.subr.mxu0 0.0
    %434 = vmatpush1.msra.mxu0 0.0
    %435 = vmatprep.subr.mxu0 0.0
    %436 = vmatpush1.msra.mxu0 0.0
    %437 = vmatprep.subr.mxu0 0.0
    %438 = vmatpush1.msra.mxu0 0.0
    %439 = vmatprep.subr.mxu0 0.0
    %440 = vmatpush1.msra.mxu0 0.0
    %441 = vmatprep.subr.mxu0 0.0
    %442 = vmatpush1.msra.mxu0 0.0
    %443 = vmatprep.subr.mxu0 0.0
    %444 = vmatpush1.msra.mxu0 0.0
    %445 = vmatprep.subr.mxu0 0.0
    %446 = vmatpush1.msra.mxu0 0.0
    %447 = vmatprep.subr.mxu0 0.0
    %448 = vmatpush1.msra.mxu0 0.0
    %449 = vmatprep.subr.mxu0 0.0
    %450 = vmatpush1.msra.mxu0 0.0
    %451 = vmatprep.subr.mxu0 0.0
    %452 = vmatpush1.msra.mxu0 0.0
    %453 = vmatprep.subr.mxu0 0.0
    %454 = vmatpush1.msra.mxu0 0.0
    %455 = vmatprep.subr.mxu0 0.0
    %456 = vmatpush1.msra.mxu0 0.0
    %457 = vmatprep.subr.mxu0 0.0
    %458 = vmatpush1.msra.mxu0 0.0
    %459 = vmatprep.subr.mxu0 0.0
    %460 = vmatpush1.msra.mxu0 0.0
    %461 = vmatprep.subr.mxu0 0.0
    %462 = vmatpush1.msra.mxu0 0.0
    %463 = vmatprep.subr.mxu0 0.0
    %464 = vmatpush1.msra.mxu0 0.0
    %465 = vmatprep.subr.mxu0 0.0
    %466 = vmatpush1.msra.mxu0 0.0
    %467 = vmatprep.subr.mxu0 0.0
    %468 = vmatpush1.msra.mxu0 0.0
    %469 = vmatprep.subr.mxu0 0.0
    %470 = vmatpush1.msra.mxu0 0.0
    %471 = vmatprep.subr.mxu0 0.0
    %472 = vmatpush1.msra.mxu0 0.0
    %473 = vmatprep.subr.mxu0 0.0
    %474 = vmatpush1.msra.mxu0 0.0
    %475 = vmatprep.subr.mxu0 0.0
    %476 = vmatpush1.msra.mxu0 0.0
    %477 = vmatprep.subr.mxu0 0.0
    %478 = vmatpush1.msra.mxu0 0.0
    %479 = vmatprep.subr.mxu0 0.0
    %480 = vmatpush1.msra.mxu0 0.0
    %481 = vmatprep.subr.mxu0 0.0
    %482 = vmatpush1.msra.mxu0 0.0
    %483 = vmatprep.mubr.f32.mxu0 0.0
    %484 = vmatmul.mubr.f32.gmra.mrb[0].mxu0 %v411
    %v485 = vpop.f32.mrb[0].mxu0
    %v486 = vadd.f32 0.0, %v485
    %v487 = vpop.f32.mrb[0].mxu0
    %488 = vmatprep.mubr.f32.mxu0 0.0
    %489 = vmatmul.mubr.f32.gmra.mrb[0].mxu0 %v413
    %v490 = vpop.f32.mrb[0].mxu0
    %v491 = vadd.f32 0.0, %v490
    %v492 = vpop.f32.mrb[0].mxu0
    %493 = vmatprep.mubr.f32.mxu0 0.0
    %494 = vmatmul.mubr.f32.gmra.mrb[0].mxu0 %v415
    %v495 = vpop.f32.mrb[0].mxu0
    %v496 = vadd.f32 0.0, %v495
    %v497 = vpop.f32.mrb[0].mxu0
    %498 = vmatprep.mubr.f32.mxu0 0.0
    %499 = vmatmul.mubr.f32.gmra.mrb[0].mxu0 %v417
    %v500 = vpop.f32.mrb[0].mxu0
    %v501 = vadd.f32 0.0, %v500
    %v502 = vpop.f32.mrb[0].mxu0
    %503 = vdwg.mxu0
    %v504 = vadd.f32 %v405, %v486
    %v505 = vadd.f32 %v406, %v491
    %v506 = vadd.f32 %v407, %v496
    %v507 = vadd.f32 %v408, %v501
    %v508 = vmax.f32 %v504, 0.0
    %v509 = vmax.f32 %v505, 0.0
    %v510 = vmax.f32 %v506, 0.0
    %v511 = vmax.f32 %v507, 0.0
    %v512 = vadd.f32 %v508, %v21
    %v513 = vadd.f32 %v509, %v22
    %v514 = vadd.f32 %v510, %v23
    %v515 = vadd.f32 %v511, %v24
    %v516 = vmax.f32 %v512, 0.0
    %v517 = vmax.f32 %v513, 0.0
    %v518 = vmax.f32 %v514, 0.0
    %v519 = vmax.f32 %v515, 0.0
    %520 = vst.msk [vmem:[#allocation2] sm:$0xff] %vm73, %v516
    %521 = vst.msk [vmem:[#allocation2 + $0x8] sm:$0xff] %vm73, %v517
    %522 = vst.msk [vmem:[#allocation2 + $0x10] sm:$0xff] %vm73, %v518
    %523 = vst.msk [vmem:[#allocation2 + $0x18] sm:$0xff] %vm73, %v519
    // Predicated region
    $region22: #{branch_2_fun.2} parent=1 // pred_check
      _
    $region23: #{branch_2_fun.2} parent=1 // pred_check_branch
      %525 = sbr.rel (0) target = $region25
    $region24: #{branch_2_fun.2} parent=1 // pred_region
      %s527 = ssub.s32 512, 512
      %528 = vsyncadd [#allocation3], %s527
      %s529 = sshll.u32 [#allocation2], 4
      %s530 = int_to_ptr.vmem [resolvable:$true] %s529
      %535 = dma.vmem_to_hbm [thread:$0]  %s530, 512, %s5, [#allocation3], 128, 128, 8
    $region25: #{branch_2_fun.2} parent=1 // pred_fallthru
      _
    // Predicated region
    $region26: #{branch_2_fun.2} parent=1 // pred_check
      _
    $region27: #{branch_2_fun.2} parent=1 // pred_check_branch
      %537 = sbr.rel (0) target = $region29
    $region28: #{branch_2_fun.2} parent=1 // pred_region
      %538 = dma.done [#allocation3], 512
    $region29: #{branch_2_fun.2} parent=1 // pred_fallthru
      _
    %539 = vsyncpa [#allocation3], 1

// kernel: trans_encoder_forward.9
$region0: #{trans_encoder_forward.9}
  #allocation0 [shape = 'u32[]', space=smem, size = 0x4, offset = 0x4, fixed_abs, tag = 'smem constant byte address 0x4 - core index']
  #allocation1 [shape = 'u32[144,128]{1,0:T(1,128)}', space=vmem, size = 0x12000, scoped, tag = 'internal scratch']
  %s0 = inlined_call_operand.vmem [shape: f32[16,16], index: 0, kind: input, shape index: {}]
  %s1 = inlined_call_operand.vmem [shape: f32[16,32], index: 1, kind: input, shape index: {}]
  %s2 = inlined_call_operand.vmem [shape: f32[1,32], index: 2, kind: input, shape index: {}]
  %s3 = inlined_call_operand.vmem [shape: f32[16,32], index: 3, kind: input, shape index: {}]
  %s4 = inlined_call_operand.vmem [shape: f32[1,32], index: 4, kind: input, shape index: {}]
  %s5 = inlined_call_operand.vmem [shape: f32[1,32], index: 5, kind: input, shape index: {}]
  %s6 = inlined_call_operand.vmem [shape: f32[16,32], index: 6, kind: output, shape index: {}]
  %s7 = sld [smem:[#allocation0]]
  $region34: #{trans_encoder_forward.9} parent=0
    _
  %s9 = ssub.s32 1, %s7
  %s10 = scalar_select 0, %s9, %s7
  // Predicated region
  $region2: #{trans_encoder_forward.9} parent=0 // pred_check
    _
  $region3: #{trans_encoder_forward.9} parent=0 // pred_check_branch
    %12 = sbr.rel (0) target = $region5
  $region4: #{trans_encoder_forward.9} parent=0 // pred_region
    _
  $region5: #{trans_encoder_forward.9} parent=0 // pred_fallthru
    _
  // Predicated region
  $region6: #{trans_encoder_forward.9} parent=0 // pred_check
    _
  $region7: #{trans_encoder_forward.9} parent=0 // pred_check_branch
    %14 = sbr.rel (0) target = $region9
  $region8: #{trans_encoder_forward.9} parent=0 // pred_region
    _
  $region9: #{trans_encoder_forward.9} parent=0 // pred_fallthru
    _
  // Predicated region
  $region10: #{trans_encoder_forward.9} parent=0 // pred_check
    _
  $region11: #{trans_encoder_forward.9} parent=0 // pred_check_branch
    %16 = sbr.rel (0) target = $region13
  $region12: #{trans_encoder_forward.9} parent=0 // pred_region
    _
  $region13: #{trans_encoder_forward.9} parent=0 // pred_fallthru
    _
  // Predicated region
  $region14: #{trans_encoder_forward.9} parent=0 // pred_check
    _
  $region15: #{trans_encoder_forward.9} parent=0 // pred_check_branch
    %18 = sbr.rel (0) target = $region17
  $region16: #{trans_encoder_forward.9} parent=0 // pred_region
    _
  $region17: #{trans_encoder_forward.9} parent=0 // pred_fallthru
    _
  // Predicated region
  $region18: #{trans_encoder_forward.9} parent=0 // pred_check
    _
  $region19: #{trans_encoder_forward.9} parent=0 // pred_check_branch
    %20 = sbr.rel (0) target = $region21
  $region20: #{trans_encoder_forward.9} parent=0 // pred_region
    _
  $region21: #{trans_encoder_forward.9} parent=0 // pred_fallthru
    _
  // Predicated region
  $region22: #{trans_encoder_forward.9} parent=0 // pred_check
    _
  $region23: #{trans_encoder_forward.9} parent=0 // pred_check_branch
    %22 = sbr.rel (0) target = $region25
  $region24: #{trans_encoder_forward.9} parent=0 // pred_region
    _
  $region25: #{trans_encoder_forward.9} parent=0 // pred_fallthru
    _
  %v23 = vld [vmem:[%s3] sm:$0xff]
  %v24 = vld [vmem:[%s3 + $0x8] sm:$0xff]
  %v25 = vld [vmem:[%s0] sm:$0xff]
  %v26 = vld [vmem:[%s0 + $0x8] sm:$0xff]
  %v27 = vld [vmem:[%s1] sm:$0xff]
  %v28 = vld [vmem:[%s1 + $0x8] sm:$0xff]
  %vm29 = vcmask 130048
  %v31 = vsel %vm29, %v25, 0
  %v34 = vsel %vm29, %v26, 0
  %36 = vmatprep.subr.mxu0 0.0
  %37 = vmatpush1.msra.mxu0 %v27
  %38 = vmatprep.subr.mxu0 0.0
  %39 = vmatpush1.msra.mxu0 %v28
  %40 = vmatprep.subr.mxu0 0.0
  %41 = vmatpush1.msra.mxu0 0.0
  %42 = vmatprep.subr.mxu0 0.0
  %43 = vmatpush1.msra.mxu0 0.0
  %44 = vmatprep.subr.mxu0 0.0
  %45 = vmatpush1.msra.mxu0 0.0
  %46 = vmatprep.subr.mxu0 0.0
  %47 = vmatpush1.msra.mxu0 0.0
  %48 = vmatprep.subr.mxu0 0.0
  %49 = vmatpush1.msra.mxu0 0.0
  %50 = vmatprep.subr.mxu0 0.0
  %51 = vmatpush1.msra.mxu0 0.0
  %52 = vmatprep.subr.mxu0 0.0
  %53 = vmatpush1.msra.mxu0 0.0
  %54 = vmatprep.subr.mxu0 0.0
  %55 = vmatpush1.msra.mxu0 0.0
  %56 = vmatprep.subr.mxu0 0.0
  %57 = vmatpush1.msra.mxu0 0.0
  %58 = vmatprep.subr.mxu0 0.0
  %59 = vmatpush1.msra.mxu0 0.0
  %60 = vmatprep.subr.mxu0 0.0
  %61 = vmatpush1.msra.mxu0 0.0
  %62 = vmatprep.subr.mxu0 0.0
  %63 = vmatpush1.msra.mxu0 0.0
  %64 = vmatprep.subr.mxu0 0.0
  %65 = vmatpush1.msra.mxu0 0.0
  %66 = vmatprep.subr.mxu0 0.0
  %67 = vmatpush1.msra.mxu0 0.0
  %68 = vmatprep.subr.mxu0 0.0
  %69 = vmatpush1.msra.mxu0 0.0
  %70 = vmatprep.subr.mxu0 0.0
  %71 = vmatpush1.msra.mxu0 0.0
  %72 = vmatprep.subr.mxu0 0.0
  %73 = vmatpush1.msra.mxu0 0.0
  %74 = vmatprep.subr.mxu0 0.0
  %75 = vmatpush1.msra.mxu0 0.0
  %76 = vmatprep.subr.mxu0 0.0
  %77 = vmatpush1.msra.mxu0 0.0
  %78 = vmatprep.subr.mxu0 0.0
  %79 = vmatpush1.msra.mxu0 0.0
  %80 = vmatprep.subr.mxu0 0.0
  %81 = vmatpush1.msra.mxu0 0.0
  %82 = vmatprep.subr.mxu0 0.0
  %83 = vmatpush1.msra.mxu0 0.0
  %84 = vmatprep.subr.mxu0 0.0
  %85 = vmatpush1.msra.mxu0 0.0
  %86 = vmatprep.subr.mxu0 0.0
  %87 = vmatpush1.msra.mxu0 0.0
  %88 = vmatprep.subr.mxu0 0.0
  %89 = vmatpush1.msra.mxu0 0.0
  %90 = vmatprep.subr.mxu0 0.0
  %91 = vmatpush1.msra.mxu0 0.0
  %92 = vmatprep.subr.mxu0 0.0
  %93 = vmatpush1.msra.mxu0 0.0
  %94 = vmatprep.subr.mxu0 0.0
  %95 = vmatpush1.msra.mxu0 0.0
  %96 = vmatprep.subr.mxu0 0.0
  %97 = vmatpush1.msra.mxu0 0.0
  %98 = vmatprep.subr.mxu0 0.0
  %99 = vmatpush1.msra.mxu0 0.0
  %100 = vmatprep.mubr.f32.mxu0 0.0
  %101 = vmatmul.mubr.f32.gmra.mrb[0].mxu0 %v31
  %v102 = vpop.f32.mrb[0].mxu0
  %v103 = vadd.f32 0.0, %v102
  %v104 = vpop.f32.mrb[0].mxu0
  %105 = vmatprep.mubr.f32.mxu0 0.0
  %106 = vmatmul.mubr.f32.gmra.mrb[0].mxu0 %v34
  %v107 = vpop.f32.mrb[0].mxu0
  %v108 = vadd.f32 0.0, %v107
  %v109 = vpop.f32.mrb[0].mxu0
  %110 = vdwg.mxu0
  %v111 = vadd.f32 %v23, %v103
  %v112 = vadd.f32 %v24, %v108
  %v113 = vld [vmem:[%s2] sm:$0x1]
  %v115 = vlaneseq
  %v116 = vshrl.u32 %v115, 7
  %v117 = vsub.s32 0, %v116
  %v118 = vrot.slane %v113, %v117
  %v120 = vadd.f32 %v111, %v118
  %v121 = vadd.f32 %v112, %v118
  %v122 = vld [vmem:[%s4] sm:$0x1]
  %v123 = vld [vmem:[%s5] sm:$0x1]
  %vm124 = vcmask 261120
  %v125 = vsel %vm124, %v120, 0.0
  %126 = vadd.xlane.f32.xlu0 %v125
  %v127 = vpop.xlane.xlu0 %126
  %v128 = vsel %vm124, %v121, 0.0
  %129 = vadd.xlane.f32.xlu0 %v128
  %v130 = vpop.xlane.xlu0 %129
  %v131 = vrcp.pop 32.0
  %v132 = vmul.f32 %v127, %v131
  %v133 = vmul.f32 %v130, %v131
  %v134 = vsub.f32 %v120, %v132
  %v135 = vsub.f32 %v121, %v133
  %v136 = vmul.f32 %v134, %v134
  %v137 = vmul.f32 %v135, %v135
  %v138 = vsel %vm124, %v136, 0.0
  %139 = vadd.xlane.f32.xlu0 %v138
  %v140 = vpop.xlane.xlu0 %139
  %v141 = vsel %vm124, %v137, 0.0
  %142 = vadd.xlane.f32.xlu0 %v141
  %v143 = vpop.xlane.xlu0 %142
  %v144 = vmul.f32 %v140, %v131
  %v145 = vmul.f32 %v143, %v131
  %v146 = vadd.f32 %v144, 1e-05
  %v147 = vadd.f32 %v145, 1e-05
  %v148 = vrsqrt.pop %v146
  %v149 = vrsqrt.pop %v147
  %v150 = vmul.f32 %v134, %v148
  %v151 = vmul.f32 %v135, %v149
  %v153 = vlaneseq
  %v154 = vshrl.u32 %v153, 7
  %v155 = vsub.s32 0, %v154
  %v156 = vrot.slane %v122, %v155
  %v158 = vmul.f32 %v150, %v156
  %v159 = vmul.f32 %v151, %v156
  %v161 = vlaneseq
  %v162 = vshrl.u32 %v161, 7
  %v163 = vsub.s32 0, %v162
  %v164 = vrot.slane %v123, %v163
  %v166 = vadd.f32 %v158, %v164
  %v167 = vadd.f32 %v159, %v164
  %168 = vst.msk [vmem:[%s6] sm:$0xff] %vm124, %v166
  %169 = vst.msk [vmem:[%s6 + $0x8] sm:$0xff] %vm124, %v167
  // Predicated region
  $region26: #{trans_encoder_forward.9} parent=0 // pred_check
    _
  $region27: #{trans_encoder_forward.9} parent=0 // pred_check_branch
    %171 = sbr.rel (0) target = $region29
  $region28: #{trans_encoder_forward.9} parent=0 // pred_region
    _
  $region29: #{trans_encoder_forward.9} parent=0 // pred_fallthru
    _
  // Predicated region
  $region30: #{trans_encoder_forward.9} parent=0 // pred_check
    _
  $region31: #{trans_encoder_forward.9} parent=0 // pred_check_branch
    %173 = sbr.rel (0) target = $region33
  $region32: #{trans_encoder_forward.9} parent=0 // pred_region
    _
  $region33: #{trans_encoder_forward.9} parent=0 // pred_fallthru
    _

// kernel: trans_encoder_forward.10
$region0: #{trans_encoder_forward.10}
  #allocation0 [shape = 'u32[]', space=smem, size = 0x4, offset = 0x4, fixed_abs, tag = 'smem constant byte address 0x4 - core index']
  #allocation1 [shape = 'u32[144,128]{1,0:T(1,128)}', space=vmem, size = 0x12000, scoped, tag = 'internal scratch']
  %s0 = inlined_call_operand.vmem [shape: f32[16,32], index: 0, kind: input, shape index: {}]
  %s1 = inlined_call_operand.vmem [shape: f32[32,16], index: 1, kind: input, shape index: {}]
  %s2 = inlined_call_operand.vmem [shape: f32[1,16], index: 2, kind: input, shape index: {}]
  %s3 = inlined_call_operand.vmem [shape: f32[16,32], index: 3, kind: input, shape index: {}]
  %s4 = inlined_call_operand.vmem [shape: f32[1,32], index: 4, kind: input, shape index: {}]
  %s5 = inlined_call_operand.vmem [shape: f32[1,32], index: 5, kind: input, shape index: {}]
  %s6 = inlined_call_operand.vmem [shape: f32[1,32], index: 6, kind: input, shape index: {}]
  %s7 = inlined_call_operand.vmem [shape: f32[16,32], index: 7, kind: output, shape index: {}]
  %s8 = sld [smem:[#allocation0]]
  $region38: #{trans_encoder_forward.10} parent=0
    _
  %s10 = ssub.s32 1, %s8
  %s11 = scalar_select 0, %s10, %s8
  // Predicated region
  $region2: #{trans_encoder_forward.10} parent=0 // pred_check
    _
  $region3: #{trans_encoder_forward.10} parent=0 // pred_check_branch
    %13 = sbr.rel (0) target = $region5
  $region4: #{trans_encoder_forward.10} parent=0 // pred_region
    _
  $region5: #{trans_encoder_forward.10} parent=0 // pred_fallthru
    _
  // Predicated region
  $region6: #{trans_encoder_forward.10} parent=0 // pred_check
    _
  $region7: #{trans_encoder_forward.10} parent=0 // pred_check_branch
    %15 = sbr.rel (0) target = $region9
  $region8: #{trans_encoder_forward.10} parent=0 // pred_region
    _
  $region9: #{trans_encoder_forward.10} parent=0 // pred_fallthru
    _
  // Predicated region
  $region10: #{trans_encoder_forward.10} parent=0 // pred_check
    _
  $region11: #{trans_encoder_forward.10} parent=0 // pred_check_branch
    %17 = sbr.rel (0) target = $region13
  $region12: #{trans_encoder_forward.10} parent=0 // pred_region
    _
  $region13: #{trans_encoder_forward.10} parent=0 // pred_fallthru
    _
  // Predicated region
  $region14: #{trans_encoder_forward.10} parent=0 // pred_check
    _
  $region15: #{trans_encoder_forward.10} parent=0 // pred_check_branch
    %19 = sbr.rel (0) target = $region17
  $region16: #{trans_encoder_forward.10} parent=0 // pred_region
    _
  $region17: #{trans_encoder_forward.10} parent=0 // pred_fallthru
    _
  // Predicated region
  $region18: #{trans_encoder_forward.10} parent=0 // pred_check
    _
  $region19: #{trans_encoder_forward.10} parent=0 // pred_check_branch
    %21 = sbr.rel (0) target = $region21
  $region20: #{trans_encoder_forward.10} parent=0 // pred_region
    _
  $region21: #{trans_encoder_forward.10} parent=0 // pred_fallthru
    _
  // Predicated region
  $region22: #{trans_encoder_forward.10} parent=0 // pred_check
    _
  $region23: #{trans_encoder_forward.10} parent=0 // pred_check_branch
    %23 = sbr.rel (0) target = $region25
  $region24: #{trans_encoder_forward.10} parent=0 // pred_region
    _
  $region25: #{trans_encoder_forward.10} parent=0 // pred_fallthru
    _
  // Predicated region
  $region26: #{trans_encoder_forward.10} parent=0 // pred_check
    _
  $region27: #{trans_encoder_forward.10} parent=0 // pred_check_branch
    %25 = sbr.rel (0) target = $region29
  $region28: #{trans_encoder_forward.10} parent=0 // pred_region
    _
  $region29: #{trans_encoder_forward.10} parent=0 // pred_fallthru
    _
  %v26 = vld [vmem:[%s0] sm:$0xff]
  %v27 = vld [vmem:[%s0 + $0x8] sm:$0xff]
  %v28 = vld [vmem:[%s1] sm:$0xff]
  %v29 = vld [vmem:[%s1 + $0x8] sm:$0xff]
  %v30 = vld [vmem:[%s1 + $0x10] sm:$0xff]
  %v31 = vld [vmem:[%s1 + $0x18] sm:$0xff]
  %v32 = vld [vmem:[%s2] sm:$0x1]
  %v34 = vlaneseq
  %v35 = vshrl.u32 %v34, 7
  %v36 = vsub.s32 0, %v35
  %v37 = vrot.slane %v32, %v36
  %vm39 = vcmask 261120
  %v41 = vsel %vm39, %v26, 0
  %v44 = vsel %vm39, %v27, 0
  %46 = vmatprep.subr.mxu0 0.0
  %47 = vmatpush1.msra.mxu0 %v28
  %48 = vmatprep.subr.mxu0 0.0
  %49 = vmatpush1.msra.mxu0 %v29
  %50 = vmatprep.subr.mxu0 0.0
  %51 = vmatpush1.msra.mxu0 %v30
  %52 = vmatprep.subr.mxu0 0.0
  %53 = vmatpush1.msra.mxu0 %v31
  %54 = vmatprep.subr.mxu0 0.0
  %55 = vmatpush1.msra.mxu0 0.0
  %56 = vmatprep.subr.mxu0 0.0
  %57 = vmatpush1.msra.mxu0 0.0
  %58 = vmatprep.subr.mxu0 0.0
  %59 = vmatpush1.msra.mxu0 0.0
  %60 = vmatprep.subr.mxu0 0.0
  %61 = vmatpush1.msra.mxu0 0.0
  %62 = vmatprep.subr.mxu0 0.0
  %63 = vmatpush1.msra.mxu0 0.0
  %64 = vmatprep.subr.mxu0 0.0
  %65 = vmatpush1.msra.mxu0 0.0
  %66 = vmatprep.subr.mxu0 0.0
  %67 = vmatpush1.msra.mxu0 0.0
  %68 = vmatprep.subr.mxu0 0.0
  %69 = vmatpush1.msra.mxu0 0.0
  %70 = vmatprep.subr.mxu0 0.0
  %71 = vmatpush1.msra.mxu0 0.0
  %72 = vmatprep.subr.mxu0 0.0
  %73 = vmatpush1.msra.mxu0 0.0
  %74 = vmatprep.subr.mxu0 0.0
  %75 = vmatpush1.msra.mxu0 0.0
  %76 = vmatprep.subr.mxu0 0.0
  %77 = vmatpush1.msra.mxu0 0.0
  %78 = vmatprep.subr.mxu0 0.0
  %79 = vmatpush1.msra.mxu0 0.0
  %80 = vmatprep.subr.mxu0 0.0
  %81 = vmatpush1.msra.mxu0 0.0
  %82 = vmatprep.subr.mxu0 0.0
  %83 = vmatpush1.msra.mxu0 0.0
  %84 = vmatprep.subr.mxu0 0.0
  %85 = vmatpush1.msra.mxu0 0.0
  %86 = vmatprep.subr.mxu0 0.0
  %87 = vmatpush1.msra.mxu0 0.0
  %88 = vmatprep.subr.mxu0 0.0
  %89 = vmatpush1.msra.mxu0 0.0
  %90 = vmatprep.subr.mxu0 0.0
  %91 = vmatpush1.msra.mxu0 0.0
  %92 = vmatprep.subr.mxu0 0.0
  %93 = vmatpush1.msra.mxu0 0.0
  %94 = vmatprep.subr.mxu0 0.0
  %95 = vmatpush1.msra.mxu0 0.0
  %96 = vmatprep.subr.mxu0 0.0
  %97 = vmatpush1.msra.mxu0 0.0
  %98 = vmatprep.subr.mxu0 0.0
  %99 = vmatpush1.msra.mxu0 0.0
  %100 = vmatprep.subr.mxu0 0.0
  %101 = vmatpush1.msra.mxu0 0.0
  %102 = vmatprep.subr.mxu0 0.0
  %103 = vmatpush1.msra.mxu0 0.0
  %104 = vmatprep.subr.mxu0 0.0
  %105 = vmatpush1.msra.mxu0 0.0
  %106 = vmatprep.subr.mxu0 0.0
  %107 = vmatpush1.msra.mxu0 0.0
  %108 = vmatprep.subr.mxu0 0.0
  %109 = vmatpush1.msra.mxu0 0.0
  %110 = vmatprep.mubr.f32.mxu0 0.0
  %111 = vmatmul.mubr.f32.gmra.mrb[0].mxu0 %v41
  %v112 = vpop.f32.mrb[0].mxu0
  %v113 = vadd.f32 %v37, %v112
  %v114 = vpop.f32.mrb[0].mxu0
  %115 = vmatprep.mubr.f32.mxu0 0.0
  %116 = vmatmul.mubr.f32.gmra.mrb[0].mxu0 %v44
  %v117 = vpop.f32.mrb[0].mxu0
  %v118 = vadd.f32 %v37, %v117
  %v119 = vpop.f32.mrb[0].mxu0
  %120 = vdwg.mxu0
  %v121 = vld [vmem:[%s3] sm:$0xff]
  %v122 = vld [vmem:[%s3 + $0x8] sm:$0xff]
  %vm123 = vcmask 130048
  %v125 = vsel %vm123, %v113, 0
  %v128 = vsel %vm123, %v118, 0
  %130 = vmatprep.subr.mxu0 0.0
  %131 = vmatpush1.msra.mxu0 %v121
  %132 = vmatprep.subr.mxu0 0.0
  %133 = vmatpush1.msra.mxu0 %v122
  %134 = vmatprep.subr.mxu0 0.0
  %135 = vmatpush1.msra.mxu0 0.0
  %136 = vmatprep.subr.mxu0 0.0
  %137 = vmatpush1.msra.mxu0 0.0
  %138 = vmatprep.subr.mxu0 0.0
  %139 = vmatpush1.msra.mxu0 0.0
  %140 = vmatprep.subr.mxu0 0.0
  %141 = vmatpush1.msra.mxu0 0.0
  %142 = vmatprep.subr.mxu0 0.0
  %143 = vmatpush1.msra.mxu0 0.0
  %144 = vmatprep.subr.mxu0 0.0
  %145 = vmatpush1.msra.mxu0 0.0
  %146 = vmatprep.subr.mxu0 0.0
  %147 = vmatpush1.msra.mxu0 0.0
  %148 = vmatprep.subr.mxu0 0.0
  %149 = vmatpush1.msra.mxu0 0.0
  %150 = vmatprep.subr.mxu0 0.0
  %151 = vmatpush1.msra.mxu0 0.0
  %152 = vmatprep.subr.mxu0 0.0
  %153 = vmatpush1.msra.mxu0 0.0
  %154 = vmatprep.subr.mxu0 0.0
  %155 = vmatpush1.msra.mxu0 0.0
  %156 = vmatprep.subr.mxu0 0.0
  %157 = vmatpush1.msra.mxu0 0.0
  %158 = vmatprep.subr.mxu0 0.0
  %159 = vmatpush1.msra.mxu0 0.0
  %160 = vmatprep.subr.mxu0 0.0
  %161 = vmatpush1.msra.mxu0 0.0
  %162 = vmatprep.subr.mxu0 0.0
  %163 = vmatpush1.msra.mxu0 0.0
  %164 = vmatprep.subr.mxu0 0.0
  %165 = vmatpush1.msra.mxu0 0.0
  %166 = vmatprep.subr.mxu0 0.0
  %167 = vmatpush1.msra.mxu0 0.0
  %168 = vmatprep.subr.mxu0 0.0
  %169 = vmatpush1.msra.mxu0 0.0
  %170 = vmatprep.subr.mxu0 0.0
  %171 = vmatpush1.msra.mxu0 0.0
  %172 = vmatprep.subr.mxu0 0.0
  %173 = vmatpush1.msra.mxu0 0.0
  %174 = vmatprep.subr.mxu0 0.0
  %175 = vmatpush1.msra.mxu0 0.0
  %176 = vmatprep.subr.mxu0 0.0
  %177 = vmatpush1.msra.mxu0 0.0
  %178 = vmatprep.subr.mxu0 0.0
  %179 = vmatpush1.msra.mxu0 0.0
  %180 = vmatprep.subr.mxu0 0.0
  %181 = vmatpush1.msra.mxu0 0.0
  %182 = vmatprep.subr.mxu0 0.0
  %183 = vmatpush1.msra.mxu0 0.0
  %184 = vmatprep.subr.mxu0 0.0
  %185 = vmatpush1.msra.mxu0 0.0
  %186 = vmatprep.subr.mxu0 0.0
  %187 = vmatpush1.msra.mxu0 0.0
  %188 = vmatprep.subr.mxu0 0.0
  %189 = vmatpush1.msra.mxu0 0.0
  %190 = vmatprep.subr.mxu0 0.0
  %191 = vmatpush1.msra.mxu0 0.0
  %192 = vmatprep.subr.mxu0 0.0
  %193 = vmatpush1.msra.mxu0 0.0
  %194 = vmatprep.mubr.f32.mxu0 0.0
  %195 = vmatmul.mubr.f32.gmra.mrb[0].mxu0 %v125
  %v196 = vpop.f32.mrb[0].mxu0
  %v197 = vadd.f32 0.0, %v196
  %v198 = vpop.f32.mrb[0].mxu0
  %199 = vmatprep.mubr.f32.mxu0 0.0
  %200 = vmatmul.mubr.f32.gmra.mrb[0].mxu0 %v128
  %v201 = vpop.f32.mrb[0].mxu0
  %v202 = vadd.f32 0.0, %v201
  %v203 = vpop.f32.mrb[0].mxu0
  %204 = vdwg.mxu0
  %v205 = vadd.f32 %v26, %v197
  %v206 = vadd.f32 %v27, %v202
  %v207 = vld [vmem:[%s4] sm:$0x1]
  %v209 = vlaneseq
  %v210 = vshrl.u32 %v209, 7
  %v211 = vsub.s32 0, %v210
  %v212 = vrot.slane %v207, %v211
  %v214 = vadd.f32 %v205, %v212
  %v215 = vadd.f32 %v206, %v212
  %v216 = vld [vmem:[%s5] sm:$0x1]
  %v217 = vld [vmem:[%s6] sm:$0x1]
  %v218 = vsel %vm39, %v214, 0.0
  %219 = vadd.xlane.f32.xlu0 %v218
  %v220 = vpop.xlane.xlu0 %219
  %v221 = vsel %vm39, %v215, 0.0
  %222 = vadd.xlane.f32.xlu0 %v221
  %v223 = vpop.xlane.xlu0 %222
  %v224 = vrcp.pop 32.0
  %v225 = vmul.f32 %v220, %v224
  %v226 = vmul.f32 %v223, %v224
  %v227 = vsub.f32 %v214, %v225
  %v228 = vsub.f32 %v215, %v226
  %v229 = vmul.f32 %v227, %v227
  %v230 = vmul.f32 %v228, %v228
  %v231 = vsel %vm39, %v229, 0.0
  %232 = vadd.xlane.f32.xlu0 %v231
  %v233 = vpop.xlane.xlu0 %232
  %v234 = vsel %vm39, %v230, 0.0
  %235 = vadd.xlane.f32.xlu0 %v234
  %v236 = vpop.xlane.xlu0 %235
  %v237 = vmul.f32 %v233, %v224
  %v238 = vmul.f32 %v236, %v224
  %v239 = vadd.f32 %v237, 1e-05
  %v240 = vadd.f32 %v238, 1e-05
  %v241 = vrsqrt.pop %v239
  %v242 = vrsqrt.pop %v240
  %v243 = vmul.f32 %v227, %v241
  %v244 = vmul.f32 %v228, %v242
  %v246 = vlaneseq
  %v247 = vshrl.u32 %v246, 7
  %v248 = vsub.s32 0, %v247
  %v249 = vrot.slane %v216, %v248
  %v251 = vmul.f32 %v243, %v249
  %v252 = vmul.f32 %v244, %v249
  %v254 = vlaneseq
  %v255 = vshrl.u32 %v254, 7
  %v256 = vsub.s32 0, %v255
  %v257 = vrot.slane %v217, %v256
  %v259 = vadd.f32 %v251, %v257
  %v260 = vadd.f32 %v252, %v257
  %261 = vst.msk [vmem:[%s7] sm:$0xff] %vm39, %v259
  %262 = vst.msk [vmem:[%s7 + $0x8] sm:$0xff] %vm39, %v260
  // Predicated region
  $region30: #{trans_encoder_forward.10} parent=0 // pred_check
    _
  $region31: #{trans_encoder_forward.10} parent=0 // pred_check_branch
    %264 = sbr.rel (0) target = $region33
  $region32: #{trans_encoder_forward.10} parent=0 // pred_region
    _
  $region33: #{trans_encoder_forward.10} parent=0 // pred_fallthru
    _
  // Predicated region
  $region34: #{trans_encoder_forward.10} parent=0 // pred_check
    _
  $region35: #{trans_encoder_forward.10} parent=0 // pred_check_branch
    %266 = sbr.rel (0) target = $region37
  $region36: #{trans_encoder_forward.10} parent=0 // pred_region
    _
  $region37: #{trans_encoder_forward.10} parent=0 // pred_fallthru
    _

// kernel: trans_encoder_forward.11
$region0: #{trans_encoder_forward.11}
  #allocation0 [shape = 'u32[]', space=smem, size = 0x4, offset = 0x4, fixed_abs, tag = 'smem constant byte address 0x4 - core index']
  #allocation1 [shape = 'u32[144,128]{1,0:T(1,128)}', space=vmem, size = 0x12000, scoped, tag = 'internal scratch']
  %s0 = inlined_call_operand.vmem [shape: f32[16,32], index: 0, kind: input, shape index: {}]
  %s1 = inlined_call_operand.vmem [shape: f32[1,32], index: 1, kind: input, shape index: {}]
  %s2 = inlined_call_operand.vmem [shape: f32[1,32], index: 2, kind: input, shape index: {}]
  %s3 = inlined_call_operand.vmem [shape: f32[32,4], index: 3, kind: input, shape index: {}]
  %s4 = inlined_call_operand.vmem [shape: f32[1,4], index: 4, kind: input, shape index: {}]
  %s5 = inlined_call_operand.vmem [shape: f32[16,4], index: 5, kind: output, shape index: {}]
  %s6 = sld [smem:[#allocation0]]
  $region30: #{trans_encoder_forward.11} parent=0
    _
  %s8 = ssub.s32 1, %s6
  %s9 = scalar_select 0, %s8, %s6
  // Predicated region
  $region2: #{trans_encoder_forward.11} parent=0 // pred_check
    _
  $region3: #{trans_encoder_forward.11} parent=0 // pred_check_branch
    %11 = sbr.rel (0) target = $region5
  $region4: #{trans_encoder_forward.11} parent=0 // pred_region
    _
  $region5: #{trans_encoder_forward.11} parent=0 // pred_fallthru
    _
  // Predicated region
  $region6: #{trans_encoder_forward.11} parent=0 // pred_check
    _
  $region7: #{trans_encoder_forward.11} parent=0 // pred_check_branch
    %13 = sbr.rel (0) target = $region9
  $region8: #{trans_encoder_forward.11} parent=0 // pred_region
    _
  $region9: #{trans_encoder_forward.11} parent=0 // pred_fallthru
    _
  // Predicated region
  $region10: #{trans_encoder_forward.11} parent=0 // pred_check
    _
  $region11: #{trans_encoder_forward.11} parent=0 // pred_check_branch
    %15 = sbr.rel (0) target = $region13
  $region12: #{trans_encoder_forward.11} parent=0 // pred_region
    _
  $region13: #{trans_encoder_forward.11} parent=0 // pred_fallthru
    _
  // Predicated region
  $region14: #{trans_encoder_forward.11} parent=0 // pred_check
    _
  $region15: #{trans_encoder_forward.11} parent=0 // pred_check_branch
    %17 = sbr.rel (0) target = $region17
  $region16: #{trans_encoder_forward.11} parent=0 // pred_region
    _
  $region17: #{trans_encoder_forward.11} parent=0 // pred_fallthru
    _
  // Predicated region
  $region18: #{trans_encoder_forward.11} parent=0 // pred_check
    _
  $region19: #{trans_encoder_forward.11} parent=0 // pred_check_branch
    %19 = sbr.rel (0) target = $region21
  $region20: #{trans_encoder_forward.11} parent=0 // pred_region
    _
  $region21: #{trans_encoder_forward.11} parent=0 // pred_fallthru
    _
  %v20 = vld [vmem:[%s0] sm:$0xff]
  %v21 = vld [vmem:[%s0 + $0x8] sm:$0xff]
  %v22 = vld [vmem:[%s1] sm:$0x1]
  %v23 = vld [vmem:[%s2] sm:$0x1]
  %vm24 = vcmask 261120
  %v25 = vsel %vm24, %v20, 0.0
  %26 = vadd.xlane.f32.xlu0 %v25
  %v27 = vpop.xlane.xlu0 %26
  %v28 = vsel %vm24, %v21, 0.0
  %29 = vadd.xlane.f32.xlu0 %v28
  %v30 = vpop.xlane.xlu0 %29
  %v31 = vrcp.pop 32.0
  %v32 = vmul.f32 %v27, %v31
  %v33 = vmul.f32 %v30, %v31
  %v34 = vsub.f32 %v20, %v32
  %v35 = vsub.f32 %v21, %v33
  %v36 = vmul.f32 %v34, %v34
  %v37 = vmul.f32 %v35, %v35
  %v38 = vsel %vm24, %v36, 0.0
  %39 = vadd.xlane.f32.xlu0 %v38
  %v40 = vpop.xlane.xlu0 %39
  %v41 = vsel %vm24, %v37, 0.0
  %42 = vadd.xlane.f32.xlu0 %v41
  %v43 = vpop.xlane.xlu0 %42
  %v44 = vmul.f32 %v40, %v31
  %v45 = vmul.f32 %v43, %v31
  %v46 = vadd.f32 %v44, 1e-05
  %v47 = vadd.f32 %v45, 1e-05
  %v48 = vrsqrt.pop %v46
  %v49 = vrsqrt.pop %v47
  %v50 = vmul.f32 %v34, %v48
  %v51 = vmul.f32 %v35, %v49
  %v53 = vlaneseq
  %v54 = vshrl.u32 %v53, 7
  %v55 = vsub.s32 0, %v54
  %v56 = vrot.slane %v22, %v55
  %v58 = vmul.f32 %v50, %v56
  %v59 = vmul.f32 %v51, %v56
  %v61 = vlaneseq
  %v62 = vshrl.u32 %v61, 7
  %v63 = vsub.s32 0, %v62
  %v64 = vrot.slane %v23, %v63
  %v66 = vadd.f32 %v58, %v64
  %v67 = vadd.f32 %v59, %v64
  %v68 = vld [vmem:[%s3] sm:$0xff]
  %v69 = vld [vmem:[%s3 + $0x8] sm:$0xff]
  %v70 = vld [vmem:[%s3 + $0x10] sm:$0xff]
  %v71 = vld [vmem:[%s3 + $0x18] sm:$0xff]
  %v72 = vld [vmem:[%s4] sm:$0x1]
  %v74 = vlaneseq
  %v75 = vshrl.u32 %v74, 7
  %v76 = vsub.s32 0, %v75
  %v77 = vrot.slane %v72, %v76
  %v80 = vsel %vm24, %v66, 0
  %v83 = vsel %vm24, %v67, 0
  %85 = vmatprep.subr.mxu0 0.0
  %86 = vmatpush1.msra.mxu0 %v68
  %87 = vmatprep.subr.mxu0 0.0
  %88 = vmatpush1.msra.mxu0 %v69
  %89 = vmatprep.subr.mxu0 0.0
  %90 = vmatpush1.msra.mxu0 %v70
  %91 = vmatprep.subr.mxu0 0.0
  %92 = vmatpush1.msra.mxu0 %v71
  %93 = vmatprep.subr.mxu0 0.0
  %94 = vmatpush1.msra.mxu0 0.0
  %95 = vmatprep.subr.mxu0 0.0
  %96 = vmatpush1.msra.mxu0 0.0
  %97 = vmatprep.subr.mxu0 0.0
  %98 = vmatpush1.msra.mxu0 0.0
  %99 = vmatprep.subr.mxu0 0.0
  %100 = vmatpush1.msra.mxu0 0.0
  %101 = vmatprep.subr.mxu0 0.0
  %102 = vmatpush1.msra.mxu0 0.0
  %103 = vmatprep.subr.mxu0 0.0
  %104 = vmatpush1.msra.mxu0 0.0
  %105 = vmatprep.subr.mxu0 0.0
  %106 = vmatpush1.msra.mxu0 0.0
  %107 = vmatprep.subr.mxu0 0.0
  %108 = vmatpush1.msra.mxu0 0.0
  %109 = vmatprep.subr.mxu0 0.0
  %110 = vmatpush1.msra.mxu0 0.0
  %111 = vmatprep.subr.mxu0 0.0
  %112 = vmatpush1.msra.mxu0 0.0
  %113 = vmatprep.subr.mxu0 0.0
  %114 = vmatpush1.msra.mxu0 0.0
  %115 = vmatprep.subr.mxu0 0.0
  %116 = vmatpush1.msra.mxu0 0.0
  %117 = vmatprep.subr.mxu0 0.0
  %118 = vmatpush1.msra.mxu0 0.0
  %119 = vmatprep.subr.mxu0 0.0
  %120 = vmatpush1.msra.mxu0 0.0
  %121 = vmatprep.subr.mxu0 0.0
  %122 = vmatpush1.msra.mxu0 0.0
  %123 = vmatprep.subr.mxu0 0.0
  %124 = vmatpush1.msra.mxu0 0.0
  %125 = vmatprep.subr.mxu0 0.0
  %126 = vmatpush1.msra.mxu0 0.0
  %127 = vmatprep.subr.mxu0 0.0
  %128 = vmatpush1.msra.mxu0 0.0
  %129 = vmatprep.subr.mxu0 0.0
  %130 = vmatpush1.msra.mxu0 0.0
  %131 = vmatprep.subr.mxu0 0.0
  %132 = vmatpush1.msra.mxu0 0.0
  %133 = vmatprep.subr.mxu0 0.0
  %134 = vmatpush1.msra.mxu0 0.0
  %135 = vmatprep.subr.mxu0 0.0
  %136 = vmatpush1.msra.mxu0 0.0
  %137 = vmatprep.subr.mxu0 0.0
  %138 = vmatpush1.msra.mxu0 0.0
  %139 = vmatprep.subr.mxu0 0.0
  %140 = vmatpush1.msra.mxu0 0.0
  %141 = vmatprep.subr.mxu0 0.0
  %142 = vmatpush1.msra.mxu0 0.0
  %143 = vmatprep.subr.mxu0 0.0
  %144 = vmatpush1.msra.mxu0 0.0
  %145 = vmatprep.subr.mxu0 0.0
  %146 = vmatpush1.msra.mxu0 0.0
  %147 = vmatprep.subr.mxu0 0.0
  %148 = vmatpush1.msra.mxu0 0.0
  %149 = vmatprep.mubr.f32.mxu0 0.0
  %150 = vmatmul.mubr.f32.gmra.mrb[0].mxu0 %v80
  %v151 = vpop.f32.mrb[0].mxu0
  %v152 = vadd.f32 %v77, %v151
  %v153 = vpop.f32.mrb[0].mxu0
  %154 = vmatprep.mubr.f32.mxu0 0.0
  %155 = vmatmul.mubr.f32.gmra.mrb[0].mxu0 %v83
  %v156 = vpop.f32.mrb[0].mxu0
  %v157 = vadd.f32 %v77, %v156
  %v158 = vpop.f32.mrb[0].mxu0
  %159 = vdwg.mxu0
  %vm160 = vcmask 31744
  %161 = vst.msk [vmem:[%s5] sm:$0xff] %vm160, %v152
  %162 = vst.msk [vmem:[%s5 + $0x8] sm:$0xff] %vm160, %v157
  // Predicated region
  $region22: #{trans_encoder_forward.11} parent=0 // pred_check
    _
  $region23: #{trans_encoder_forward.11} parent=0 // pred_check_branch
    %164 = sbr.rel (0) target = $region25
  $region24: #{trans_encoder_forward.11} parent=0 // pred_region
    _
  $region25: #{trans_encoder_forward.11} parent=0 // pred_fallthru
    _
  // Predicated region
  $region26: #{trans_encoder_forward.11} parent=0 // pred_check
    _
  $region27: #{trans_encoder_forward.11} parent=0 // pred_check_branch
    %166 = sbr.rel (0) target = $region29
  $region28: #{trans_encoder_forward.11} parent=0 // pred_region
    _
  $region29: #{trans_encoder_forward.11} parent=0 // pred_fallthru
    _

// kernel: branch_4_fun.2
$region0: #{branch_4_fun.2}
  #allocation0 [shape = 'u32[]', space=smem, size = 0x4, offset = 0x4, fixed_abs, tag = 'smem constant byte address 0x4 - core index']
  #allocation1 [shape = 'u32[144,128]{1,0:T(1,128)}', space=vmem, size = 0x12000, scoped, tag = 'internal scratch']
  %s0 = inlined_call_operand.vmem [shape: f32[32,8], index: 0, kind: input, shape index: {}]
  %s1 = inlined_call_operand.vmem [shape: f32[4,8,8], index: 1, kind: input, shape index: {}]
  %s2 = inlined_call_operand.vmem [shape: f32[1,8], index: 2, kind: input, shape index: {}, may-alias: {2,4}]
  %s3 = inlined_call_operand.vmem [shape: f32[4,8,8], index: 3, kind: input, shape index: {}]
  %s4 = inlined_call_operand.vmem [shape: f32[1,8], index: 4, kind: input, shape index: {}, may-alias: {2,4}]
  %s5 = inlined_call_operand.hbm [shape: f32[32,8], index: 5, kind: output, shape index: {}]
  %s6 = sld [smem:[#allocation0]]
  $region30: #{branch_4_fun.2} parent=0
    _
  %s8 = ssub.s32 1, %s6
  %s9 = scalar_select 0, %s8, %s6
  $region1: #{branch_4_fun.2} parent=0
    #allocation2 [shape = 'u8[16384]{0}', space=vmem, size = 0x4000, scoped, tag = 'output window, operand 0, single buffered']
    #allocation3 [shape = 's32[1]{0}', space=sflag, size = 0x4, scoped, tag = 'scoped memory for branch_4_fun.2']
    %10 = vsyncpa [#allocation3], 0
    // Predicated region
    $region2: #{branch_4_fun.2} parent=1 // pred_check
      _
    $region3: #{branch_4_fun.2} parent=1 // pred_check_branch
      %12 = sbr.rel (0) target = $region5
    $region4: #{branch_4_fun.2} parent=1 // pred_region
      _
    $region5: #{branch_4_fun.2} parent=1 // pred_fallthru
      _
    // Predicated region
    $region6: #{branch_4_fun.2} parent=1 // pred_check
      _
    $region7: #{branch_4_fun.2} parent=1 // pred_check_branch
      %14 = sbr.rel (0) target = $region9
    $region8: #{branch_4_fun.2} parent=1 // pred_region
      _
    $region9: #{branch_4_fun.2} parent=1 // pred_fallthru
      _
    // Predicated region
    $region10: #{branch_4_fun.2} parent=1 // pred_check
      _
    $region11: #{branch_4_fun.2} parent=1 // pred_check_branch
      %16 = sbr.rel (0) target = $region13
    $region12: #{branch_4_fun.2} parent=1 // pred_region
      _
    $region13: #{branch_4_fun.2} parent=1 // pred_fallthru
      _
    // Predicated region
    $region14: #{branch_4_fun.2} parent=1 // pred_check
      _
    $region15: #{branch_4_fun.2} parent=1 // pred_check_branch
      %18 = sbr.rel (0) target = $region17
    $region16: #{branch_4_fun.2} parent=1 // pred_region
      _
    $region17: #{branch_4_fun.2} parent=1 // pred_fallthru
      _
    // Predicated region
    $region18: #{branch_4_fun.2} parent=1 // pred_check
      _
    $region19: #{branch_4_fun.2} parent=1 // pred_check_branch
      %20 = sbr.rel (0) target = $region21
    $region20: #{branch_4_fun.2} parent=1 // pred_region
      _
    $region21: #{branch_4_fun.2} parent=1 // pred_fallthru
      _
    %v21 = vld [vmem:[%s0] sm:$0xff]
    %v22 = vld [vmem:[%s0 + $0x8] sm:$0xff]
    %v23 = vld [vmem:[%s0 + $0x10] sm:$0xff]
    %v24 = vld [vmem:[%s0 + $0x18] sm:$0xff]
    %v25 = vlaneseq
    %v26 = vshrl.u32 %v25, 7
    %v27 = vadd.s32 %v26, 8
    %v28 = vadd.s32 %v26, 16
    %v29 = vadd.s32 %v26, 24
    %v30 = vld [vmem:[%s2] sm:$0x1]
    %v32 = vlaneseq
    %v33 = vshrl.u32 %v32, 7
    %v34 = vsub.s32 0, %v33
    %v35 = vrot.slane %v30, %v34
    %v37 = vadd.f32 %v35, 0.0
    %vm38 = vcmp.lt.s32.totalorder %v26, 12
    %vm39 = vcmp.lt.s32.totalorder %v27, 12
    %vm40 = vcmp.lt.s32.totalorder %v28, 12
    %vm41 = vcmp.lt.s32.totalorder %v29, 12
    %vm44 = vcmask 1043456
    %v45 = vrot.slane %v23, 4
    %v46 = vrot.slane %v24, 4
    %v47 = vsel %vm44, %v45, %v46
    %v52 = vrot.slane %v21, 4
    %v53 = vrot.slane %v22, 4
    %v54 = vsel %vm44, %v52, %v53
    %v55 = vsel %vm44, %v53, %v45
    %v59 = vsel %vm44, %v46, %v52
    %v60 = vsel %vm38, 1, 0
    %v61 = vsel %vm39, 1, 0
    %v62 = vsel %vm40, 1, 0
    %v63 = vsel %vm41, 1, 0
    %vm64 = vcmp.eq.s32.totalorder %v60, 1
    %vm65 = vcmp.eq.s32.totalorder %v61, 1
    %vm66 = vcmp.eq.s32.totalorder %v62, 1
    %vm67 = vcmp.eq.s32.totalorder %v63, 1
    %v68 = vsel %vm64, 0.0, %v47
    %v69 = vsel %vm65, 0.0, %v59
    %v70 = vsel %vm66, 0.0, %v54
    %v71 = vsel %vm67, 0.0, %v55
    %v72 = vld [vmem:[%s1] sm:$0xff]
    %vm73 = vcmask 64512
    %v75 = vsel %vm73, %v68, 0
    %v78 = vsel %vm73, %v69, 0
    %v81 = vsel %vm73, %v70, 0
    %v84 = vsel %vm73, %v71, 0
    %86 = vmatprep.subr.mxu0 0.0
    %87 = vmatpush1.msra.mxu0 %v72
    %88 = vmatprep.subr.mxu0 0.0
    %89 = vmatpush1.msra.mxu0 0.0
    %90 = vmatprep.subr.mxu0 0.0
    %91 = vmatpush1.msra.mxu0 0.0
    %92 = vmatprep.subr.mxu0 0.0
    %93 = vmatpush1.msra.mxu0 0.0
    %94 = vmatprep.subr.mxu0 0.0
    %95 = vmatpush1.msra.mxu0 0.0
    %96 = vmatprep.subr.mxu0 0.0
    %97 = vmatpush1.msra.mxu0 0.0
    %98 = vmatprep.subr.mxu0 0.0
    %99 = vmatpush1.msra.mxu0 0.0
    %100 = vmatprep.subr.mxu0 0.0
    %101 = vmatpush1.msra.mxu0 0.0
    %102 = vmatprep.subr.mxu0 0.0
    %103 = vmatpush1.msra.mxu0 0.0
    %104 = vmatprep.subr.mxu0 0.0
    %105 = vmatpush1.msra.mxu0 0.0
    %106 = vmatprep.subr.mxu0 0.0
    %107 = vmatpush1.msra.mxu0 0.0
    %108 = vmatprep.subr.mxu0 0.0
    %109 = vmatpush1.msra.mxu0 0.0
    %110 = vmatprep.subr.mxu0 0.0
    %111 = vmatpush1.msra.mxu0 0.0
    %112 = vmatprep.subr.mxu0 0.0
    %113 = vmatpush1.msra.mxu0 0.0
    %114 = vmatprep.subr.mxu0 0.0
    %115 = vmatpush1.msra.mxu0 0.0
    %116 = vmatprep.subr.mxu0 0.0
    %117 = vmatpush1.msra.mxu0 0.0
    %118 = vmatprep.subr.mxu0 0.0
    %119 = vmatpush1.msra.mxu0 0.0
    %120 = vmatprep.subr.mxu0 0.0
    %121 = vmatpush1.msra.mxu0 0.0
    %122 = vmatprep.subr.mxu0 0.0
    %123 = vmatpush1.msra.mxu0 0.0
    %124 = vmatprep.subr.mxu0 0.0
    %125 = vmatpush1.msra.mxu0 0.0
    %126 = vmatprep.subr.mxu0 0.0
    %127 = vmatpush1.msra.mxu0 0.0
    %128 = vmatprep.subr.mxu0 0.0
    %129 = vmatpush1.msra.mxu0 0.0
    %130 = vmatprep.subr.mxu0 0.0
    %131 = vmatpush1.msra.mxu0 0.0
    %132 = vmatprep.subr.mxu0 0.0
    %133 = vmatpush1.msra.mxu0 0.0
    %134 = vmatprep.subr.mxu0 0.0
    %135 = vmatpush1.msra.mxu0 0.0
    %136 = vmatprep.subr.mxu0 0.0
    %137 = vmatpush1.msra.mxu0 0.0
    %138 = vmatprep.subr.mxu0 0.0
    %139 = vmatpush1.msra.mxu0 0.0
    %140 = vmatprep.subr.mxu0 0.0
    %141 = vmatpush1.msra.mxu0 0.0
    %142 = vmatprep.subr.mxu0 0.0
    %143 = vmatpush1.msra.mxu0 0.0
    %144 = vmatprep.subr.mxu0 0.0
    %145 = vmatpush1.msra.mxu0 0.0
    %146 = vmatprep.subr.mxu0 0.0
    %147 = vmatpush1.msra.mxu0 0.0
    %148 = vmatprep.subr.mxu0 0.0
    %149 = vmatpush1.msra.mxu0 0.0
    %150 = vmatprep.mubr.f32.mxu0 0.0
    %151 = vmatmul.mubr.f32.gmra.mrb[0].mxu0 %v75
    %v152 = vpop.f32.mrb[0].mxu0
    %v153 = vadd.f32 0.0, %v152
    %v154 = vpop.f32.mrb[0].mxu0
    %155 = vmatprep.mubr.f32.mxu0 0.0
    %156 = vmatmul.mubr.f32.gmra.mrb[0].mxu0 %v78
    %v157 = vpop.f32.mrb[0].mxu0
    %v158 = vadd.f32 0.0, %v157
    %v159 = vpop.f32.mrb[0].mxu0
    %160 = vmatprep.mubr.f32.mxu0 0.0
    %161 = vmatmul.mubr.f32.gmra.mrb[0].mxu0 %v81
    %v162 = vpop.f32.mrb[0].mxu0
    %v163 = vadd.f32 0.0, %v162
    %v164 = vpop.f32.mrb[0].mxu0
    %165 = vmatprep.mubr.f32.mxu0 0.0
    %166 = vmatmul.mubr.f32.gmra.mrb[0].mxu0 %v84
    %v167 = vpop.f32.mrb[0].mxu0
    %v168 = vadd.f32 0.0, %v167
    %v169 = vpop.f32.mrb[0].mxu0
    %170 = vdwg.mxu0
    %v171 = vadd.f32 %v37, %v153
    %v172 = vadd.f32 %v37, %v158
    %v173 = vadd.f32 %v37, %v163
    %v174 = vadd.f32 %v37, %v168
    %vm175 = vcmp.lt.s32.totalorder %v26, 8
    %vm176 = vcmp.lt.s32.totalorder %v27, 8
    %vm177 = vcmp.lt.s32.totalorder %v28, 8
    %vm178 = vcmp.lt.s32.totalorder %v29, 8
    %v179 = vsel %vm175, 1, 0
    %v180 = vsel %vm176, 1, 0
    %v181 = vsel %vm177, 1, 0
    %v182 = vsel %vm178, 1, 0
    %vm183 = vcmp.eq.s32.totalorder %v179, 1
    %vm184 = vcmp.eq.s32.totalorder %v180, 1
    %vm185 = vcmp.eq.s32.totalorder %v181, 1
    %vm186 = vcmp.eq.s32.totalorder %v182, 1
    %v187 = vsel %vm183, 0.0, %v24
    %v188 = vsel %vm184, 0.0, %v21
    %v189 = vsel %vm185, 0.0, %v22
    %v190 = vsel %vm186, 0.0, %v23
    %s191 = scalar_lea.vmem %s1, 8
    %v192 = vld [vmem:[%s191] sm:$0xff]
    %v194 = vsel %vm73, %v187, 0
    %v197 = vsel %vm73, %v188, 0
    %v200 = vsel %vm73, %v189, 0
    %v203 = vsel %vm73, %v190, 0
    %205 = vmatprep.subr.mxu0 0.0
    %206 = vmatpush1.msra.mxu0 %v192
    %207 = vmatprep.subr.mxu0 0.0
    %208 = vmatpush1.msra.mxu0 0.0
    %209 = vmatprep.subr.mxu0 0.0
    %210 = vmatpush1.msra.mxu0 0.0
    %211 = vmatprep.subr.mxu0 0.0
    %212 = vmatpush1.msra.mxu0 0.0
    %213 = vmatprep.subr.mxu0 0.0
    %214 = vmatpush1.msra.mxu0 0.0
    %215 = vmatprep.subr.mxu0 0.0
    %216 = vmatpush1.msra.mxu0 0.0
    %217 = vmatprep.subr.mxu0 0.0
    %218 = vmatpush1.msra.mxu0 0.0
    %219 = vmatprep.subr.mxu0 0.0
    %220 = vmatpush1.msra.mxu0 0.0
    %221 = vmatprep.subr.mxu0 0.0
    %222 = vmatpush1.msra.mxu0 0.0
    %223 = vmatprep.subr.mxu0 0.0
    %224 = vmatpush1.msra.mxu0 0.0
    %225 = vmatprep.subr.mxu0 0.0
    %226 = vmatpush1.msra.mxu0 0.0
    %227 = vmatprep.subr.mxu0 0.0
    %228 = vmatpush1.msra.mxu0 0.0
    %229 = vmatprep.subr.mxu0 0.0
    %230 = vmatpush1.msra.mxu0 0.0
    %231 = vmatprep.subr.mxu0 0.0
    %232 = vmatpush1.msra.mxu0 0.0
    %233 = vmatprep.subr.mxu0 0.0
    %234 = vmatpush1.msra.mxu0 0.0
    %235 = vmatprep.subr.mxu0 0.0
    %236 = vmatpush1.msra.mxu0 0.0
    %237 = vmatprep.subr.mxu0 0.0
    %238 = vmatpush1.msra.mxu0 0.0
    %239 = vmatprep.subr.mxu0 0.0
    %240 = vmatpush1.msra.mxu0 0.0
    %241 = vmatprep.subr.mxu0 0.0
    %242 = vmatpush1.msra.mxu0 0.0
    %243 = vmatprep.subr.mxu0 0.0
    %244 = vmatpush1.msra.mxu0 0.0
    %245 = vmatprep.subr.mxu0 0.0
    %246 = vmatpush1.msra.mxu0 0.0
    %247 = vmatprep.subr.mxu0 0.0
    %248 = vmatpush1.msra.mxu0 0.0
    %249 = vmatprep.subr.mxu0 0.0
    %250 = vmatpush1.msra.mxu0 0.0
    %251 = vmatprep.subr.mxu0 0.0
    %252 = vmatpush1.msra.mxu0 0.0
    %253 = vmatprep.subr.mxu0 0.0
    %254 = vmatpush1.msra.mxu0 0.0
    %255 = vmatprep.subr.mxu0 0.0
    %256 = vmatpush1.msra.mxu0 0.0
    %257 = vmatprep.subr.mxu0 0.0
    %258 = vmatpush1.msra.mxu0 0.0
    %259 = vmatprep.subr.mxu0 0.0
    %260 = vmatpush1.msra.mxu0 0.0
    %261 = vmatprep.subr.mxu0 0.0
    %262 = vmatpush1.msra.mxu0 0.0
    %263 = vmatprep.subr.mxu0 0.0
    %264 = vmatpush1.msra.mxu0 0.0
    %265 = vmatprep.subr.mxu0 0.0
    %266 = vmatpush1.msra.mxu0 0.0
    %267 = vmatprep.subr.mxu0 0.0
    %268 = vmatpush1.msra.mxu0 0.0
    %269 = vmatprep.mubr.f32.mxu0 0.0
    %270 = vmatmul.mubr.f32.gmra.mrb[0].mxu0 %v194
    %v271 = vpop.f32.mrb[0].mxu0
    %v272 = vadd.f32 0.0, %v271
    %v273 = vpop.f32.mrb[0].mxu0
    %274 = vmatprep.mubr.f32.mxu0 0.0
    %275 = vmatmul.mubr.f32.gmra.mrb[0].mxu0 %v197
    %v276 = vpop.f32.mrb[0].mxu0
    %v277 = vadd.f32 0.0, %v276
    %v278 = vpop.f32.mrb[0].mxu0
    %279 = vmatprep.mubr.f32.mxu0 0.0
    %280 = vmatmul.mubr.f32.gmra.mrb[0].mxu0 %v200
    %v281 = vpop.f32.mrb[0].mxu0
    %v282 = vadd.f32 0.0, %v281
    %v283 = vpop.f32.mrb[0].mxu0
    %284 = vmatprep.mubr.f32.mxu0 0.0
    %285 = vmatmul.mubr.f32.gmra.mrb[0].mxu0 %v203
    %v286 = vpop.f32.mrb[0].mxu0
    %v287 = vadd.f32 0.0, %v286
    %v288 = vpop.f32.mrb[0].mxu0
    %289 = vdwg.mxu0
    %v290 = vadd.f32 %v171, %v272
    %v291 = vadd.f32 %v172, %v277
    %v292 = vadd.f32 %v173, %v282
    %v293 = vadd.f32 %v174, %v287
    %vm294 = vcmp.lt.s32.totalorder %v26, 4
    %vm295 = vcmp.lt.s32.totalorder %v27, 4
    %vm296 = vcmp.lt.s32.totalorder %v28, 4
    %vm297 = vcmp.lt.s32.totalorder %v29, 4
    %v298 = vsel %vm294, 1, 0
    %v299 = vsel %vm295, 1, 0
    %v300 = vsel %vm296, 1, 0
    %v301 = vsel %vm297, 1, 0
    %vm302 = vcmp.eq.s32.totalorder %v298, 1
    %vm303 = vcmp.eq.s32.totalorder %v299, 1
    %vm304 = vcmp.eq.s32.totalorder %v300, 1
    %vm305 = vcmp.eq.s32.totalorder %v301, 1
    %v306 = vsel %vm302, 0.0, %v59
    %v307 = vsel %vm303, 0.0, %v54
    %v308 = vsel %vm304, 0.0, %v55
    %v309 = vsel %vm305, 0.0, %v47
    %s310 = scalar_lea.vmem %s1, 16
    %v311 = vld [vmem:[%s310] sm:$0xff]
    %v313 = vsel %vm73, %v306, 0
    %v316 = vsel %vm73, %v307, 0
    %v319 = vsel %vm73, %v308, 0
    %v322 = vsel %vm73, %v309, 0
    %324 = vmatprep.subr.mxu0 0.0
    %325 = vmatpush1.msra.mxu0 %v311
    %326 = vmatprep.subr.mxu0 0.0
    %327 = vmatpush1.msra.mxu0 0.0
    %328 = vmatprep.subr.mxu0 0.0
    %329 = vmatpush1.msra.mxu0 0.0
    %330 = vmatprep.subr.mxu0 0.0
    %331 = vmatpush1.msra.mxu0 0.0
    %332 = vmatprep.subr.mxu0 0.0
    %333 = vmatpush1.msra.mxu0 0.0
    %334 = vmatprep.subr.mxu0 0.0
    %335 = vmatpush1.msra.mxu0 0.0
    %336 = vmatprep.subr.mxu0 0.0
    %337 = vmatpush1.msra.mxu0 0.0
    %338 = vmatprep.subr.mxu0 0.0
    %339 = vmatpush1.msra.mxu0 0.0
    %340 = vmatprep.subr.mxu0 0.0
    %341 = vmatpush1.msra.mxu0 0.0
    %342 = vmatprep.subr.mxu0 0.0
    %343 = vmatpush1.msra.mxu0 0.0
    %344 = vmatprep.subr.mxu0 0.0
    %345 = vmatpush1.msra.mxu0 0.0
    %346 = vmatprep.subr.mxu0 0.0
    %347 = vmatpush1.msra.mxu0 0.0
    %348 = vmatprep.subr.mxu0 0.0
    %349 = vmatpush1.msra.mxu0 0.0
    %350 = vmatprep.subr.mxu0 0.0
    %351 = vmatpush1.msra.mxu0 0.0
    %352 = vmatprep.subr.mxu0 0.0
    %353 = vmatpush1.msra.mxu0 0.0
    %354 = vmatprep.subr.mxu0 0.0
    %355 = vmatpush1.msra.mxu0 0.0
    %356 = vmatprep.subr.mxu0 0.0
    %357 = vmatpush1.msra.mxu0 0.0
    %358 = vmatprep.subr.mxu0 0.0
    %359 = vmatpush1.msra.mxu0 0.0
    %360 = vmatprep.subr.mxu0 0.0
    %361 = vmatpush1.msra.mxu0 0.0
    %362 = vmatprep.subr.mxu0 0.0
    %363 = vmatpush1.msra.mxu0 0.0
    %364 = vmatprep.subr.mxu0 0.0
    %365 = vmatpush1.msra.mxu0 0.0
    %366 = vmatprep.subr.mxu0 0.0
    %367 = vmatpush1.msra.mxu0 0.0
    %368 = vmatprep.subr.mxu0 0.0
    %369 = vmatpush1.msra.mxu0 0.0
    %370 = vmatprep.subr.mxu0 0.0
    %371 = vmatpush1.msra.mxu0 0.0
    %372 = vmatprep.subr.mxu0 0.0
    %373 = vmatpush1.msra.mxu0 0.0
    %374 = vmatprep.subr.mxu0 0.0
    %375 = vmatpush1.msra.mxu0 0.0
    %376 = vmatprep.subr.mxu0 0.0
    %377 = vmatpush1.msra.mxu0 0.0
    %378 = vmatprep.subr.mxu0 0.0
    %379 = vmatpush1.msra.mxu0 0.0
    %380 = vmatprep.subr.mxu0 0.0
    %381 = vmatpush1.msra.mxu0 0.0
    %382 = vmatprep.subr.mxu0 0.0
    %383 = vmatpush1.msra.mxu0 0.0
    %384 = vmatprep.subr.mxu0 0.0
    %385 = vmatpush1.msra.mxu0 0.0
    %386 = vmatprep.subr.mxu0 0.0
    %387 = vmatpush1.msra.mxu0 0.0
    %388 = vmatprep.mubr.f32.mxu0 0.0
    %389 = vmatmul.mubr.f32.gmra.mrb[0].mxu0 %v313
    %v390 = vpop.f32.mrb[0].mxu0
    %v391 = vadd.f32 0.0, %v390
    %v392 = vpop.f32.mrb[0].mxu0
    %393 = vmatprep.mubr.f32.mxu0 0.0
    %394 = vmatmul.mubr.f32.gmra.mrb[0].mxu0 %v316
    %v395 = vpop.f32.mrb[0].mxu0
    %v396 = vadd.f32 0.0, %v395
    %v397 = vpop.f32.mrb[0].mxu0
    %398 = vmatprep.mubr.f32.mxu0 0.0
    %399 = vmatmul.mubr.f32.gmra.mrb[0].mxu0 %v319
    %v400 = vpop.f32.mrb[0].mxu0
    %v401 = vadd.f32 0.0, %v400
    %v402 = vpop.f32.mrb[0].mxu0
    %403 = vmatprep.mubr.f32.mxu0 0.0
    %404 = vmatmul.mubr.f32.gmra.mrb[0].mxu0 %v322
    %v405 = vpop.f32.mrb[0].mxu0
    %v406 = vadd.f32 0.0, %v405
    %v407 = vpop.f32.mrb[0].mxu0
    %408 = vdwg.mxu0
    %v409 = vadd.f32 %v290, %v391
    %v410 = vadd.f32 %v291, %v396
    %v411 = vadd.f32 %v292, %v401
    %v412 = vadd.f32 %v293, %v406
    %s413 = scalar_lea.vmem %s1, 24
    %v414 = vld [vmem:[%s413] sm:$0xff]
    %v415 = vsel %vm73, %v21, 0
    %v417 = vsel %vm73, %v22, 0
    %v419 = vsel %vm73, %v23, 0
    %v421 = vsel %vm73, %v24, 0
    %423 = vmatprep.subr.mxu0 0.0
    %424 = vmatpush1.msra.mxu0 %v414
    %425 = vmatprep.subr.mxu0 0.0
    %426 = vmatpush1.msra.mxu0 0.0
    %427 = vmatprep.subr.mxu0 0.0
    %428 = vmatpush1.msra.mxu0 0.0
    %429 = vmatprep.subr.mxu0 0.0
    %430 = vmatpush1.msra.mxu0 0.0
    %431 = vmatprep.subr.mxu0 0.0
    %432 = vmatpush1.msra.mxu0 0.0
    %433 = vmatprep.subr.mxu0 0.0
    %434 = vmatpush1.msra.mxu0 0.0
    %435 = vmatprep.subr.mxu0 0.0
    %436 = vmatpush1.msra.mxu0 0.0
    %437 = vmatprep.subr.mxu0 0.0
    %438 = vmatpush1.msra.mxu0 0.0
    %439 = vmatprep.subr.mxu0 0.0
    %440 = vmatpush1.msra.mxu0 0.0
    %441 = vmatprep.subr.mxu0 0.0
    %442 = vmatpush1.msra.mxu0 0.0
    %443 = vmatprep.subr.mxu0 0.0
    %444 = vmatpush1.msra.mxu0 0.0
    %445 = vmatprep.subr.mxu0 0.0
    %446 = vmatpush1.msra.mxu0 0.0
    %447 = vmatprep.subr.mxu0 0.0
    %448 = vmatpush1.msra.mxu0 0.0
    %449 = vmatprep.subr.mxu0 0.0
    %450 = vmatpush1.msra.mxu0 0.0
    %451 = vmatprep.subr.mxu0 0.0
    %452 = vmatpush1.msra.mxu0 0.0
    %453 = vmatprep.subr.mxu0 0.0
    %454 = vmatpush1.msra.mxu0 0.0
    %455 = vmatprep.subr.mxu0 0.0
    %456 = vmatpush1.msra.mxu0 0.0
    %457 = vmatprep.subr.mxu0 0.0
    %458 = vmatpush1.msra.mxu0 0.0
    %459 = vmatprep.subr.mxu0 0.0
    %460 = vmatpush1.msra.mxu0 0.0
    %461 = vmatprep.subr.mxu0 0.0
    %462 = vmatpush1.msra.mxu0 0.0
    %463 = vmatprep.subr.mxu0 0.0
    %464 = vmatpush1.msra.mxu0 0.0
    %465 = vmatprep.subr.mxu0 0.0
    %466 = vmatpush1.msra.mxu0 0.0
    %467 = vmatprep.subr.mxu0 0.0
    %468 = vmatpush1.msra.mxu0 0.0
    %469 = vmatprep.subr.mxu0 0.0
    %470 = vmatpush1.msra.mxu0 0.0
    %471 = vmatprep.subr.mxu0 0.0
    %472 = vmatpush1.msra.mxu0 0.0
    %473 = vmatprep.subr.mxu0 0.0
    %474 = vmatpush1.msra.mxu0 0.0
    %475 = vmatprep.subr.mxu0 0.0
    %476 = vmatpush1.msra.mxu0 0.0
    %477 = vmatprep.subr.mxu0 0.0
    %478 = vmatpush1.msra.mxu0 0.0
    %479 = vmatprep.subr.mxu0 0.0
    %480 = vmatpush1.msra.mxu0 0.0
    %481 = vmatprep.subr.mxu0 0.0
    %482 = vmatpush1.msra.mxu0 0.0
    %483 = vmatprep.subr.mxu0 0.0
    %484 = vmatpush1.msra.mxu0 0.0
    %485 = vmatprep.subr.mxu0 0.0
    %486 = vmatpush1.msra.mxu0 0.0
    %487 = vmatprep.mubr.f32.mxu0 0.0
    %488 = vmatmul.mubr.f32.gmra.mrb[0].mxu0 %v415
    %v489 = vpop.f32.mrb[0].mxu0
    %v490 = vadd.f32 0.0, %v489
    %v491 = vpop.f32.mrb[0].mxu0
    %492 = vmatprep.mubr.f32.mxu0 0.0
    %493 = vmatmul.mubr.f32.gmra.mrb[0].mxu0 %v417
    %v494 = vpop.f32.mrb[0].mxu0
    %v495 = vadd.f32 0.0, %v494
    %v496 = vpop.f32.mrb[0].mxu0
    %497 = vmatprep.mubr.f32.mxu0 0.0
    %498 = vmatmul.mubr.f32.gmra.mrb[0].mxu0 %v419
    %v499 = vpop.f32.mrb[0].mxu0
    %v500 = vadd.f32 0.0, %v499
    %v501 = vpop.f32.mrb[0].mxu0
    %502 = vmatprep.mubr.f32.mxu0 0.0
    %503 = vmatmul.mubr.f32.gmra.mrb[0].mxu0 %v421
    %v504 = vpop.f32.mrb[0].mxu0
    %v505 = vadd.f32 0.0, %v504
    %v506 = vpop.f32.mrb[0].mxu0
    %507 = vdwg.mxu0
    %v508 = vadd.f32 %v409, %v490
    %v509 = vadd.f32 %v410, %v495
    %v510 = vadd.f32 %v411, %v500
    %v511 = vadd.f32 %v412, %v505
    %v512 = vmax.f32 %v508, 0.0
    %v513 = vmax.f32 %v509, 0.0
    %v514 = vmax.f32 %v510, 0.0
    %v515 = vmax.f32 %v511, 0.0
    %v516 = vld [vmem:[%s4] sm:$0x1]
    %v518 = vlaneseq
    %v519 = vshrl.u32 %v518, 7
    %v520 = vsub.s32 0, %v519
    %v521 = vrot.slane %v516, %v520
    %v523 = vadd.f32 %v521, 0.0
    %v526 = vrot.slane %v514, 4
    %v527 = vrot.slane %v515, 4
    %v528 = vsel %vm44, %v526, %v527
    %v533 = vrot.slane %v512, 4
    %v534 = vrot.slane %v513, 4
    %v535 = vsel %vm44, %v533, %v534
    %v536 = vsel %vm44, %v534, %v526
    %v540 = vsel %vm44, %v527, %v533
    %v541 = vsel %vm64, 0.0, %v528
    %v542 = vsel %vm65, 0.0, %v540
    %v543 = vsel %vm66, 0.0, %v535
    %v544 = vsel %vm67, 0.0, %v536
    %v545 = vld [vmem:[%s3] sm:$0xff]
    %v547 = vsel %vm73, %v541, 0
    %v550 = vsel %vm73, %v542, 0
    %v553 = vsel %vm73, %v543, 0
    %v556 = vsel %vm73, %v544, 0
    %558 = vmatprep.subr.mxu0 0.0
    %559 = vmatpush1.msra.mxu0 %v545
    %560 = vmatprep.subr.mxu0 0.0
    %561 = vmatpush1.msra.mxu0 0.0
    %562 = vmatprep.subr.mxu0 0.0
    %563 = vmatpush1.msra.mxu0 0.0
    %564 = vmatprep.subr.mxu0 0.0
    %565 = vmatpush1.msra.mxu0 0.0
    %566 = vmatprep.subr.mxu0 0.0
    %567 = vmatpush1.msra.mxu0 0.0
    %568 = vmatprep.subr.mxu0 0.0
    %569 = vmatpush1.msra.mxu0 0.0
    %570 = vmatprep.subr.mxu0 0.0
    %571 = vmatpush1.msra.mxu0 0.0
    %572 = vmatprep.subr.mxu0 0.0
    %573 = vmatpush1.msra.mxu0 0.0
    %574 = vmatprep.subr.mxu0 0.0
    %575 = vmatpush1.msra.mxu0 0.0
    %576 = vmatprep.subr.mxu0 0.0
    %577 = vmatpush1.msra.mxu0 0.0
    %578 = vmatprep.subr.mxu0 0.0
    %579 = vmatpush1.msra.mxu0 0.0
    %580 = vmatprep.subr.mxu0 0.0
    %581 = vmatpush1.msra.mxu0 0.0
    %582 = vmatprep.subr.mxu0 0.0
    %583 = vmatpush1.msra.mxu0 0.0
    %584 = vmatprep.subr.mxu0 0.0
    %585 = vmatpush1.msra.mxu0 0.0
    %586 = vmatprep.subr.mxu0 0.0
    %587 = vmatpush1.msra.mxu0 0.0
    %588 = vmatprep.subr.mxu0 0.0
    %589 = vmatpush1.msra.mxu0 0.0
    %590 = vmatprep.subr.mxu0 0.0
    %591 = vmatpush1.msra.mxu0 0.0
    %592 = vmatprep.subr.mxu0 0.0
    %593 = vmatpush1.msra.mxu0 0.0
    %594 = vmatprep.subr.mxu0 0.0
    %595 = vmatpush1.msra.mxu0 0.0
    %596 = vmatprep.subr.mxu0 0.0
    %597 = vmatpush1.msra.mxu0 0.0
    %598 = vmatprep.subr.mxu0 0.0
    %599 = vmatpush1.msra.mxu0 0.0
    %600 = vmatprep.subr.mxu0 0.0
    %601 = vmatpush1.msra.mxu0 0.0
    %602 = vmatprep.subr.mxu0 0.0
    %603 = vmatpush1.msra.mxu0 0.0
    %604 = vmatprep.subr.mxu0 0.0
    %605 = vmatpush1.msra.mxu0 0.0
    %606 = vmatprep.subr.mxu0 0.0
    %607 = vmatpush1.msra.mxu0 0.0
    %608 = vmatprep.subr.mxu0 0.0
    %609 = vmatpush1.msra.mxu0 0.0
    %610 = vmatprep.subr.mxu0 0.0
    %611 = vmatpush1.msra.mxu0 0.0
    %612 = vmatprep.subr.mxu0 0.0
    %613 = vmatpush1.msra.mxu0 0.0
    %614 = vmatprep.subr.mxu0 0.0
    %615 = vmatpush1.msra.mxu0 0.0
    %616 = vmatprep.subr.mxu0 0.0
    %617 = vmatpush1.msra.mxu0 0.0
    %618 = vmatprep.subr.mxu0 0.0
    %619 = vmatpush1.msra.mxu0 0.0
    %620 = vmatprep.subr.mxu0 0.0
    %621 = vmatpush1.msra.mxu0 0.0
    %622 = vmatprep.mubr.f32.mxu0 0.0
    %623 = vmatmul.mubr.f32.gmra.mrb[0].mxu0 %v547
    %v624 = vpop.f32.mrb[0].mxu0
    %v625 = vadd.f32 0.0, %v624
    %v626 = vpop.f32.mrb[0].mxu0
    %627 = vmatprep.mubr.f32.mxu0 0.0
    %628 = vmatmul.mubr.f32.gmra.mrb[0].mxu0 %v550
    %v629 = vpop.f32.mrb[0].mxu0
    %v630 = vadd.f32 0.0, %v629
    %v631 = vpop.f32.mrb[0].mxu0
    %632 = vmatprep.mubr.f32.mxu0 0.0
    %633 = vmatmul.mubr.f32.gmra.mrb[0].mxu0 %v553
    %v634 = vpop.f32.mrb[0].mxu0
    %v635 = vadd.f32 0.0, %v634
    %v636 = vpop.f32.mrb[0].mxu0
    %637 = vmatprep.mubr.f32.mxu0 0.0
    %638 = vmatmul.mubr.f32.gmra.mrb[0].mxu0 %v556
    %v639 = vpop.f32.mrb[0].mxu0
    %v640 = vadd.f32 0.0, %v639
    %v641 = vpop.f32.mrb[0].mxu0
    %642 = vdwg.mxu0
    %v643 = vadd.f32 %v523, %v625
    %v644 = vadd.f32 %v523, %v630
    %v645 = vadd.f32 %v523, %v635
    %v646 = vadd.f32 %v523, %v640
    %v647 = vsel %vm183, 0.0, %v515
    %v648 = vsel %vm184, 0.0, %v512
    %v649 = vsel %vm185, 0.0, %v513
    %v650 = vsel %vm186, 0.0, %v514
    %s651 = scalar_lea.vmem %s3, 8
    %v652 = vld [vmem:[%s651] sm:$0xff]
    %v654 = vsel %vm73, %v647, 0
    %v657 = vsel %vm73, %v648, 0
    %v660 = vsel %vm73, %v649, 0
    %v663 = vsel %vm73, %v650, 0
    %665 = vmatprep.subr.mxu0 0.0
    %666 = vmatpush1.msra.mxu0 %v652
    %667 = vmatprep.subr.mxu0 0.0
    %668 = vmatpush1.msra.mxu0 0.0
    %669 = vmatprep.subr.mxu0 0.0
    %670 = vmatpush1.msra.mxu0 0.0
    %671 = vmatprep.subr.mxu0 0.0
    %672 = vmatpush1.msra.mxu0 0.0
    %673 = vmatprep.subr.mxu0 0.0
    %674 = vmatpush1.msra.mxu0 0.0
    %675 = vmatprep.subr.mxu0 0.0
    %676 = vmatpush1.msra.mxu0 0.0
    %677 = vmatprep.subr.mxu0 0.0
    %678 = vmatpush1.msra.mxu0 0.0
    %679 = vmatprep.subr.mxu0 0.0
    %680 = vmatpush1.msra.mxu0 0.0
    %681 = vmatprep.subr.mxu0 0.0
    %682 = vmatpush1.msra.mxu0 0.0
    %683 = vmatprep.subr.mxu0 0.0
    %684 = vmatpush1.msra.mxu0 0.0
    %685 = vmatprep.subr.mxu0 0.0
    %686 = vmatpush1.msra.mxu0 0.0
    %687 = vmatprep.subr.mxu0 0.0
    %688 = vmatpush1.msra.mxu0 0.0
    %689 = vmatprep.subr.mxu0 0.0
    %690 = vmatpush1.msra.mxu0 0.0
    %691 = vmatprep.subr.mxu0 0.0
    %692 = vmatpush1.msra.mxu0 0.0
    %693 = vmatprep.subr.mxu0 0.0
    %694 = vmatpush1.msra.mxu0 0.0
    %695 = vmatprep.subr.mxu0 0.0
    %696 = vmatpush1.msra.mxu0 0.0
    %697 = vmatprep.subr.mxu0 0.0
    %698 = vmatpush1.msra.mxu0 0.0
    %699 = vmatprep.subr.mxu0 0.0
    %700 = vmatpush1.msra.mxu0 0.0
    %701 = vmatprep.subr.mxu0 0.0
    %702 = vmatpush1.msra.mxu0 0.0
    %703 = vmatprep.subr.mxu0 0.0
    %704 = vmatpush1.msra.mxu0 0.0
    %705 = vmatprep.subr.mxu0 0.0
    %706 = vmatpush1.msra.mxu0 0.0
    %707 = vmatprep.subr.mxu0 0.0
    %708 = vmatpush1.msra.mxu0 0.0
    %709 = vmatprep.subr.mxu0 0.0
    %710 = vmatpush1.msra.mxu0 0.0
    %711 = vmatprep.subr.mxu0 0.0
    %712 = vmatpush1.msra.mxu0 0.0
    %713 = vmatprep.subr.mxu0 0.0
    %714 = vmatpush1.msra.mxu0 0.0
    %715 = vmatprep.subr.mxu0 0.0
    %716 = vmatpush1.msra.mxu0 0.0
    %717 = vmatprep.subr.mxu0 0.0
    %718 = vmatpush1.msra.mxu0 0.0
    %719 = vmatprep.subr.mxu0 0.0
    %720 = vmatpush1.msra.mxu0 0.0
    %721 = vmatprep.subr.mxu0 0.0
    %722 = vmatpush1.msra.mxu0 0.0
    %723 = vmatprep.subr.mxu0 0.0
    %724 = vmatpush1.msra.mxu0 0.0
    %725 = vmatprep.subr.mxu0 0.0
    %726 = vmatpush1.msra.mxu0 0.0
    %727 = vmatprep.subr.mxu0 0.0
    %728 = vmatpush1.msra.mxu0 0.0
    %729 = vmatprep.mubr.f32.mxu0 0.0
    %730 = vmatmul.mubr.f32.gmra.mrb[0].mxu0 %v654
    %v731 = vpop.f32.mrb[0].mxu0
    %v732 = vadd.f32 0.0, %v731
    %v733 = vpop.f32.mrb[0].mxu0
    %734 = vmatprep.mubr.f32.mxu0 0.0
    %735 = vmatmul.mubr.f32.gmra.mrb[0].mxu0 %v657
    %v736 = vpop.f32.mrb[0].mxu0
    %v737 = vadd.f32 0.0, %v736
    %v738 = vpop.f32.mrb[0].mxu0
    %739 = vmatprep.mubr.f32.mxu0 0.0
    %740 = vmatmul.mubr.f32.gmra.mrb[0].mxu0 %v660
    %v741 = vpop.f32.mrb[0].mxu0
    %v742 = vadd.f32 0.0, %v741
    %v743 = vpop.f32.mrb[0].mxu0
    %744 = vmatprep.mubr.f32.mxu0 0.0
    %745 = vmatmul.mubr.f32.gmra.mrb[0].mxu0 %v663
    %v746 = vpop.f32.mrb[0].mxu0
    %v747 = vadd.f32 0.0, %v746
    %v748 = vpop.f32.mrb[0].mxu0
    %749 = vdwg.mxu0
    %v750 = vadd.f32 %v643, %v732
    %v751 = vadd.f32 %v644, %v737
    %v752 = vadd.f32 %v645, %v742
    %v753 = vadd.f32 %v646, %v747
    %v754 = vsel %vm302, 0.0, %v540
    %v755 = vsel %vm303, 0.0, %v535
    %v756 = vsel %vm304, 0.0, %v536
    %v757 = vsel %vm305, 0.0, %v528
    %s758 = scalar_lea.vmem %s3, 16
    %v759 = vld [vmem:[%s758] sm:$0xff]
    %v761 = vsel %vm73, %v754, 0
    %v764 = vsel %vm73, %v755, 0
    %v767 = vsel %vm73, %v756, 0
    %v770 = vsel %vm73, %v757, 0
    %772 = vmatprep.subr.mxu0 0.0
    %773 = vmatpush1.msra.mxu0 %v759
    %774 = vmatprep.subr.mxu0 0.0
    %775 = vmatpush1.msra.mxu0 0.0
    %776 = vmatprep.subr.mxu0 0.0
    %777 = vmatpush1.msra.mxu0 0.0
    %778 = vmatprep.subr.mxu0 0.0
    %779 = vmatpush1.msra.mxu0 0.0
    %780 = vmatprep.subr.mxu0 0.0
    %781 = vmatpush1.msra.mxu0 0.0
    %782 = vmatprep.subr.mxu0 0.0
    %783 = vmatpush1.msra.mxu0 0.0
    %784 = vmatprep.subr.mxu0 0.0
    %785 = vmatpush1.msra.mxu0 0.0
    %786 = vmatprep.subr.mxu0 0.0
    %787 = vmatpush1.msra.mxu0 0.0
    %788 = vmatprep.subr.mxu0 0.0
    %789 = vmatpush1.msra.mxu0 0.0
    %790 = vmatprep.subr.mxu0 0.0
    %791 = vmatpush1.msra.mxu0 0.0
    %792 = vmatprep.subr.mxu0 0.0
    %793 = vmatpush1.msra.mxu0 0.0
    %794 = vmatprep.subr.mxu0 0.0
    %795 = vmatpush1.msra.mxu0 0.0
    %796 = vmatprep.subr.mxu0 0.0
    %797 = vmatpush1.msra.mxu0 0.0
    %798 = vmatprep.subr.mxu0 0.0
    %799 = vmatpush1.msra.mxu0 0.0
    %800 = vmatprep.subr.mxu0 0.0
    %801 = vmatpush1.msra.mxu0 0.0
    %802 = vmatprep.subr.mxu0 0.0
    %803 = vmatpush1.msra.mxu0 0.0
    %804 = vmatprep.subr.mxu0 0.0
    %805 = vmatpush1.msra.mxu0 0.0
    %806 = vmatprep.subr.mxu0 0.0
    %807 = vmatpush1.msra.mxu0 0.0
    %808 = vmatprep.subr.mxu0 0.0
    %809 = vmatpush1.msra.mxu0 0.0
    %810 = vmatprep.subr.mxu0 0.0
    %811 = vmatpush1.msra.mxu0 0.0
    %812 = vmatprep.subr.mxu0 0.0
    %813 = vmatpush1.msra.mxu0 0.0
    %814 = vmatprep.subr.mxu0 0.0
    %815 = vmatpush1.msra.mxu0 0.0
    %816 = vmatprep.subr.mxu0 0.0
    %817 = vmatpush1.msra.mxu0 0.0
    %818 = vmatprep.subr.mxu0 0.0
    %819 = vmatpush1.msra.mxu0 0.0
    %820 = vmatprep.subr.mxu0 0.0
    %821 = vmatpush1.msra.mxu0 0.0
    %822 = vmatprep.subr.mxu0 0.0
    %823 = vmatpush1.msra.mxu0 0.0
    %824 = vmatprep.subr.mxu0 0.0
    %825 = vmatpush1.msra.mxu0 0.0
    %826 = vmatprep.subr.mxu0 0.0
    %827 = vmatpush1.msra.mxu0 0.0
    %828 = vmatprep.subr.mxu0 0.0
    %829 = vmatpush1.msra.mxu0 0.0
    %830 = vmatprep.subr.mxu0 0.0
    %831 = vmatpush1.msra.mxu0 0.0
    %832 = vmatprep.subr.mxu0 0.0
    %833 = vmatpush1.msra.mxu0 0.0
    %834 = vmatprep.subr.mxu0 0.0
    %835 = vmatpush1.msra.mxu0 0.0
    %836 = vmatprep.mubr.f32.mxu0 0.0
    %837 = vmatmul.mubr.f32.gmra.mrb[0].mxu0 %v761
    %v838 = vpop.f32.mrb[0].mxu0
    %v839 = vadd.f32 0.0, %v838
    %v840 = vpop.f32.mrb[0].mxu0
    %841 = vmatprep.mubr.f32.mxu0 0.0
    %842 = vmatmul.mubr.f32.gmra.mrb[0].mxu0 %v764
    %v843 = vpop.f32.mrb[0].mxu0
    %v844 = vadd.f32 0.0, %v843
    %v845 = vpop.f32.mrb[0].mxu0
    %846 = vmatprep.mubr.f32.mxu0 0.0
    %847 = vmatmul.mubr.f32.gmra.mrb[0].mxu0 %v767
    %v848 = vpop.f32.mrb[0].mxu0
    %v849 = vadd.f32 0.0, %v848
    %v850 = vpop.f32.mrb[0].mxu0
    %851 = vmatprep.mubr.f32.mxu0 0.0
    %852 = vmatmul.mubr.f32.gmra.mrb[0].mxu0 %v770
    %v853 = vpop.f32.mrb[0].mxu0
    %v854 = vadd.f32 0.0, %v853
    %v855 = vpop.f32.mrb[0].mxu0
    %856 = vdwg.mxu0
    %v857 = vadd.f32 %v750, %v839
    %v858 = vadd.f32 %v751, %v844
    %v859 = vadd.f32 %v752, %v849
    %v860 = vadd.f32 %v753, %v854
    %s861 = scalar_lea.vmem %s3, 24
    %v862 = vld [vmem:[%s861] sm:$0xff]
    %v863 = vsel %vm73, %v512, 0
    %v865 = vsel %vm73, %v513, 0
    %v867 = vsel %vm73, %v514, 0
    %v869 = vsel %vm73, %v515, 0
    %871 = vmatprep.subr.mxu0 0.0
    %872 = vmatpush1.msra.mxu0 %v862
    %873 = vmatprep.subr.mxu0 0.0
    %874 = vmatpush1.msra.mxu0 0.0
    %875 = vmatprep.subr.mxu0 0.0
    %876 = vmatpush1.msra.mxu0 0.0
    %877 = vmatprep.subr.mxu0 0.0
    %878 = vmatpush1.msra.mxu0 0.0
    %879 = vmatprep.subr.mxu0 0.0
    %880 = vmatpush1.msra.mxu0 0.0
    %881 = vmatprep.subr.mxu0 0.0
    %882 = vmatpush1.msra.mxu0 0.0
    %883 = vmatprep.subr.mxu0 0.0
    %884 = vmatpush1.msra.mxu0 0.0
    %885 = vmatprep.subr.mxu0 0.0
    %886 = vmatpush1.msra.mxu0 0.0
    %887 = vmatprep.subr.mxu0 0.0
    %888 = vmatpush1.msra.mxu0 0.0
    %889 = vmatprep.subr.mxu0 0.0
    %890 = vmatpush1.msra.mxu0 0.0
    %891 = vmatprep.subr.mxu0 0.0
    %892 = vmatpush1.msra.mxu0 0.0
    %893 = vmatprep.subr.mxu0 0.0
    %894 = vmatpush1.msra.mxu0 0.0
    %895 = vmatprep.subr.mxu0 0.0
    %896 = vmatpush1.msra.mxu0 0.0
    %897 = vmatprep.subr.mxu0 0.0
    %898 = vmatpush1.msra.mxu0 0.0
    %899 = vmatprep.subr.mxu0 0.0
    %900 = vmatpush1.msra.mxu0 0.0
    %901 = vmatprep.subr.mxu0 0.0
    %902 = vmatpush1.msra.mxu0 0.0
    %903 = vmatprep.subr.mxu0 0.0
    %904 = vmatpush1.msra.mxu0 0.0
    %905 = vmatprep.subr.mxu0 0.0
    %906 = vmatpush1.msra.mxu0 0.0
    %907 = vmatprep.subr.mxu0 0.0
    %908 = vmatpush1.msra.mxu0 0.0
    %909 = vmatprep.subr.mxu0 0.0
    %910 = vmatpush1.msra.mxu0 0.0
    %911 = vmatprep.subr.mxu0 0.0
    %912 = vmatpush1.msra.mxu0 0.0
    %913 = vmatprep.subr.mxu0 0.0
    %914 = vmatpush1.msra.mxu0 0.0
    %915 = vmatprep.subr.mxu0 0.0
    %916 = vmatpush1.msra.mxu0 0.0
    %917 = vmatprep.subr.mxu0 0.0
    %918 = vmatpush1.msra.mxu0 0.0
    %919 = vmatprep.subr.mxu0 0.0
    %920 = vmatpush1.msra.mxu0 0.0
    %921 = vmatprep.subr.mxu0 0.0
    %922 = vmatpush1.msra.mxu0 0.0
    %923 = vmatprep.subr.mxu0 0.0
    %924 = vmatpush1.msra.mxu0 0.0
    %925 = vmatprep.subr.mxu0 0.0
    %926 = vmatpush1.msra.mxu0 0.0
    %927 = vmatprep.subr.mxu0 0.0
    %928 = vmatpush1.msra.mxu0 0.0
    %929 = vmatprep.subr.mxu0 0.0
    %930 = vmatpush1.msra.mxu0 0.0
    %931 = vmatprep.subr.mxu0 0.0
    %932 = vmatpush1.msra.mxu0 0.0
    %933 = vmatprep.subr.mxu0 0.0
    %934 = vmatpush1.msra.mxu0 0.0
    %935 = vmatprep.mubr.f32.mxu0 0.0
    %936 = vmatmul.mubr.f32.gmra.mrb[0].mxu0 %v863
    %v937 = vpop.f32.mrb[0].mxu0
    %v938 = vadd.f32 0.0, %v937
    %v939 = vpop.f32.mrb[0].mxu0
    %940 = vmatprep.mubr.f32.mxu0 0.0
    %941 = vmatmul.mubr.f32.gmra.mrb[0].mxu0 %v865
    %v942 = vpop.f32.mrb[0].mxu0
    %v943 = vadd.f32 0.0, %v942
    %v944 = vpop.f32.mrb[0].mxu0
    %945 = vmatprep.mubr.f32.mxu0 0.0
    %946 = vmatmul.mubr.f32.gmra.mrb[0].mxu0 %v867
    %v947 = vpop.f32.mrb[0].mxu0
    %v948 = vadd.f32 0.0, %v947
    %v949 = vpop.f32.mrb[0].mxu0
    %950 = vmatprep.mubr.f32.mxu0 0.0
    %951 = vmatmul.mubr.f32.gmra.mrb[0].mxu0 %v869
    %v952 = vpop.f32.mrb[0].mxu0
    %v953 = vadd.f32 0.0, %v952
    %v954 = vpop.f32.mrb[0].mxu0
    %955 = vdwg.mxu0
    %v956 = vadd.f32 %v857, %v938
    %v957 = vadd.f32 %v858, %v943
    %v958 = vadd.f32 %v859, %v948
    %v959 = vadd.f32 %v860, %v953
    %v960 = vmax.f32 %v956, 0.0
    %v961 = vmax.f32 %v957, 0.0
    %v962 = vmax.f32 %v958, 0.0
    %v963 = vmax.f32 %v959, 0.0
    %v964 = vadd.f32 %v960, %v21
    %v965 = vadd.f32 %v961, %v22
    %v966 = vadd.f32 %v962, %v23
    %v967 = vadd.f32 %v963, %v24
    %v968 = vmax.f32 %v964, 0.0
    %v969 = vmax.f32 %v965, 0.0
    %v970 = vmax.f32 %v966, 0.0
    %v971 = vmax.f32 %v967, 0.0
    %972 = vst.msk [vmem:[#allocation2] sm:$0xff] %vm73, %v968
    %973 = vst.msk [vmem:[#allocation2 + $0x8] sm:$0xff] %vm73, %v969
    %974 = vst.msk [vmem:[#allocation2 + $0x10] sm:$0xff] %vm73, %v970
    %975 = vst.msk [vmem:[#allocation2 + $0x18] sm:$0xff] %vm73, %v971
    // Predicated region
    $region22: #{branch_4_fun.2} parent=1 // pred_check
      _
    $region23: #{branch_4_fun.2} parent=1 // pred_check_branch
      %977 = sbr.rel (0) target = $region25
    $region24: #{branch_4_fun.2} parent=1 // pred_region
      %s979 = ssub.s32 512, 512
      %980 = vsyncadd [#allocation3], %s979
      %s981 = sshll.u32 [#allocation2], 4
      %s982 = int_to_ptr.vmem [resolvable:$true] %s981
      %987 = dma.vmem_to_hbm [thread:$0]  %s982, 512, %s5, [#allocation3], 128, 128, 8
    $region25: #{branch_4_fun.2} parent=1 // pred_fallthru
      _
    // Predicated region
    $region26: #{branch_4_fun.2} parent=1 // pred_check
      _
    $region27: #{branch_4_fun.2} parent=1 // pred_check_branch
      %989 = sbr.rel (0) target = $region29
    $region28: #{branch_4_fun.2} parent=1 // pred_region
      %990 = dma.done [#allocation3], 512
    $region29: #{branch_4_fun.2} parent=1 // pred_fallthru
      _
    %991 = vsyncpa [#allocation3], 1

</llo_original>
